<compile_context>
chip_gen: v7x
topology: tpu7x:2x2x1
jax: 0.10.0
libtpu: 0.0.40
codegen_flags: <defaults>
</compile_context>

<pallas_src>
import functools

import jax
import jax.numpy as jnp
from jax.experimental import pallas as pl
from jax.experimental.pallas import tpu as pltpu

EPS = 2e-5
LANE = 128                      # lane width: pad channel dims to a multiple of this
PIX_TILE = 256                  # pixel rows per grid step (512-1024 ok on v5e/v6e,
                                # keep <=512 on v7x's 64 MiB VMEM; 256 also exercises
                                # the multi-tile path at demo sizes)
VMEM_LIMIT_BYTES = 32 * 1024 * 1024


def _round_up(x, m):
    return (x + m - 1) // m * m


# ----------------------------------------------------------------------------
# Pallas kernels (each grid step = one pixel tile; single K=9*C MXU matmul)
# ----------------------------------------------------------------------------
def _conv1_bn_prelu_kernel(x_ref, w_ref, s_ref, b_ref, a_ref, o_ref):
    # (TP, 9*Cp) @ (9*Cp, Dp) in bf16 -> f32 acc -> BN2 affine -> PReLU
    acc = jnp.dot(x_ref[...], w_ref[...], preferred_element_type=jnp.float32)
    y = acc * s_ref[...] + b_ref[...]
    o_ref[...] = jnp.where(y > 0.0, y, a_ref[...] * y).astype(o_ref.dtype)


def _conv2_bn_scconv_add_kernel(x_ref, sc_ref, w_ref, s_ref, b_ref,
                                wsc_ref, ssc_ref, bsc_ref, o_ref):
    # stride-2 block: BN3(conv2) + BN_sc(1x1-conv shortcut).
    # The small shortcut matmul is issued first so it overlaps the big one
    # instead of sitting in the serial tail of the tile.
    sc = jnp.dot(sc_ref[...], wsc_ref[...], preferred_element_type=jnp.float32)
    acc = jnp.dot(x_ref[...], w_ref[...], preferred_element_type=jnp.float32)
    o_ref[...] = (acc * s_ref[...] + b_ref[...]
                  + sc * ssc_ref[...] + bsc_ref[...]).astype(o_ref.dtype)


def _conv2_bn_res_add_kernel(x_ref, res_ref, w_ref, s_ref, b_ref, o_ref):
    # stride-1 block: BN3(conv2) + identity residual (pure VPU add, no eye matmul).
    acc = jnp.dot(x_ref[...], w_ref[...], preferred_element_type=jnp.float32)
    o_ref[...] = (acc * s_ref[...] + b_ref[...] + res_ref[...]).astype(o_ref.dtype)


# ----------------------------------------------------------------------------
# Generic pixel-tiled pallas_call wrapper
# ----------------------------------------------------------------------------
def _tiled_call(kernel, row_inputs, full_inputs, d_out, out_dtype, *, flops,
                pix_tile=PIX_TILE):
    """row_inputs are blocked over pixel rows; full_inputs are broadcast whole."""
    P = row_inputs[0].shape[0]
    tp = min(pix_tile, _round_up(P, 16))
    Pp = _round_up(P, tp)
    row_inputs = [jnp.pad(r, ((0, Pp - P), (0, 0))) for r in row_inputs]

    bytes_accessed = int(
        sum(int(a.size) * a.dtype.itemsize for a in row_inputs + full_inputs)
        + Pp * d_out * jnp.dtype(out_dtype).itemsize)

    in_specs = (
        [pl.BlockSpec((tp, r.shape[1]), lambda i: (i, 0)) for r in row_inputs]
        + [pl.BlockSpec(tuple(f.shape), lambda i, _n=f.ndim: (0,) * _n)
           for f in full_inputs])

    out = pl.pallas_call(
        kernel,
        out_shape=jax.ShapeDtypeStruct((Pp, d_out), out_dtype),
        grid=(Pp // tp,),
        in_specs=in_specs,
        out_specs=pl.BlockSpec((tp, d_out), lambda i: (i, 0)),
        compiler_params=pltpu.CompilerParams(
            dimension_semantics=("parallel",),       # v7x: shard pixel tiles over 2 TCs
            vmem_limit_bytes=VMEM_LIMIT_BYTES),
        cost_estimate=pl.CostEstimate(flops=int(flops), transcendentals=0,
                                      bytes_accessed=bytes_accessed),
    )(*row_inputs, *full_inputs)
    return out[:P]


# ----------------------------------------------------------------------------
# Glue: BN folding, im2col, weight layout, parameter init, forward
# ----------------------------------------------------------------------------
def _bn_affine(bn, width, eps=EPS):
    """Inference-mode BN as per-channel affine, zero-padded to `width` lanes."""
    s = bn["gamma"] / jnp.sqrt(bn["var"] + eps)
    b = bn["beta"] - bn["mean"] * s
    c = s.shape[0]
    s = jnp.pad(s, (0, width - c))
    b = jnp.pad(b, (0, width - c))
    return (s.reshape(1, width).astype(jnp.float32),
            b.reshape(1, width).astype(jnp.float32))


def _im2col_3x3(x_nhwc, stride, out_h, out_w):
    """Zero-pad by 1 and gather the 9 taps into one lane-dense (P, 9*C) slab."""
    N, H, W, C = x_nhwc.shape
    xp = jnp.pad(x_nhwc, ((0, 0), (1, 1), (1, 1), (0, 0)))
    cols = []
    for kh in range(3):
        for kw in range(3):
            cols.append(xp[:, kh:kh + stride * (out_h - 1) + 1:stride,
                              kw:kw + stride * (out_w - 1) + 1:stride, :])
    slab = jnp.concatenate(cols, axis=-1)               # (N, out_h, out_w, 9*C)
    return slab.reshape(N * out_h * out_w, 9 * C)


def _conv3x3_weight(w_oihw, c_pad, d_pad):
    """OIHW (D, Cin, 3, 3) -> lane-padded (9*Cp, Dp) matrix matching _im2col_3x3."""
    D, Cin = int(w_oihw.shape[0]), int(w_oihw.shape[1])
    w = jnp.transpose(w_oihw, (2, 3, 1, 0))             # (3, 3, Cin, D)
    w = jnp.pad(w, ((0, 0), (0, 0), (0, c_pad - Cin), (0, d_pad - D)))
    return w.reshape(9 * c_pad, d_pad).astype(jnp.bfloat16)


def init_params(key, in_ch, depth, stride):
    ks = jax.random.split(key, 10)

    def bn_params(k, c):
        k1, k2, k3, k4 = jax.random.split(k, 4)
        return dict(gamma=jax.random.uniform(k1, (c,), jnp.float32, 0.5, 1.5),
                    beta=0.1 * jax.random.normal(k2, (c,), jnp.float32),
                    mean=0.1 * jax.random.normal(k3, (c,), jnp.float32),
                    var=jax.random.uniform(k4, (c,), jnp.float32, 0.5, 1.5))

    p = dict(
        bn1=bn_params(ks[0], in_ch),
        w1=0.1 * jax.random.normal(ks[1], (depth, in_ch, 3, 3), jnp.float32),   # OIHW
        bn2=bn_params(ks[2], depth),
        alpha=0.25 + 0.05 * jax.random.normal(ks[3], (depth,), jnp.float32),
        w2=0.1 * jax.random.normal(ks[4], (depth, depth, 3, 3), jnp.float32),   # OIHW
        bn3=bn_params(ks[5], depth),
    )
    if stride == 2:
        p["w_sc"] = 0.1 * jax.random.normal(ks[6], (depth, in_ch, 1, 1), jnp.float32)
        p["bn_sc"] = bn_params(ks[7], depth)
    return p


def bottleneck_ir_forward(x_nchw, params, stride, pix_tile=PIX_TILE):
    N, Cin, H, W = x_nchw.shape
    D = int(params["w1"].shape[0])
    Cp = _round_up(Cin, LANE)
    Dp = _round_up(D, LANE)

    x = jnp.transpose(x_nchw, (0, 2, 3, 1)).astype(jnp.float32)          # NHWC
    x = jnp.pad(x, ((0, 0), (0, 0), (0, 0), (0, Cp - Cin)))              # lane-pad C

    # --- conv1 (3x3, s=1, p=1): BN1 folded into the (fused) im2col producer,
    #     BN2 + PReLU fused into the Pallas epilogue.  No standalone affine pass.
    s1, b1 = _bn_affine(params["bn1"], Cp)
    xbn = (x * s1.reshape(1, 1, 1, Cp) + b1.reshape(1, 1, 1, Cp)).astype(jnp.bfloat16)
    slab1 = _im2col_3x3(xbn, 1, H, W)                                    # (P1, 9*Cp) bf16
    w1 = _conv3x3_weight(params["w1"], Cp, Dp)                           # (9*Cp, Dp) bf16
    s2, b2 = _bn_affine(params["bn2"], Dp)
    alpha = jnp.pad(params["alpha"], (0, Dp - D)).reshape(1, Dp).astype(jnp.float32)
    P1 = N * H * W
    y = _tiled_call(_conv1_bn_prelu_kernel, [slab1], [w1, s2, b2, alpha],
                    Dp, jnp.bfloat16, flops=2 * P1 * (9 * Cp) * Dp,
                    pix_tile=pix_tile)
    y = y.reshape(N, H, W, Dp)                                           # bf16 activation

    # --- conv2 (3x3, stride, p=1) + BN3, fused with the shortcut branch.
    Ho = (H + 2 - 3) // stride + 1
    Wo = (W + 2 - 3) // stride + 1
    P2 = N * Ho * Wo
    slab2 = _im2col_3x3(y, stride, Ho, Wo)                               # (P2, 9*Dp) bf16
    w2 = _conv3x3_weight(params["w2"], Dp, Dp)
    s3, b3 = _bn_affine(params["bn3"], Dp)

    if stride == 2:
        # shortcut = BN_sc(Conv1x1 stride-2 (x))
        sc_in = x[:, ::2, ::2, :].reshape(P2, Cp).astype(jnp.bfloat16)
        w_sc = jnp.transpose(params["w_sc"], (2, 3, 1, 0)).reshape(Cin, D)
        w_sc = jnp.pad(w_sc, ((0, Cp - Cin), (0, Dp - D))).astype(jnp.bfloat16)
        ssc, bsc = _bn_affine(params["bn_sc"], Dp)
        out2d = _tiled_call(_conv2_bn_scconv_add_kernel, [slab2, sc_in],
                            [w2, s3, b3, w_sc, ssc, bsc], Dp, jnp.float32,
                            flops=2 * P2 * (9 * Dp) * Dp + 2 * P2 * Cp * Dp,
                            pix_tile=pix_tile)
    else:
        # identity shortcut (requires in_channel == depth, as in the PyTorch module):
        # plain residual add, no eye-weight matmul / DMA.
        res = x.reshape(P2, Cp)                                          # f32, Cp == Dp
        out2d = _tiled_call(_conv2_bn_res_add_kernel, [slab2, res],
                            [w2, s3, b3], Dp, jnp.float32,
                            flops=2 * P2 * (9 * Dp) * Dp, pix_tile=pix_tile)

    out = out2d[:, :D].reshape(N, Ho, Wo, D)
    return jnp.transpose(out, (0, 3, 1, 2))                              # back to NCHW


# ----------------------------------------------------------------------------
# Pure-JAX reference (matches PyTorch eval-mode forward, all-f32)
# ----------------------------------------------------------------------------
def ref_forward(x, p, stride, eps=EPS):
    def bn(y, bp):
        s = bp["gamma"] / jnp.sqrt(bp["var"] + eps)
        return y * s[None, :, None, None] + (bp["beta"] - bp["mean"] * s)[None, :, None, None]

    def conv(y, w, s, pad):
        return jax.lax.conv_general_dilated(
            y, w, (s, s), ((pad, pad), (pad, pad)),
            dimension_numbers=("NCHW", "OIHW", "NCHW"))

    r = bn(x, p["bn1"])
    r = conv(r, p["w1"], 1, 1)
    r = bn(r, p["bn2"])
    a = p["alpha"][None, :, None, None]
    r = jnp.where(r > 0, r, a * r)
    r = conv(r, p["w2"], stride, 1)
    r = bn(r, p["bn3"])
    if stride == 2:
        sc = bn(conv(x, p["w_sc"], 2, 0), p["bn_sc"])
    else:
        sc = x
    return r + sc


# ----------------------------------------------------------------------------
if __name__ == "__main__":
    key = jax.random.PRNGKey(0)
    kx, kp, kx2, kp2 = jax.random.split(key, 4)

    # Tolerance is slightly wider than the all-f32 version because the conv
    # matmuls now feed the MXU bf16 operands (f32 accumulation).
    RTOL = ATOL = 4e-2

    # stride = 2 branch (conv shortcut): in_channel=4, depth=8, 16x16 -> 8x8
    x = jax.random.normal(kx, (2, 4, 16, 16), jnp.float32)  # NCHW, like PyTorch
    params = init_params(kp, in_ch=4, depth=8, stride=2)
    fwd2 = jax.jit(functools.partial(bottleneck_ir_forward, stride=2))
    out = jax.block_until_ready(fwd2(x, params))
    ref = ref_forward(x, params, 2)
    assert out.shape == (2, 8, 8, 8), out.shape
    assert jnp.allclose(out, ref, rtol=RTOL, atol=ATOL), float(jnp.max(jnp.abs(out - ref)))

    # stride = 1 branch (identity shortcut): in_channel == depth == 4
    x2 = jax.random.normal(kx2, (2, 4, 16, 16), jnp.float32)
    params2 = init_params(kp2, in_ch=4, depth=4, stride=1)
    fwd1 = jax.jit(functools.partial(bottleneck_ir_forward, stride=1))
    out2 = jax.block_until_ready(fwd1(x2, params2))
    ref2 = ref_forward(x2, params2, 1)
    assert out2.shape == (2, 4, 16, 16), out2.shape
    assert jnp.allclose(out2, ref2, rtol=RTOL, atol=ATOL), float(jnp.max(jnp.abs(out2 - ref2)))

    print("KERNEL_OK")
</pallas_src>

<mosaic_0001>
module attributes {stable_mosaic.version = 11 : i64} {
  func.func @_conv1_bn_prelu_kernel(%arg0: i32, %arg1: memref<256x1152xbf16, #tpu.memory_space<vmem>>, %arg2: memref<1152x128xbf16, #tpu.memory_space<vmem>>, %arg3: memref<1x128xf32, #tpu.memory_space<vmem>>, %arg4: memref<1x128xf32, #tpu.memory_space<vmem>>, %arg5: memref<1x128xf32, #tpu.memory_space<vmem>>, %arg6: memref<256x128xbf16, #tpu.memory_space<vmem>>) attributes {dimension_semantics = [#tpu.dimension_semantics<parallel>], iteration_bounds = array<i64: 2>, scalar_prefetch = 0 : i64, scratch_operands = 0 : i64, tpu.core_type = #tpu.core_type<tc>, window_params = [{transform_indices = @transform_0, window_bounds = array<i64: 256, 1152>}, {pipeline_mode = #tpu.pipeline_mode<synchronous>, transform_indices = @transform_1, window_bounds = array<i64: 1152, 128>}, {pipeline_mode = #tpu.pipeline_mode<synchronous>, transform_indices = @transform_2, window_bounds = array<i64: 1, 128>}, {pipeline_mode = #tpu.pipeline_mode<synchronous>, transform_indices = @transform_3, window_bounds = array<i64: 1, 128>}, {pipeline_mode = #tpu.pipeline_mode<synchronous>, transform_indices = @transform_4, window_bounds = array<i64: 1, 128>}, {transform_indices = @transform_5, window_bounds = array<i64: 256, 128>}]} {
    %c0 = arith.constant 0 : index
    %c0_0 = arith.constant 0 : index
    %0 = vector.load %arg1[%c0, %c0_0] : memref<256x1152xbf16, #tpu.memory_space<vmem>>, vector<256x1152xbf16>
    %c0_1 = arith.constant 0 : index
    %c0_2 = arith.constant 0 : index
    %1 = vector.load %arg2[%c0_1, %c0_2] : memref<1152x128xbf16, #tpu.memory_space<vmem>>, vector<1152x128xbf16>
    %cst = arith.constant dense<0.000000e+00> : vector<256x128xf32>
    %2 = tpu.matmul %0, %1, %cst {dimension_numbers = #tpu.dot_dimension_numbers<[1], [0], [0], [1], [0, 0, 1, 1], [], []>} : vector<256x1152xbf16>, vector<1152x128xbf16>, vector<256x128xf32> -> vector<256x128xf32>
    %c0_3 = arith.constant 0 : index
    %c0_4 = arith.constant 0 : index
    %3 = vector.load %arg3[%c0_3, %c0_4] : memref<1x128xf32, #tpu.memory_space<vmem>>, vector<1x128xf32>
    %4 = vector.broadcast %3 : vector<1x128xf32> to vector<256x128xf32>
    %5 = arith.mulf %2, %4 : vector<256x128xf32>
    %c0_5 = arith.constant 0 : index
    %c0_6 = arith.constant 0 : index
    %6 = vector.load %arg4[%c0_5, %c0_6] : memref<1x128xf32, #tpu.memory_space<vmem>>, vector<1x128xf32>
    %7 = vector.broadcast %6 : vector<1x128xf32> to vector<256x128xf32>
    %8 = arith.addf %5, %7 : vector<256x128xf32>
    %cst_7 = arith.constant 0.000000e+00 : f32
    %9 = vector.broadcast %cst_7 : f32 to vector<256x128xf32>
    %10 = arith.cmpf ogt, %8, %9 : vector<256x128xf32>
    %c0_8 = arith.constant 0 : index
    %c0_9 = arith.constant 0 : index
    %11 = vector.load %arg5[%c0_8, %c0_9] : memref<1x128xf32, #tpu.memory_space<vmem>>, vector<1x128xf32>
    %12 = vector.broadcast %11 : vector<1x128xf32> to vector<256x128xf32>
    %13 = arith.mulf %12, %8 : vector<256x128xf32>
    %14 = arith.select %10, %8, %13 : vector<256x128xi1>, vector<256x128xf32>
    %15 = arith.truncf %14 : vector<256x128xf32> to vector<256x128xbf16>
    %c0_10 = arith.constant 0 : index
    %c0_11 = arith.constant 0 : index
    %16 = vector.load %arg6[%c0_10, %c0_11] : memref<256x128xbf16, #tpu.memory_space<vmem>>, vector<256x128xbf16>
    tpu.vector_store %arg6[%c0_10, %c0_11], %15 {strides = array<i32>} : memref<256x128xbf16, #tpu.memory_space<vmem>>, vector<256x128xbf16>,
    return
  }
  func.func @transform_0(%arg0: i32) -> (i32, i32) {
    %c0_i32 = arith.constant 0 : i32
    %c0_i32_0 = arith.constant 0 : i32
    return %arg0, %c0_i32 : i32, i32
  }
  func.func @transform_1(%arg0: i32) -> (i32, i32) {
    %c0_i32 = arith.constant 0 : i32
    %c0_i32_0 = arith.constant 0 : i32
    %c0_i32_1 = arith.constant 0 : i32
    return %c0_i32, %c0_i32_0 : i32, i32
  }
  func.func @transform_2(%arg0: i32) -> (i32, i32) {
    %c0_i32 = arith.constant 0 : i32
    %c0_i32_0 = arith.constant 0 : i32
    %c0_i32_1 = arith.constant 0 : i32
    return %c0_i32, %c0_i32_0 : i32, i32
  }
  func.func @transform_3(%arg0: i32) -> (i32, i32) {
    %c0_i32 = arith.constant 0 : i32
    %c0_i32_0 = arith.constant 0 : i32
    %c0_i32_1 = arith.constant 0 : i32
    return %c0_i32, %c0_i32_0 : i32, i32
  }
  func.func @transform_4(%arg0: i32) -> (i32, i32) {
    %c0_i32 = arith.constant 0 : i32
    %c0_i32_0 = arith.constant 0 : i32
    %c0_i32_1 = arith.constant 0 : i32
    return %c0_i32, %c0_i32_0 : i32, i32
  }
  func.func @transform_5(%arg0: i32) -> (i32, i32) {
    %c0_i32 = arith.constant 0 : i32
    %c0_i32_0 = arith.constant 0 : i32
    return %arg0, %c0_i32 : i32, i32
  }
}

module attributes {stable_mosaic.version = 11 : i64} {
  func.func @_conv2_bn_scconv_add_kernel(%arg0: i32, %arg1: memref<128x1152xbf16, #tpu.memory_space<vmem>>, %arg2: memref<128x128xbf16, #tpu.memory_space<vmem>>, %arg3: memref<1152x128xbf16, #tpu.memory_space<vmem>>, %arg4: memref<1x128xf32, #tpu.memory_space<vmem>>, %arg5: memref<1x128xf32, #tpu.memory_space<vmem>>, %arg6: memref<128x128xbf16, #tpu.memory_space<vmem>>, %arg7: memref<1x128xf32, #tpu.memory_space<vmem>>, %arg8: memref<1x128xf32, #tpu.memory_space<vmem>>, %arg9: memref<128x128xf32, #tpu.memory_space<vmem>>) attributes {dimension_semantics = [#tpu.dimension_semantics<parallel>], iteration_bounds = array<i64: 1>, scalar_prefetch = 0 : i64, scratch_operands = 0 : i64, tpu.core_type = #tpu.core_type<tc>, window_params = [{transform_indices = @transform_0, window_bounds = array<i64: 128, 1152>}, {transform_indices = @transform_1, window_bounds = array<i64: 128, 128>}, {pipeline_mode = #tpu.pipeline_mode<synchronous>, transform_indices = @transform_2, window_bounds = array<i64: 1152, 128>}, {pipeline_mode = #tpu.pipeline_mode<synchronous>, transform_indices = @transform_3, window_bounds = array<i64: 1, 128>}, {pipeline_mode = #tpu.pipeline_mode<synchronous>, transform_indices = @transform_4, window_bounds = array<i64: 1, 128>}, {pipeline_mode = #tpu.pipeline_mode<synchronous>, transform_indices = @transform_5, window_bounds = array<i64: 128, 128>}, {pipeline_mode = #tpu.pipeline_mode<synchronous>, transform_indices = @transform_6, window_bounds = array<i64: 1, 128>}, {pipeline_mode = #tpu.pipeline_mode<synchronous>, transform_indices = @transform_7, window_bounds = array<i64: 1, 128>}, {transform_indices = @transform_8, window_bounds = array<i64: 128, 128>}]} {
    %c0 = arith.constant 0 : index
    %c0_0 = arith.constant 0 : index
    %0 = vector.load %arg2[%c0, %c0_0] : memref<128x128xbf16, #tpu.memory_space<vmem>>, vector<128x128xbf16>
    %c0_1 = arith.constant 0 : index
    %c0_2 = arith.constant 0 : index
    %1 = vector.load %arg6[%c0_1, %c0_2] : memref<128x128xbf16, #tpu.memory_space<vmem>>, vector<128x128xbf16>
    %cst = arith.constant dense<0.000000e+00> : vector<128x128xf32>
    %2 = tpu.matmul %0, %1, %cst {dimension_numbers = #tpu.dot_dimension_numbers<[1], [0], [0], [1], [0, 0, 1, 1], [], []>} : vector<128x128xbf16>, vector<128x128xbf16>, vector<128x128xf32> -> vector<128x128xf32>
    %c0_3 = arith.constant 0 : index
    %c0_4 = arith.constant 0 : index
    %3 = vector.load %arg1[%c0_3, %c0_4] : memref<128x1152xbf16, #tpu.memory_space<vmem>>, vector<128x1152xbf16>
    %c0_5 = arith.constant 0 : index
    %c0_6 = arith.constant 0 : index
    %4 = vector.load %arg3[%c0_5, %c0_6] : memref<1152x128xbf16, #tpu.memory_space<vmem>>, vector<1152x128xbf16>
    %cst_7 = arith.constant dense<0.000000e+00> : vector<128x128xf32>
    %5 = tpu.matmul %3, %4, %cst_7 {dimension_numbers = #tpu.dot_dimension_numbers<[1], [0], [0], [1], [0, 0, 1, 1], [], []>} : vector<128x1152xbf16>, vector<1152x128xbf16>, vector<128x128xf32> -> vector<128x128xf32>
    %c0_8 = arith.constant 0 : index
    %c0_9 = arith.constant 0 : index
    %6 = vector.load %arg4[%c0_8, %c0_9] : memref<1x128xf32, #tpu.memory_space<vmem>>, vector<1x128xf32>
    %7 = vector.broadcast %6 : vector<1x128xf32> to vector<128x128xf32>
    %8 = arith.mulf %5, %7 : vector<128x128xf32>
    %c0_10 = arith.constant 0 : index
    %c0_11 = arith.constant 0 : index
    %9 = vector.load %arg5[%c0_10, %c0_11] : memref<1x128xf32, #tpu.memory_space<vmem>>, vector<1x128xf32>
    %10 = vector.broadcast %9 : vector<1x128xf32> to vector<128x128xf32>
    %11 = arith.addf %8, %10 : vector<128x128xf32>
    %c0_12 = arith.constant 0 : index
    %c0_13 = arith.constant 0 : index
    %12 = vector.load %arg7[%c0_12, %c0_13] : memref<1x128xf32, #tpu.memory_space<vmem>>, vector<1x128xf32>
    %13 = vector.broadcast %12 : vector<1x128xf32> to vector<128x128xf32>
    %14 = arith.mulf %2, %13 : vector<128x128xf32>
    %15 = arith.addf %11, %14 : vector<128x128xf32>
    %c0_14 = arith.constant 0 : index
    %c0_15 = arith.constant 0 : index
    %16 = vector.load %arg8[%c0_14, %c0_15] : memref<1x128xf32, #tpu.memory_space<vmem>>, vector<1x128xf32>
    %17 = vector.broadcast %16 : vector<1x128xf32> to vector<128x128xf32>
    %18 = arith.addf %15, %17 : vector<128x128xf32>
    %c0_16 = arith.constant 0 : index
    %c0_17 = arith.constant 0 : index
    %19 = vector.load %arg9[%c0_16, %c0_17] : memref<128x128xf32, #tpu.memory_space<vmem>>, vector<128x128xf32>
    tpu.vector_store %arg9[%c0_16, %c0_17], %18 {strides = array<i32>} : memref<128x128xf32, #tpu.memory_space<vmem>>, vector<128x128xf32>,
    return
  }
  func.func @transform_0(%arg0: i32) -> (i32, i32) {
    %c0_i32 = arith.constant 0 : i32
    %c0_i32_0 = arith.constant 0 : i32
    return %arg0, %c0_i32 : i32, i32
  }
  func.func @transform_1(%arg0: i32) -> (i32, i32) {
    %c0_i32 = arith.constant 0 : i32
    %c0_i32_0 = arith.constant 0 : i32
    return %arg0, %c0_i32 : i32, i32
  }
  func.func @transform_2(%arg0: i32) -> (i32, i32) {
    %c0_i32 = arith.constant 0 : i32
    %c0_i32_0 = arith.constant 0 : i32
    %c0_i32_1 = arith.constant 0 : i32
    return %c0_i32, %c0_i32_0 : i32, i32
  }
  func.func @transform_3(%arg0: i32) -> (i32, i32) {
    %c0_i32 = arith.constant 0 : i32
    %c0_i32_0 = arith.constant 0 : i32
    %c0_i32_1 = arith.constant 0 : i32
    return %c0_i32, %c0_i32_0 : i32, i32
  }
  func.func @transform_4(%arg0: i32) -> (i32, i32) {
    %c0_i32 = arith.constant 0 : i32
    %c0_i32_0 = arith.constant 0 : i32
    %c0_i32_1 = arith.constant 0 : i32
    return %c0_i32, %c0_i32_0 : i32, i32
  }
  func.func @transform_5(%arg0: i32) -> (i32, i32) {
    %c0_i32 = arith.constant 0 : i32
    %c0_i32_0 = arith.constant 0 : i32
    %c0_i32_1 = arith.constant 0 : i32
    return %c0_i32, %c0_i32_0 : i32, i32
  }
  func.func @transform_6(%arg0: i32) -> (i32, i32) {
    %c0_i32 = arith.constant 0 : i32
    %c0_i32_0 = arith.constant 0 : i32
    %c0_i32_1 = arith.constant 0 : i32
    return %c0_i32, %c0_i32_0 : i32, i32
  }
  func.func @transform_7(%arg0: i32) -> (i32, i32) {
    %c0_i32 = arith.constant 0 : i32
    %c0_i32_0 = arith.constant 0 : i32
    %c0_i32_1 = arith.constant 0 : i32
    return %c0_i32, %c0_i32_0 : i32, i32
  }
  func.func @transform_8(%arg0: i32) -> (i32, i32) {
    %c0_i32 = arith.constant 0 : i32
    %c0_i32_0 = arith.constant 0 : i32
    return %arg0, %c0_i32 : i32, i32
  }
}

</mosaic_0001>

<llo_original>
// kernel: bottleneck_ir_forward.3
$region0: #{bottleneck_ir_forward.3}
  #allocation0 [shape = 'u32[]', space=smem, size = 0x4, offset = 0x4, fixed_abs, tag = 'smem constant byte address 0x4 - core index']
  #allocation1 [shape = 'u32[144,128]{1,0:T(1,128)}', space=vmem, size = 0x12000, scoped, tag = 'internal scratch']
  %s0 = inlined_call_operand.vmem [shape: bf16[128,1152], index: 0, kind: input, shape index: {}]
  %s1 = inlined_call_operand.vmem [shape: bf16[128,128], index: 1, kind: input, shape index: {}]
  %s2 = inlined_call_operand.vmem [shape: bf16[1152,128], index: 2, kind: input, shape index: {}]
  %s3 = inlined_call_operand.vmem [shape: f32[1,128], index: 3, kind: input, shape index: {}]
  %s4 = inlined_call_operand.vmem [shape: f32[1,128], index: 4, kind: input, shape index: {}]
  %s5 = inlined_call_operand.vmem [shape: bf16[128,128], index: 5, kind: input, shape index: {}]
  %s6 = inlined_call_operand.vmem [shape: f32[1,128], index: 6, kind: input, shape index: {}]
  %s7 = inlined_call_operand.vmem [shape: f32[1,128], index: 7, kind: input, shape index: {}]
  %s8 = inlined_call_operand.vmem [shape: f32[128,128], index: 8, kind: output, shape index: {}]
  %s9 = sld [smem:[#allocation0]]
  $region42: #{bottleneck_ir_forward.3} parent=0
    _
  %s11 = ssub.s32 1, %s9
  %s12 = scalar_select 0, %s11, %s9
  // Predicated region
  $region2: #{bottleneck_ir_forward.3} parent=0 // pred_check
    _
  $region3: #{bottleneck_ir_forward.3} parent=0 // pred_check_branch
    %14 = sbr.rel (0) target = $region5
  $region4: #{bottleneck_ir_forward.3} parent=0 // pred_region
    _
  $region5: #{bottleneck_ir_forward.3} parent=0 // pred_fallthru
    _
  // Predicated region
  $region6: #{bottleneck_ir_forward.3} parent=0 // pred_check
    _
  $region7: #{bottleneck_ir_forward.3} parent=0 // pred_check_branch
    %16 = sbr.rel (0) target = $region9
  $region8: #{bottleneck_ir_forward.3} parent=0 // pred_region
    _
  $region9: #{bottleneck_ir_forward.3} parent=0 // pred_fallthru
    _
  // Predicated region
  $region10: #{bottleneck_ir_forward.3} parent=0 // pred_check
    _
  $region11: #{bottleneck_ir_forward.3} parent=0 // pred_check_branch
    %18 = sbr.rel (0) target = $region13
  $region12: #{bottleneck_ir_forward.3} parent=0 // pred_region
    _
  $region13: #{bottleneck_ir_forward.3} parent=0 // pred_fallthru
    _
  // Predicated region
  $region14: #{bottleneck_ir_forward.3} parent=0 // pred_check
    _
  $region15: #{bottleneck_ir_forward.3} parent=0 // pred_check_branch
    %20 = sbr.rel (0) target = $region17
  $region16: #{bottleneck_ir_forward.3} parent=0 // pred_region
    _
  $region17: #{bottleneck_ir_forward.3} parent=0 // pred_fallthru
    _
  // Predicated region
  $region18: #{bottleneck_ir_forward.3} parent=0 // pred_check
    _
  $region19: #{bottleneck_ir_forward.3} parent=0 // pred_check_branch
    %22 = sbr.rel (0) target = $region21
  $region20: #{bottleneck_ir_forward.3} parent=0 // pred_region
    _
  $region21: #{bottleneck_ir_forward.3} parent=0 // pred_fallthru
    _
  // Predicated region
  $region22: #{bottleneck_ir_forward.3} parent=0 // pred_check
    _
  $region23: #{bottleneck_ir_forward.3} parent=0 // pred_check_branch
    %24 = sbr.rel (0) target = $region25
  $region24: #{bottleneck_ir_forward.3} parent=0 // pred_region
    _
  $region25: #{bottleneck_ir_forward.3} parent=0 // pred_fallthru
    _
  // Predicated region
  $region26: #{bottleneck_ir_forward.3} parent=0 // pred_check
    _
  $region27: #{bottleneck_ir_forward.3} parent=0 // pred_check_branch
    %26 = sbr.rel (0) target = $region29
  $region28: #{bottleneck_ir_forward.3} parent=0 // pred_region
    _
  $region29: #{bottleneck_ir_forward.3} parent=0 // pred_fallthru
    _
  // Predicated region
  $region30: #{bottleneck_ir_forward.3} parent=0 // pred_check
    _
  $region31: #{bottleneck_ir_forward.3} parent=0 // pred_check_branch
    %28 = sbr.rel (0) target = $region33
  $region32: #{bottleneck_ir_forward.3} parent=0 // pred_region
    _
  $region33: #{bottleneck_ir_forward.3} parent=0 // pred_fallthru
    _
  %v30 = vld [vmem:[%s1] sm:$0xf]
  %v31 = vld [vmem:[%s1 + $0x4] sm:$0xf]
  %v32 = vld [vmem:[%s1 + $0x8] sm:$0xf]
  %v33 = vld [vmem:[%s1 + $0xc] sm:$0xf]
  %v34 = vld [vmem:[%s1 + $0x10] sm:$0xf]
  %v35 = vld [vmem:[%s1 + $0x14] sm:$0xf]
  %v36 = vld [vmem:[%s1 + $0x18] sm:$0xf]
  %v37 = vld [vmem:[%s1 + $0x1c] sm:$0xf]
  %v38 = vld [vmem:[%s1 + $0x20] sm:$0xf]
  %v39 = vld [vmem:[%s1 + $0x24] sm:$0xf]
  %v40 = vld [vmem:[%s1 + $0x28] sm:$0xf]
  %v41 = vld [vmem:[%s1 + $0x2c] sm:$0xf]
  %v42 = vld [vmem:[%s1 + $0x30] sm:$0xf]
  %v43 = vld [vmem:[%s1 + $0x34] sm:$0xf]
  %v44 = vld [vmem:[%s1 + $0x38] sm:$0xf]
  %v45 = vld [vmem:[%s1 + $0x3c] sm:$0xf]
  %v46 = vld [vmem:[%s5] sm:$0xf]
  %v47 = vld [vmem:[%s5 + $0x4] sm:$0xf]
  %v48 = vld [vmem:[%s5 + $0x8] sm:$0xf]
  %v49 = vld [vmem:[%s5 + $0xc] sm:$0xf]
  %v50 = vld [vmem:[%s5 + $0x10] sm:$0xf]
  %v51 = vld [vmem:[%s5 + $0x14] sm:$0xf]
  %v52 = vld [vmem:[%s5 + $0x18] sm:$0xf]
  %v53 = vld [vmem:[%s5 + $0x1c] sm:$0xf]
  %v54 = vld [vmem:[%s5 + $0x20] sm:$0xf]
  %v55 = vld [vmem:[%s5 + $0x24] sm:$0xf]
  %v56 = vld [vmem:[%s5 + $0x28] sm:$0xf]
  %v57 = vld [vmem:[%s5 + $0x2c] sm:$0xf]
  %v58 = vld [vmem:[%s5 + $0x30] sm:$0xf]
  %v59 = vld [vmem:[%s5 + $0x34] sm:$0xf]
  %v60 = vld [vmem:[%s5 + $0x38] sm:$0xf]
  %v61 = vld [vmem:[%s5 + $0x3c] sm:$0xf]
  %v78 = vunpack.c.l.b16 %v30
  %v79 = vunpack.c.l.b16 %v31
  %v80 = vunpack.c.l.b16 %v32
  %v81 = vunpack.c.l.b16 %v33
  %v82 = vunpack.c.l.b16 %v34
  %v83 = vunpack.c.l.b16 %v35
  %v84 = vunpack.c.l.b16 %v36
  %v85 = vunpack.c.l.b16 %v37
  %v86 = vunpack.c.l.b16 %v38
  %v87 = vunpack.c.l.b16 %v39
  %v88 = vunpack.c.l.b16 %v40
  %v89 = vunpack.c.l.b16 %v41
  %v90 = vunpack.c.l.b16 %v42
  %v91 = vunpack.c.l.b16 %v43
  %v92 = vunpack.c.l.b16 %v44
  %v93 = vunpack.c.l.b16 %v45
  %v94 = vpack.c.b16 %v79, %v78
  %v95 = vpack.c.b16 %v81, %v80
  %v96 = vpack.c.b16 %v83, %v82
  %v97 = vpack.c.b16 %v85, %v84
  %v98 = vpack.c.b16 %v87, %v86
  %v99 = vpack.c.b16 %v89, %v88
  %v100 = vpack.c.b16 %v91, %v90
  %v101 = vpack.c.b16 %v93, %v92
  %v126 = vunpack.c.l.b16 %v46
  %v127 = vunpack.c.l.b16 %v47
  %v128 = vunpack.c.l.b16 %v48
  %v129 = vunpack.c.l.b16 %v49
  %v130 = vunpack.c.l.b16 %v50
  %v131 = vunpack.c.l.b16 %v51
  %v132 = vunpack.c.l.b16 %v52
  %v133 = vunpack.c.l.b16 %v53
  %v134 = vunpack.c.l.b16 %v54
  %v135 = vunpack.c.l.b16 %v55
  %v136 = vunpack.c.l.b16 %v56
  %v137 = vunpack.c.l.b16 %v57
  %v138 = vunpack.c.l.b16 %v58
  %v139 = vunpack.c.l.b16 %v59
  %v140 = vunpack.c.l.b16 %v60
  %v141 = vunpack.c.l.b16 %v61
  %v142 = vpack.c.b16 %v127, %v126
  %v143 = vpack.c.b16 %v129, %v128
  %v144 = vpack.c.b16 %v131, %v130
  %v145 = vpack.c.b16 %v133, %v132
  %v146 = vpack.c.b16 %v135, %v134
  %v147 = vpack.c.b16 %v137, %v136
  %v148 = vpack.c.b16 %v139, %v138
  %v149 = vpack.c.b16 %v141, %v140
  %158 = vmatprep.subr.bf16.mxu0 0
  %159 = vmatpush1.bf16.msra.mxu0 %v142
  %160 = vmatprep.subr.bf16.mxu0 0
  %161 = vmatpush1.bf16.msra.mxu0 %v143
  %162 = vmatprep.subr.bf16.mxu0 0
  %163 = vmatpush1.bf16.msra.mxu0 %v144
  %164 = vmatprep.subr.bf16.mxu0 0
  %165 = vmatpush1.bf16.msra.mxu0 %v145
  %166 = vmatprep.subr.bf16.mxu0 0
  %167 = vmatpush1.bf16.msra.mxu0 %v146
  %168 = vmatprep.subr.bf16.mxu0 0
  %169 = vmatpush1.bf16.msra.mxu0 %v147
  %170 = vmatprep.subr.bf16.mxu0 0
  %171 = vmatpush1.bf16.msra.mxu0 %v148
  %172 = vmatprep.subr.bf16.mxu0 0
  %173 = vmatpush1.bf16.msra.mxu0 %v149
  %174 = vmatprep.subr.bf16.mxu0 0
  %175 = vmatpush1.bf16.msra.mxu0 0
  %176 = vmatprep.subr.bf16.mxu0 0
  %177 = vmatpush1.bf16.msra.mxu0 0
  %178 = vmatprep.subr.bf16.mxu0 0
  %179 = vmatpush1.bf16.msra.mxu0 0
  %180 = vmatprep.subr.bf16.mxu0 0
  %181 = vmatpush1.bf16.msra.mxu0 0
  %182 = vmatprep.subr.bf16.mxu0 0
  %183 = vmatpush1.bf16.msra.mxu0 0
  %184 = vmatprep.subr.bf16.mxu0 0
  %185 = vmatpush1.bf16.msra.mxu0 0
  %186 = vmatprep.subr.bf16.mxu0 0
  %187 = vmatpush1.bf16.msra.mxu0 0
  %188 = vmatprep.subr.bf16.mxu0 0
  %189 = vmatpush1.bf16.msra.mxu0 0
  %190 = vmatprep.mubr.bf16.mxu0 0
  %191 = vmatmul.mubr.bf16.gmra.mrb[0].mxu0 %v94
  %v192 = vpop.f32.mrb[0].mxu0
  %v193 = vadd.f32 0.0, %v192
  %v194 = vpop.f32.mrb[0].mxu0
  %v195 = vpop.f32.mrb[0].mxu0
  %v196 = vadd.f32 0.0, %v195
  %v197 = vpop.f32.mrb[0].mxu0
  %198 = vmatprep.mubr.bf16.mxu0 0
  %199 = vmatmul.mubr.bf16.gmra.mrb[0].mxu0 %v95
  %v200 = vpop.f32.mrb[0].mxu0
  %v201 = vadd.f32 0.0, %v200
  %v202 = vpop.f32.mrb[0].mxu0
  %v203 = vpop.f32.mrb[0].mxu0
  %v204 = vadd.f32 0.0, %v203
  %v205 = vpop.f32.mrb[0].mxu0
  %206 = vmatprep.mubr.bf16.mxu0 0
  %207 = vmatmul.mubr.bf16.gmra.mrb[0].mxu0 %v96
  %v208 = vpop.f32.mrb[0].mxu0
  %v209 = vadd.f32 0.0, %v208
  %v210 = vpop.f32.mrb[0].mxu0
  %v211 = vpop.f32.mrb[0].mxu0
  %v212 = vadd.f32 0.0, %v211
  %v213 = vpop.f32.mrb[0].mxu0
  %214 = vmatprep.mubr.bf16.mxu0 0
  %215 = vmatmul.mubr.bf16.gmra.mrb[0].mxu0 %v97
  %v216 = vpop.f32.mrb[0].mxu0
  %v217 = vadd.f32 0.0, %v216
  %v218 = vpop.f32.mrb[0].mxu0
  %v219 = vpop.f32.mrb[0].mxu0
  %v220 = vadd.f32 0.0, %v219
  %v221 = vpop.f32.mrb[0].mxu0
  %222 = vmatprep.mubr.bf16.mxu0 0
  %223 = vmatmul.mubr.bf16.gmra.mrb[0].mxu0 %v98
  %v224 = vpop.f32.mrb[0].mxu0
  %v225 = vadd.f32 0.0, %v224
  %v226 = vpop.f32.mrb[0].mxu0
  %v227 = vpop.f32.mrb[0].mxu0
  %v228 = vadd.f32 0.0, %v227
  %v229 = vpop.f32.mrb[0].mxu0
  %230 = vmatprep.mubr.bf16.mxu0 0
  %231 = vmatmul.mubr.bf16.gmra.mrb[0].mxu0 %v99
  %v232 = vpop.f32.mrb[0].mxu0
  %v233 = vadd.f32 0.0, %v232
  %v234 = vpop.f32.mrb[0].mxu0
  %v235 = vpop.f32.mrb[0].mxu0
  %v236 = vadd.f32 0.0, %v235
  %v237 = vpop.f32.mrb[0].mxu0
  %238 = vmatprep.mubr.bf16.mxu0 0
  %239 = vmatmul.mubr.bf16.gmra.mrb[0].mxu0 %v100
  %v240 = vpop.f32.mrb[0].mxu0
  %v241 = vadd.f32 0.0, %v240
  %v242 = vpop.f32.mrb[0].mxu0
  %v243 = vpop.f32.mrb[0].mxu0
  %v244 = vadd.f32 0.0, %v243
  %v245 = vpop.f32.mrb[0].mxu0
  %246 = vmatprep.mubr.bf16.mxu0 0
  %247 = vmatmul.mubr.bf16.gmra.mrb[0].mxu0 %v101
  %v248 = vpop.f32.mrb[0].mxu0
  %v249 = vadd.f32 0.0, %v248
  %v250 = vpop.f32.mrb[0].mxu0
  %v251 = vpop.f32.mrb[0].mxu0
  %v252 = vadd.f32 0.0, %v251
  %v253 = vpop.f32.mrb[0].mxu0
  %254 = vdwg.mxu0
  %v255 = vld [vmem:[%s0] sm:$0xff]
  %v256 = vld [vmem:[%s0 + $0x8] sm:$0xff]
  %v257 = vld [vmem:[%s0 + $0x10] sm:$0xff]
  %v258 = vld [vmem:[%s0 + $0x18] sm:$0xff]
  %v259 = vld [vmem:[%s0 + $0x20] sm:$0xf]
  %v260 = vld [vmem:[%s0 + $0x24] sm:$0xff]
  %v261 = vld [vmem:[%s0 + $0x2c] sm:$0xff]
  %v262 = vld [vmem:[%s0 + $0x34] sm:$0xff]
  %v263 = vld [vmem:[%s0 + $0x3c] sm:$0xff]
  %v264 = vld [vmem:[%s0 + $0x44] sm:$0xf]
  %v265 = vld [vmem:[%s0 + $0x48] sm:$0xff]
  %v266 = vld [vmem:[%s0 + $0x50] sm:$0xff]
  %v267 = vld [vmem:[%s0 + $0x58] sm:$0xff]
  %v268 = vld [vmem:[%s0 + $0x60] sm:$0xff]
  %v269 = vld [vmem:[%s0 + $0x68] sm:$0xf]
  %v270 = vld [vmem:[%s0 + $0x6c] sm:$0xff]
  %v271 = vld [vmem:[%s0 + $0x74] sm:$0xff]
  %v272 = vld [vmem:[%s0 + $0x7c] sm:$0xff]
  %v273 = vld [vmem:[%s0 + $0x84] sm:$0xff]
  %v274 = vld [vmem:[%s0 + $0x8c] sm:$0xf]
  %v275 = vld [vmem:[%s0 + $0x90] sm:$0xff]
  %v276 = vld [vmem:[%s0 + $0x98] sm:$0xff]
  %v277 = vld [vmem:[%s0 + $0xa0] sm:$0xff]
  %v278 = vld [vmem:[%s0 + $0xa8] sm:$0xff]
  %v279 = vld [vmem:[%s0 + $0xb0] sm:$0xf]
  %v280 = vld [vmem:[%s0 + $0xb4] sm:$0xff]
  %v281 = vld [vmem:[%s0 + $0xbc] sm:$0xff]
  %v282 = vld [vmem:[%s0 + $0xc4] sm:$0xff]
  %v283 = vld [vmem:[%s0 + $0xcc] sm:$0xff]
  %v284 = vld [vmem:[%s0 + $0xd4] sm:$0xf]
  %v285 = vld [vmem:[%s0 + $0xd8] sm:$0xff]
  %v286 = vld [vmem:[%s0 + $0xe0] sm:$0xff]
  %v287 = vld [vmem:[%s0 + $0xe8] sm:$0xff]
  %v288 = vld [vmem:[%s0 + $0xf0] sm:$0xff]
  %v289 = vld [vmem:[%s0 + $0xf8] sm:$0xf]
  %v290 = vld [vmem:[%s0 + $0xfc] sm:$0xff]
  %v291 = vld [vmem:[%s0 + $0x104] sm:$0xff]
  %v292 = vld [vmem:[%s0 + $0x10c] sm:$0xff]
  %v293 = vld [vmem:[%s0 + $0x114] sm:$0xff]
  %v294 = vld [vmem:[%s0 + $0x11c] sm:$0xf]
  %v295 = vld [vmem:[%s0 + $0x120] sm:$0xff]
  %v296 = vld [vmem:[%s0 + $0x128] sm:$0xff]
  %v297 = vld [vmem:[%s0 + $0x130] sm:$0xff]
  %v298 = vld [vmem:[%s0 + $0x138] sm:$0xff]
  %v299 = vld [vmem:[%s0 + $0x140] sm:$0xf]
  %v300 = vld [vmem:[%s0 + $0x144] sm:$0xff]
  %v301 = vld [vmem:[%s0 + $0x14c] sm:$0xff]
  %v302 = vld [vmem:[%s0 + $0x154] sm:$0xff]
  %v303 = vld [vmem:[%s0 + $0x15c] sm:$0xff]
  %v304 = vld [vmem:[%s0 + $0x164] sm:$0xf]
  %v305 = vld [vmem:[%s0 + $0x168] sm:$0xff]
  %v306 = vld [vmem:[%s0 + $0x170] sm:$0xff]
  %v307 = vld [vmem:[%s0 + $0x178] sm:$0xff]
  %v308 = vld [vmem:[%s0 + $0x180] sm:$0xff]
  %v309 = vld [vmem:[%s0 + $0x188] sm:$0xf]
  %v310 = vld [vmem:[%s0 + $0x18c] sm:$0xff]
  %v311 = vld [vmem:[%s0 + $0x194] sm:$0xff]
  %v312 = vld [vmem:[%s0 + $0x19c] sm:$0xff]
  %v313 = vld [vmem:[%s0 + $0x1a4] sm:$0xff]
  %v314 = vld [vmem:[%s0 + $0x1ac] sm:$0xf]
  %v315 = vld [vmem:[%s0 + $0x1b0] sm:$0xff]
  %v316 = vld [vmem:[%s0 + $0x1b8] sm:$0xff]
  %v317 = vld [vmem:[%s0 + $0x1c0] sm:$0xff]
  %v318 = vld [vmem:[%s0 + $0x1c8] sm:$0xff]
  %v319 = vld [vmem:[%s0 + $0x1d0] sm:$0xf]
  %v320 = vld [vmem:[%s0 + $0x1d4] sm:$0xff]
  %v321 = vld [vmem:[%s0 + $0x1dc] sm:$0xff]
  %v322 = vld [vmem:[%s0 + $0x1e4] sm:$0xff]
  %v323 = vld [vmem:[%s0 + $0x1ec] sm:$0xff]
  %v324 = vld [vmem:[%s0 + $0x1f4] sm:$0xf]
  %v325 = vld [vmem:[%s0 + $0x1f8] sm:$0xff]
  %v326 = vld [vmem:[%s0 + $0x200] sm:$0xff]
  %v327 = vld [vmem:[%s0 + $0x208] sm:$0xff]
  %v328 = vld [vmem:[%s0 + $0x210] sm:$0xff]
  %v329 = vld [vmem:[%s0 + $0x218] sm:$0xf]
  %v330 = vld [vmem:[%s0 + $0x21c] sm:$0xff]
  %v331 = vld [vmem:[%s0 + $0x224] sm:$0xff]
  %v332 = vld [vmem:[%s0 + $0x22c] sm:$0xff]
  %v333 = vld [vmem:[%s0 + $0x234] sm:$0xff]
  %v334 = vld [vmem:[%s0 + $0x23c] sm:$0xf]
  %v335 = vld [vmem:[%s2] sm:$0xf]
  %v336 = vld [vmem:[%s2 + $0x4] sm:$0xf]
  %v337 = vld [vmem:[%s2 + $0x8] sm:$0xf]
  %v338 = vld [vmem:[%s2 + $0xc] sm:$0xf]
  %v339 = vld [vmem:[%s2 + $0x10] sm:$0xf]
  %v340 = vld [vmem:[%s2 + $0x14] sm:$0xf]
  %v341 = vld [vmem:[%s2 + $0x18] sm:$0xf]
  %v342 = vld [vmem:[%s2 + $0x1c] sm:$0xf]
  %v343 = vld [vmem:[%s2 + $0x20] sm:$0xf]
  %v344 = vld [vmem:[%s2 + $0x24] sm:$0xf]
  %v345 = vld [vmem:[%s2 + $0x28] sm:$0xf]
  %v346 = vld [vmem:[%s2 + $0x2c] sm:$0xf]
  %v347 = vld [vmem:[%s2 + $0x30] sm:$0xf]
  %v348 = vld [vmem:[%s2 + $0x34] sm:$0xf]
  %v349 = vld [vmem:[%s2 + $0x38] sm:$0xf]
  %v350 = vld [vmem:[%s2 + $0x3c] sm:$0xf]
  %v351 = vld [vmem:[%s2 + $0x40] sm:$0xf]
  %v352 = vld [vmem:[%s2 + $0x44] sm:$0xf]
  %v353 = vld [vmem:[%s2 + $0x48] sm:$0xf]
  %v354 = vld [vmem:[%s2 + $0x4c] sm:$0xf]
  %v355 = vld [vmem:[%s2 + $0x50] sm:$0xf]
  %v356 = vld [vmem:[%s2 + $0x54] sm:$0xf]
  %v357 = vld [vmem:[%s2 + $0x58] sm:$0xf]
  %v358 = vld [vmem:[%s2 + $0x5c] sm:$0xf]
  %v359 = vld [vmem:[%s2 + $0x60] sm:$0xf]
  %v360 = vld [vmem:[%s2 + $0x64] sm:$0xf]
  %v361 = vld [vmem:[%s2 + $0x68] sm:$0xf]
  %v362 = vld [vmem:[%s2 + $0x6c] sm:$0xf]
  %v363 = vld [vmem:[%s2 + $0x70] sm:$0xf]
  %v364 = vld [vmem:[%s2 + $0x74] sm:$0xf]
  %v365 = vld [vmem:[%s2 + $0x78] sm:$0xf]
  %v366 = vld [vmem:[%s2 + $0x7c] sm:$0xf]
  %v367 = vld [vmem:[%s2 + $0x80] sm:$0xf]
  %v368 = vld [vmem:[%s2 + $0x84] sm:$0xf]
  %v369 = vld [vmem:[%s2 + $0x88] sm:$0xf]
  %v370 = vld [vmem:[%s2 + $0x8c] sm:$0xf]
  %v371 = vld [vmem:[%s2 + $0x90] sm:$0xf]
  %v372 = vld [vmem:[%s2 + $0x94] sm:$0xf]
  %v373 = vld [vmem:[%s2 + $0x98] sm:$0xf]
  %v374 = vld [vmem:[%s2 + $0x9c] sm:$0xf]
  %v375 = vld [vmem:[%s2 + $0xa0] sm:$0xf]
  %v376 = vld [vmem:[%s2 + $0xa4] sm:$0xf]
  %v377 = vld [vmem:[%s2 + $0xa8] sm:$0xf]
  %v378 = vld [vmem:[%s2 + $0xac] sm:$0xf]
  %v379 = vld [vmem:[%s2 + $0xb0] sm:$0xf]
  %v380 = vld [vmem:[%s2 + $0xb4] sm:$0xf]
  %v381 = vld [vmem:[%s2 + $0xb8] sm:$0xf]
  %v382 = vld [vmem:[%s2 + $0xbc] sm:$0xf]
  %v383 = vld [vmem:[%s2 + $0xc0] sm:$0xf]
  %v384 = vld [vmem:[%s2 + $0xc4] sm:$0xf]
  %v385 = vld [vmem:[%s2 + $0xc8] sm:$0xf]
  %v386 = vld [vmem:[%s2 + $0xcc] sm:$0xf]
  %v387 = vld [vmem:[%s2 + $0xd0] sm:$0xf]
  %v388 = vld [vmem:[%s2 + $0xd4] sm:$0xf]
  %v389 = vld [vmem:[%s2 + $0xd8] sm:$0xf]
  %v390 = vld [vmem:[%s2 + $0xdc] sm:$0xf]
  %v391 = vld [vmem:[%s2 + $0xe0] sm:$0xf]
  %v392 = vld [vmem:[%s2 + $0xe4] sm:$0xf]
  %v393 = vld [vmem:[%s2 + $0xe8] sm:$0xf]
  %v394 = vld [vmem:[%s2 + $0xec] sm:$0xf]
  %v395 = vld [vmem:[%s2 + $0xf0] sm:$0xf]
  %v396 = vld [vmem:[%s2 + $0xf4] sm:$0xf]
  %v397 = vld [vmem:[%s2 + $0xf8] sm:$0xf]
  %v398 = vld [vmem:[%s2 + $0xfc] sm:$0xf]
  %v399 = vld [vmem:[%s2 + $0x100] sm:$0xf]
  %v400 = vld [vmem:[%s2 + $0x104] sm:$0xf]
  %v401 = vld [vmem:[%s2 + $0x108] sm:$0xf]
  %v402 = vld [vmem:[%s2 + $0x10c] sm:$0xf]
  %v403 = vld [vmem:[%s2 + $0x110] sm:$0xf]
  %v404 = vld [vmem:[%s2 + $0x114] sm:$0xf]
  %v405 = vld [vmem:[%s2 + $0x118] sm:$0xf]
  %v406 = vld [vmem:[%s2 + $0x11c] sm:$0xf]
  %v407 = vld [vmem:[%s2 + $0x120] sm:$0xf]
  %v408 = vld [vmem:[%s2 + $0x124] sm:$0xf]
  %v409 = vld [vmem:[%s2 + $0x128] sm:$0xf]
  %v410 = vld [vmem:[%s2 + $0x12c] sm:$0xf]
  %v411 = vld [vmem:[%s2 + $0x130] sm:$0xf]
  %v412 = vld [vmem:[%s2 + $0x134] sm:$0xf]
  %v413 = vld [vmem:[%s2 + $0x138] sm:$0xf]
  %v414 = vld [vmem:[%s2 + $0x13c] sm:$0xf]
  %v415 = vld [vmem:[%s2 + $0x140] sm:$0xf]
  %v416 = vld [vmem:[%s2 + $0x144] sm:$0xf]
  %v417 = vld [vmem:[%s2 + $0x148] sm:$0xf]
  %v418 = vld [vmem:[%s2 + $0x14c] sm:$0xf]
  %v419 = vld [vmem:[%s2 + $0x150] sm:$0xf]
  %v420 = vld [vmem:[%s2 + $0x154] sm:$0xf]
  %v421 = vld [vmem:[%s2 + $0x158] sm:$0xf]
  %v422 = vld [vmem:[%s2 + $0x15c] sm:$0xf]
  %v423 = vld [vmem:[%s2 + $0x160] sm:$0xf]
  %v424 = vld [vmem:[%s2 + $0x164] sm:$0xf]
  %v425 = vld [vmem:[%s2 + $0x168] sm:$0xf]
  %v426 = vld [vmem:[%s2 + $0x16c] sm:$0xf]
  %v427 = vld [vmem:[%s2 + $0x170] sm:$0xf]
  %v428 = vld [vmem:[%s2 + $0x174] sm:$0xf]
  %v429 = vld [vmem:[%s2 + $0x178] sm:$0xf]
  %v430 = vld [vmem:[%s2 + $0x17c] sm:$0xf]
  %v431 = vld [vmem:[%s2 + $0x180] sm:$0xf]
  %v432 = vld [vmem:[%s2 + $0x184] sm:$0xf]
  %v433 = vld [vmem:[%s2 + $0x188] sm:$0xf]
  %v434 = vld [vmem:[%s2 + $0x18c] sm:$0xf]
  %v435 = vld [vmem:[%s2 + $0x190] sm:$0xf]
  %v436 = vld [vmem:[%s2 + $0x194] sm:$0xf]
  %v437 = vld [vmem:[%s2 + $0x198] sm:$0xf]
  %v438 = vld [vmem:[%s2 + $0x19c] sm:$0xf]
  %v439 = vld [vmem:[%s2 + $0x1a0] sm:$0xf]
  %v440 = vld [vmem:[%s2 + $0x1a4] sm:$0xf]
  %v441 = vld [vmem:[%s2 + $0x1a8] sm:$0xf]
  %v442 = vld [vmem:[%s2 + $0x1ac] sm:$0xf]
  %v443 = vld [vmem:[%s2 + $0x1b0] sm:$0xf]
  %v444 = vld [vmem:[%s2 + $0x1b4] sm:$0xf]
  %v445 = vld [vmem:[%s2 + $0x1b8] sm:$0xf]
  %v446 = vld [vmem:[%s2 + $0x1bc] sm:$0xf]
  %v447 = vld [vmem:[%s2 + $0x1c0] sm:$0xf]
  %v448 = vld [vmem:[%s2 + $0x1c4] sm:$0xf]
  %v449 = vld [vmem:[%s2 + $0x1c8] sm:$0xf]
  %v450 = vld [vmem:[%s2 + $0x1cc] sm:$0xf]
  %v451 = vld [vmem:[%s2 + $0x1d0] sm:$0xf]
  %v452 = vld [vmem:[%s2 + $0x1d4] sm:$0xf]
  %v453 = vld [vmem:[%s2 + $0x1d8] sm:$0xf]
  %v454 = vld [vmem:[%s2 + $0x1dc] sm:$0xf]
  %v455 = vld [vmem:[%s2 + $0x1e0] sm:$0xf]
  %v456 = vld [vmem:[%s2 + $0x1e4] sm:$0xf]
  %v457 = vld [vmem:[%s2 + $0x1e8] sm:$0xf]
  %v458 = vld [vmem:[%s2 + $0x1ec] sm:$0xf]
  %v459 = vld [vmem:[%s2 + $0x1f0] sm:$0xf]
  %v460 = vld [vmem:[%s2 + $0x1f4] sm:$0xf]
  %v461 = vld [vmem:[%s2 + $0x1f8] sm:$0xf]
  %v462 = vld [vmem:[%s2 + $0x1fc] sm:$0xf]
  %v463 = vld [vmem:[%s2 + $0x200] sm:$0xf]
  %v464 = vld [vmem:[%s2 + $0x204] sm:$0xf]
  %v465 = vld [vmem:[%s2 + $0x208] sm:$0xf]
  %v466 = vld [vmem:[%s2 + $0x20c] sm:$0xf]
  %v467 = vld [vmem:[%s2 + $0x210] sm:$0xf]
  %v468 = vld [vmem:[%s2 + $0x214] sm:$0xf]
  %v469 = vld [vmem:[%s2 + $0x218] sm:$0xf]
  %v470 = vld [vmem:[%s2 + $0x21c] sm:$0xf]
  %v471 = vld [vmem:[%s2 + $0x220] sm:$0xf]
  %v472 = vld [vmem:[%s2 + $0x224] sm:$0xf]
  %v473 = vld [vmem:[%s2 + $0x228] sm:$0xf]
  %v474 = vld [vmem:[%s2 + $0x22c] sm:$0xf]
  %v475 = vld [vmem:[%s2 + $0x230] sm:$0xf]
  %v476 = vld [vmem:[%s2 + $0x234] sm:$0xf]
  %v477 = vld [vmem:[%s2 + $0x238] sm:$0xf]
  %v478 = vld [vmem:[%s2 + $0x23c] sm:$0xf]
  %v559 = vunpack.c.l.b16 %v255
  %v560 = vunpack.c.h.b16 %v255
  %v561 = vunpack.c.l.b16 %v256
  %v562 = vunpack.c.h.b16 %v256
  %v563 = vunpack.c.l.b16 %v257
  %v564 = vunpack.c.h.b16 %v257
  %v565 = vunpack.c.l.b16 %v258
  %v566 = vunpack.c.h.b16 %v258
  %v567 = vunpack.c.l.b16 %v259
  %v568 = vunpack.c.l.b16 %v260
  %v569 = vunpack.c.h.b16 %v260
  %v570 = vunpack.c.l.b16 %v261
  %v571 = vunpack.c.h.b16 %v261
  %v572 = vunpack.c.l.b16 %v262
  %v573 = vunpack.c.h.b16 %v262
  %v574 = vunpack.c.l.b16 %v263
  %v575 = vunpack.c.h.b16 %v263
  %v576 = vunpack.c.l.b16 %v264
  %v577 = vunpack.c.l.b16 %v265
  %v578 = vunpack.c.h.b16 %v265
  %v579 = vunpack.c.l.b16 %v266
  %v580 = vunpack.c.h.b16 %v266
  %v581 = vunpack.c.l.b16 %v267
  %v582 = vunpack.c.h.b16 %v267
  %v583 = vunpack.c.l.b16 %v268
  %v584 = vunpack.c.h.b16 %v268
  %v585 = vunpack.c.l.b16 %v269
  %v586 = vunpack.c.l.b16 %v270
  %v587 = vunpack.c.h.b16 %v270
  %v588 = vunpack.c.l.b16 %v271
  %v589 = vunpack.c.h.b16 %v271
  %v590 = vunpack.c.l.b16 %v272
  %v591 = vunpack.c.h.b16 %v272
  %v592 = vunpack.c.l.b16 %v273
  %v593 = vunpack.c.h.b16 %v273
  %v594 = vunpack.c.l.b16 %v274
  %v595 = vunpack.c.l.b16 %v275
  %v596 = vunpack.c.h.b16 %v275
  %v597 = vunpack.c.l.b16 %v276
  %v598 = vunpack.c.h.b16 %v276
  %v599 = vunpack.c.l.b16 %v277
  %v600 = vunpack.c.h.b16 %v277
  %v601 = vunpack.c.l.b16 %v278
  %v602 = vunpack.c.h.b16 %v278
  %v603 = vunpack.c.l.b16 %v279
  %v604 = vunpack.c.l.b16 %v280
  %v605 = vunpack.c.h.b16 %v280
  %v606 = vunpack.c.l.b16 %v281
  %v607 = vunpack.c.h.b16 %v281
  %v608 = vunpack.c.l.b16 %v282
  %v609 = vunpack.c.h.b16 %v282
  %v610 = vunpack.c.l.b16 %v283
  %v611 = vunpack.c.h.b16 %v283
  %v612 = vunpack.c.l.b16 %v284
  %v613 = vunpack.c.l.b16 %v285
  %v614 = vunpack.c.h.b16 %v285
  %v615 = vunpack.c.l.b16 %v286
  %v616 = vunpack.c.h.b16 %v286
  %v617 = vunpack.c.l.b16 %v287
  %v618 = vunpack.c.h.b16 %v287
  %v619 = vunpack.c.l.b16 %v288
  %v620 = vunpack.c.h.b16 %v288
  %v621 = vunpack.c.l.b16 %v289
  %v622 = vunpack.c.l.b16 %v290
  %v623 = vunpack.c.h.b16 %v290
  %v624 = vunpack.c.l.b16 %v291
  %v625 = vunpack.c.h.b16 %v291
  %v626 = vunpack.c.l.b16 %v292
  %v627 = vunpack.c.h.b16 %v292
  %v628 = vunpack.c.l.b16 %v293
  %v629 = vunpack.c.h.b16 %v293
  %v630 = vunpack.c.l.b16 %v294
  %v631 = vunpack.c.l.b16 %v295
  %v632 = vunpack.c.h.b16 %v295
  %v633 = vunpack.c.l.b16 %v296
  %v634 = vunpack.c.h.b16 %v296
  %v635 = vunpack.c.l.b16 %v297
  %v636 = vunpack.c.h.b16 %v297
  %v637 = vunpack.c.l.b16 %v298
  %v638 = vunpack.c.h.b16 %v298
  %v639 = vunpack.c.l.b16 %v299
  %v640 = vunpack.c.l.b16 %v300
  %v641 = vunpack.c.h.b16 %v300
  %v642 = vunpack.c.l.b16 %v301
  %v643 = vunpack.c.h.b16 %v301
  %v644 = vunpack.c.l.b16 %v302
  %v645 = vunpack.c.h.b16 %v302
  %v646 = vunpack.c.l.b16 %v303
  %v647 = vunpack.c.h.b16 %v303
  %v648 = vunpack.c.l.b16 %v304
  %v649 = vunpack.c.l.b16 %v305
  %v650 = vunpack.c.h.b16 %v305
  %v651 = vunpack.c.l.b16 %v306
  %v652 = vunpack.c.h.b16 %v306
  %v653 = vunpack.c.l.b16 %v307
  %v654 = vunpack.c.h.b16 %v307
  %v655 = vunpack.c.l.b16 %v308
  %v656 = vunpack.c.h.b16 %v308
  %v657 = vunpack.c.l.b16 %v309
  %v658 = vunpack.c.l.b16 %v310
  %v659 = vunpack.c.h.b16 %v310
  %v660 = vunpack.c.l.b16 %v311
  %v661 = vunpack.c.h.b16 %v311
  %v662 = vunpack.c.l.b16 %v312
  %v663 = vunpack.c.h.b16 %v312
  %v664 = vunpack.c.l.b16 %v313
  %v665 = vunpack.c.h.b16 %v313
  %v666 = vunpack.c.l.b16 %v314
  %v667 = vunpack.c.l.b16 %v315
  %v668 = vunpack.c.h.b16 %v315
  %v669 = vunpack.c.l.b16 %v316
  %v670 = vunpack.c.h.b16 %v316
  %v671 = vunpack.c.l.b16 %v317
  %v672 = vunpack.c.h.b16 %v317
  %v673 = vunpack.c.l.b16 %v318
  %v674 = vunpack.c.h.b16 %v318
  %v675 = vunpack.c.l.b16 %v319
  %v676 = vunpack.c.l.b16 %v320
  %v677 = vunpack.c.h.b16 %v320
  %v678 = vunpack.c.l.b16 %v321
  %v679 = vunpack.c.h.b16 %v321
  %v680 = vunpack.c.l.b16 %v322
  %v681 = vunpack.c.h.b16 %v322
  %v682 = vunpack.c.l.b16 %v323
  %v683 = vunpack.c.h.b16 %v323
  %v684 = vunpack.c.l.b16 %v324
  %v685 = vunpack.c.l.b16 %v325
  %v686 = vunpack.c.h.b16 %v325
  %v687 = vunpack.c.l.b16 %v326
  %v688 = vunpack.c.h.b16 %v326
  %v689 = vunpack.c.l.b16 %v327
  %v690 = vunpack.c.h.b16 %v327
  %v691 = vunpack.c.l.b16 %v328
  %v692 = vunpack.c.h.b16 %v328
  %v693 = vunpack.c.l.b16 %v329
  %v694 = vunpack.c.l.b16 %v330
  %v695 = vunpack.c.h.b16 %v330
  %v696 = vunpack.c.l.b16 %v331
  %v697 = vunpack.c.h.b16 %v331
  %v698 = vunpack.c.l.b16 %v332
  %v699 = vunpack.c.h.b16 %v332
  %v700 = vunpack.c.l.b16 %v333
  %v701 = vunpack.c.h.b16 %v333
  %v702 = vunpack.c.l.b16 %v334
  %v703 = vpack.c.b16 %v568, %v559
  %v704 = vpack.c.b16 %v569, %v560
  %v705 = vpack.c.b16 %v570, %v561
  %v706 = vpack.c.b16 %v571, %v562
  %v707 = vpack.c.b16 %v572, %v563
  %v708 = vpack.c.b16 %v573, %v564
  %v709 = vpack.c.b16 %v574, %v565
  %v710 = vpack.c.b16 %v575, %v566
  %v711 = vpack.c.b16 %v576, %v567
  %v712 = vpack.c.b16 %v586, %v577
  %v713 = vpack.c.b16 %v587, %v578
  %v714 = vpack.c.b16 %v588, %v579
  %v715 = vpack.c.b16 %v589, %v580
  %v716 = vpack.c.b16 %v590, %v581
  %v717 = vpack.c.b16 %v591, %v582
  %v718 = vpack.c.b16 %v592, %v583
  %v719 = vpack.c.b16 %v593, %v584
  %v720 = vpack.c.b16 %v594, %v585
  %v721 = vpack.c.b16 %v604, %v595
  %v722 = vpack.c.b16 %v605, %v596
  %v723 = vpack.c.b16 %v606, %v597
  %v724 = vpack.c.b16 %v607, %v598
  %v725 = vpack.c.b16 %v608, %v599
  %v726 = vpack.c.b16 %v609, %v600
  %v727 = vpack.c.b16 %v610, %v601
  %v728 = vpack.c.b16 %v611, %v602
  %v729 = vpack.c.b16 %v612, %v603
  %v730 = vpack.c.b16 %v622, %v613
  %v731 = vpack.c.b16 %v623, %v614
  %v732 = vpack.c.b16 %v624, %v615
  %v733 = vpack.c.b16 %v625, %v616
  %v734 = vpack.c.b16 %v626, %v617
  %v735 = vpack.c.b16 %v627, %v618
  %v736 = vpack.c.b16 %v628, %v619
  %v737 = vpack.c.b16 %v629, %v620
  %v738 = vpack.c.b16 %v630, %v621
  %v739 = vpack.c.b16 %v640, %v631
  %v740 = vpack.c.b16 %v641, %v632
  %v741 = vpack.c.b16 %v642, %v633
  %v742 = vpack.c.b16 %v643, %v634
  %v743 = vpack.c.b16 %v644, %v635
  %v744 = vpack.c.b16 %v645, %v636
  %v745 = vpack.c.b16 %v646, %v637
  %v746 = vpack.c.b16 %v647, %v638
  %v747 = vpack.c.b16 %v648, %v639
  %v748 = vpack.c.b16 %v658, %v649
  %v749 = vpack.c.b16 %v659, %v650
  %v750 = vpack.c.b16 %v660, %v651
  %v751 = vpack.c.b16 %v661, %v652
  %v752 = vpack.c.b16 %v662, %v653
  %v753 = vpack.c.b16 %v663, %v654
  %v754 = vpack.c.b16 %v664, %v655
  %v755 = vpack.c.b16 %v665, %v656
  %v756 = vpack.c.b16 %v666, %v657
  %v757 = vpack.c.b16 %v676, %v667
  %v758 = vpack.c.b16 %v677, %v668
  %v759 = vpack.c.b16 %v678, %v669
  %v760 = vpack.c.b16 %v679, %v670
  %v761 = vpack.c.b16 %v680, %v671
  %v762 = vpack.c.b16 %v681, %v672
  %v763 = vpack.c.b16 %v682, %v673
  %v764 = vpack.c.b16 %v683, %v674
  %v765 = vpack.c.b16 %v684, %v675
  %v766 = vpack.c.b16 %v694, %v685
  %v767 = vpack.c.b16 %v695, %v686
  %v768 = vpack.c.b16 %v696, %v687
  %v769 = vpack.c.b16 %v697, %v688
  %v770 = vpack.c.b16 %v698, %v689
  %v771 = vpack.c.b16 %v699, %v690
  %v772 = vpack.c.b16 %v700, %v691
  %v773 = vpack.c.b16 %v701, %v692
  %v774 = vpack.c.b16 %v702, %v693
  %v991 = vunpack.c.l.b16 %v335
  %v992 = vunpack.c.l.b16 %v336
  %v993 = vunpack.c.l.b16 %v337
  %v994 = vunpack.c.l.b16 %v338
  %v995 = vunpack.c.l.b16 %v339
  %v996 = vunpack.c.l.b16 %v340
  %v997 = vunpack.c.l.b16 %v341
  %v998 = vunpack.c.l.b16 %v342
  %v999 = vunpack.c.l.b16 %v343
  %v1000 = vunpack.c.l.b16 %v344
  %v1001 = vunpack.c.l.b16 %v345
  %v1002 = vunpack.c.l.b16 %v346
  %v1003 = vunpack.c.l.b16 %v347
  %v1004 = vunpack.c.l.b16 %v348
  %v1005 = vunpack.c.l.b16 %v349
  %v1006 = vunpack.c.l.b16 %v350
  %v1007 = vunpack.c.l.b16 %v351
  %v1008 = vunpack.c.l.b16 %v352
  %v1009 = vunpack.c.l.b16 %v353
  %v1010 = vunpack.c.l.b16 %v354
  %v1011 = vunpack.c.l.b16 %v355
  %v1012 = vunpack.c.l.b16 %v356
  %v1013 = vunpack.c.l.b16 %v357
  %v1014 = vunpack.c.l.b16 %v358
  %v1015 = vunpack.c.l.b16 %v359
  %v1016 = vunpack.c.l.b16 %v360
  %v1017 = vunpack.c.l.b16 %v361
  %v1018 = vunpack.c.l.b16 %v362
  %v1019 = vunpack.c.l.b16 %v363
  %v1020 = vunpack.c.l.b16 %v364
  %v1021 = vunpack.c.l.b16 %v365
  %v1022 = vunpack.c.l.b16 %v366
  %v1023 = vunpack.c.l.b16 %v367
  %v1024 = vunpack.c.l.b16 %v368
  %v1025 = vunpack.c.l.b16 %v369
  %v1026 = vunpack.c.l.b16 %v370
  %v1027 = vunpack.c.l.b16 %v371
  %v1028 = vunpack.c.l.b16 %v372
  %v1029 = vunpack.c.l.b16 %v373
  %v1030 = vunpack.c.l.b16 %v374
  %v1031 = vunpack.c.l.b16 %v375
  %v1032 = vunpack.c.l.b16 %v376
  %v1033 = vunpack.c.l.b16 %v377
  %v1034 = vunpack.c.l.b16 %v378
  %v1035 = vunpack.c.l.b16 %v379
  %v1036 = vunpack.c.l.b16 %v380
  %v1037 = vunpack.c.l.b16 %v381
  %v1038 = vunpack.c.l.b16 %v382
  %v1039 = vunpack.c.l.b16 %v383
  %v1040 = vunpack.c.l.b16 %v384
  %v1041 = vunpack.c.l.b16 %v385
  %v1042 = vunpack.c.l.b16 %v386
  %v1043 = vunpack.c.l.b16 %v387
  %v1044 = vunpack.c.l.b16 %v388
  %v1045 = vunpack.c.l.b16 %v389
  %v1046 = vunpack.c.l.b16 %v390
  %v1047 = vunpack.c.l.b16 %v391
  %v1048 = vunpack.c.l.b16 %v392
  %v1049 = vunpack.c.l.b16 %v393
  %v1050 = vunpack.c.l.b16 %v394
  %v1051 = vunpack.c.l.b16 %v395
  %v1052 = vunpack.c.l.b16 %v396
  %v1053 = vunpack.c.l.b16 %v397
  %v1054 = vunpack.c.l.b16 %v398
  %v1055 = vunpack.c.l.b16 %v399
  %v1056 = vunpack.c.l.b16 %v400
  %v1057 = vunpack.c.l.b16 %v401
  %v1058 = vunpack.c.l.b16 %v402
  %v1059 = vunpack.c.l.b16 %v403
  %v1060 = vunpack.c.l.b16 %v404
  %v1061 = vunpack.c.l.b16 %v405
  %v1062 = vunpack.c.l.b16 %v406
  %v1063 = vunpack.c.l.b16 %v407
  %v1064 = vunpack.c.l.b16 %v408
  %v1065 = vunpack.c.l.b16 %v409
  %v1066 = vunpack.c.l.b16 %v410
  %v1067 = vunpack.c.l.b16 %v411
  %v1068 = vunpack.c.l.b16 %v412
  %v1069 = vunpack.c.l.b16 %v413
  %v1070 = vunpack.c.l.b16 %v414
  %v1071 = vunpack.c.l.b16 %v415
  %v1072 = vunpack.c.l.b16 %v416
  %v1073 = vunpack.c.l.b16 %v417
  %v1074 = vunpack.c.l.b16 %v418
  %v1075 = vunpack.c.l.b16 %v419
  %v1076 = vunpack.c.l.b16 %v420
  %v1077 = vunpack.c.l.b16 %v421
  %v1078 = vunpack.c.l.b16 %v422
  %v1079 = vunpack.c.l.b16 %v423
  %v1080 = vunpack.c.l.b16 %v424
  %v1081 = vunpack.c.l.b16 %v425
  %v1082 = vunpack.c.l.b16 %v426
  %v1083 = vunpack.c.l.b16 %v427
  %v1084 = vunpack.c.l.b16 %v428
  %v1085 = vunpack.c.l.b16 %v429
  %v1086 = vunpack.c.l.b16 %v430
  %v1087 = vunpack.c.l.b16 %v431
  %v1088 = vunpack.c.l.b16 %v432
  %v1089 = vunpack.c.l.b16 %v433
  %v1090 = vunpack.c.l.b16 %v434
  %v1091 = vunpack.c.l.b16 %v435
  %v1092 = vunpack.c.l.b16 %v436
  %v1093 = vunpack.c.l.b16 %v437
  %v1094 = vunpack.c.l.b16 %v438
  %v1095 = vunpack.c.l.b16 %v439
  %v1096 = vunpack.c.l.b16 %v440
  %v1097 = vunpack.c.l.b16 %v441
  %v1098 = vunpack.c.l.b16 %v442
  %v1099 = vunpack.c.l.b16 %v443
  %v1100 = vunpack.c.l.b16 %v444
  %v1101 = vunpack.c.l.b16 %v445
  %v1102 = vunpack.c.l.b16 %v446
  %v1103 = vunpack.c.l.b16 %v447
  %v1104 = vunpack.c.l.b16 %v448
  %v1105 = vunpack.c.l.b16 %v449
  %v1106 = vunpack.c.l.b16 %v450
  %v1107 = vunpack.c.l.b16 %v451
  %v1108 = vunpack.c.l.b16 %v452
  %v1109 = vunpack.c.l.b16 %v453
  %v1110 = vunpack.c.l.b16 %v454
  %v1111 = vunpack.c.l.b16 %v455
  %v1112 = vunpack.c.l.b16 %v456
  %v1113 = vunpack.c.l.b16 %v457
  %v1114 = vunpack.c.l.b16 %v458
  %v1115 = vunpack.c.l.b16 %v459
  %v1116 = vunpack.c.l.b16 %v460
  %v1117 = vunpack.c.l.b16 %v461
  %v1118 = vunpack.c.l.b16 %v462
  %v1119 = vunpack.c.l.b16 %v463
  %v1120 = vunpack.c.l.b16 %v464
  %v1121 = vunpack.c.l.b16 %v465
  %v1122 = vunpack.c.l.b16 %v466
  %v1123 = vunpack.c.l.b16 %v467
  %v1124 = vunpack.c.l.b16 %v468
  %v1125 = vunpack.c.l.b16 %v469
  %v1126 = vunpack.c.l.b16 %v470
  %v1127 = vunpack.c.l.b16 %v471
  %v1128 = vunpack.c.l.b16 %v472
  %v1129 = vunpack.c.l.b16 %v473
  %v1130 = vunpack.c.l.b16 %v474
  %v1131 = vunpack.c.l.b16 %v475
  %v1132 = vunpack.c.l.b16 %v476
  %v1133 = vunpack.c.l.b16 %v477
  %v1134 = vunpack.c.l.b16 %v478
  %v1135 = vpack.c.b16 %v992, %v991
  %v1136 = vpack.c.b16 %v994, %v993
  %v1137 = vpack.c.b16 %v996, %v995
  %v1138 = vpack.c.b16 %v998, %v997
  %v1139 = vpack.c.b16 %v1000, %v999
  %v1140 = vpack.c.b16 %v1002, %v1001
  %v1141 = vpack.c.b16 %v1004, %v1003
  %v1142 = vpack.c.b16 %v1006, %v1005
  %v1143 = vpack.c.b16 %v1008, %v1007
  %v1144 = vpack.c.b16 %v1010, %v1009
  %v1145 = vpack.c.b16 %v1012, %v1011
  %v1146 = vpack.c.b16 %v1014, %v1013
  %v1147 = vpack.c.b16 %v1016, %v1015
  %v1148 = vpack.c.b16 %v1018, %v1017
  %v1149 = vpack.c.b16 %v1020, %v1019
  %v1150 = vpack.c.b16 %v1022, %v1021
  %v1151 = vpack.c.b16 %v1024, %v1023
  %v1152 = vpack.c.b16 %v1026, %v1025
  %v1153 = vpack.c.b16 %v1028, %v1027
  %v1154 = vpack.c.b16 %v1030, %v1029
  %v1155 = vpack.c.b16 %v1032, %v1031
  %v1156 = vpack.c.b16 %v1034, %v1033
  %v1157 = vpack.c.b16 %v1036, %v1035
  %v1158 = vpack.c.b16 %v1038, %v1037
  %v1159 = vpack.c.b16 %v1040, %v1039
  %v1160 = vpack.c.b16 %v1042, %v1041
  %v1161 = vpack.c.b16 %v1044, %v1043
  %v1162 = vpack.c.b16 %v1046, %v1045
  %v1163 = vpack.c.b16 %v1048, %v1047
  %v1164 = vpack.c.b16 %v1050, %v1049
  %v1165 = vpack.c.b16 %v1052, %v1051
  %v1166 = vpack.c.b16 %v1054, %v1053
  %v1167 = vpack.c.b16 %v1056, %v1055
  %v1168 = vpack.c.b16 %v1058, %v1057
  %v1169 = vpack.c.b16 %v1060, %v1059
  %v1170 = vpack.c.b16 %v1062, %v1061
  %v1171 = vpack.c.b16 %v1064, %v1063
  %v1172 = vpack.c.b16 %v1066, %v1065
  %v1173 = vpack.c.b16 %v1068, %v1067
  %v1174 = vpack.c.b16 %v1070, %v1069
  %v1175 = vpack.c.b16 %v1072, %v1071
  %v1176 = vpack.c.b16 %v1074, %v1073
  %v1177 = vpack.c.b16 %v1076, %v1075
  %v1178 = vpack.c.b16 %v1078, %v1077
  %v1179 = vpack.c.b16 %v1080, %v1079
  %v1180 = vpack.c.b16 %v1082, %v1081
  %v1181 = vpack.c.b16 %v1084, %v1083
  %v1182 = vpack.c.b16 %v1086, %v1085
  %v1183 = vpack.c.b16 %v1088, %v1087
  %v1184 = vpack.c.b16 %v1090, %v1089
  %v1185 = vpack.c.b16 %v1092, %v1091
  %v1186 = vpack.c.b16 %v1094, %v1093
  %v1187 = vpack.c.b16 %v1096, %v1095
  %v1188 = vpack.c.b16 %v1098, %v1097
  %v1189 = vpack.c.b16 %v1100, %v1099
  %v1190 = vpack.c.b16 %v1102, %v1101
  %v1191 = vpack.c.b16 %v1104, %v1103
  %v1192 = vpack.c.b16 %v1106, %v1105
  %v1193 = vpack.c.b16 %v1108, %v1107
  %v1194 = vpack.c.b16 %v1110, %v1109
  %v1195 = vpack.c.b16 %v1112, %v1111
  %v1196 = vpack.c.b16 %v1114, %v1113
  %v1197 = vpack.c.b16 %v1116, %v1115
  %v1198 = vpack.c.b16 %v1118, %v1117
  %v1199 = vpack.c.b16 %v1120, %v1119
  %v1200 = vpack.c.b16 %v1122, %v1121
  %v1201 = vpack.c.b16 %v1124, %v1123
  %v1202 = vpack.c.b16 %v1126, %v1125
  %v1203 = vpack.c.b16 %v1128, %v1127
  %v1204 = vpack.c.b16 %v1130, %v1129
  %v1205 = vpack.c.b16 %v1132, %v1131
  %v1206 = vpack.c.b16 %v1134, %v1133
  %1279 = vmatprep.subr.bf16.mxu0 0
  %1280 = vmatpush1.bf16.msra.mxu0 %v1135
  %1281 = vmatprep.subr.bf16.mxu0 0
  %1282 = vmatpush1.bf16.msra.mxu0 %v1136
  %1283 = vmatprep.subr.bf16.mxu0 0
  %1284 = vmatpush1.bf16.msra.mxu0 %v1137
  %1285 = vmatprep.subr.bf16.mxu0 0
  %1286 = vmatpush1.bf16.msra.mxu0 %v1138
  %1287 = vmatprep.subr.bf16.mxu0 0
  %1288 = vmatpush1.bf16.msra.mxu0 %v1139
  %1289 = vmatprep.subr.bf16.mxu0 0
  %1290 = vmatpush1.bf16.msra.mxu0 %v1140
  %1291 = vmatprep.subr.bf16.mxu0 0
  %1292 = vmatpush1.bf16.msra.mxu0 %v1141
  %1293 = vmatprep.subr.bf16.mxu0 0
  %1294 = vmatpush1.bf16.msra.mxu0 %v1142
  %1295 = vmatprep.subr.bf16.mxu0 0
  %1296 = vmatpush1.bf16.msra.mxu0 %v1143
  %1297 = vmatprep.subr.bf16.mxu0 0
  %1298 = vmatpush1.bf16.msra.mxu0 %v1144
  %1299 = vmatprep.subr.bf16.mxu0 0
  %1300 = vmatpush1.bf16.msra.mxu0 %v1145
  %1301 = vmatprep.subr.bf16.mxu0 0
  %1302 = vmatpush1.bf16.msra.mxu0 %v1146
  %1303 = vmatprep.subr.bf16.mxu0 0
  %1304 = vmatpush1.bf16.msra.mxu0 %v1147
  %1305 = vmatprep.subr.bf16.mxu0 0
  %1306 = vmatpush1.bf16.msra.mxu0 %v1148
  %1307 = vmatprep.subr.bf16.mxu0 0
  %1308 = vmatpush1.bf16.msra.mxu0 %v1149
  %1309 = vmatprep.subr.bf16.mxu0 0
  %1310 = vmatpush1.bf16.msra.mxu0 %v1150
  %1311 = vmatprep.mubr.bf16.mxu0 %v704
  %1312 = vmatmul.mubr.bf16.gmra.mrb[0].mxu0 %v703
  %v1313 = vpop.f32.mrb[0].mxu0
  %v1314 = vadd.f32 0.0, %v1313
  %v1315 = vpop.f32.mrb[0].mxu0
  %v1316 = vpop.f32.mrb[0].mxu0
  %v1317 = vadd.f32 0.0, %v1316
  %v1318 = vpop.f32.mrb[0].mxu0
  %1319 = vmatprep.mubr.bf16.mxu0 %v713
  %1320 = vmatmul.mubr.bf16.gmra.mrb[0].mxu0 %v712
  %v1321 = vpop.f32.mrb[0].mxu0
  %v1322 = vadd.f32 0.0, %v1321
  %v1323 = vpop.f32.mrb[0].mxu0
  %v1324 = vpop.f32.mrb[0].mxu0
  %v1325 = vadd.f32 0.0, %v1324
  %v1326 = vpop.f32.mrb[0].mxu0
  %1327 = vmatprep.mubr.bf16.mxu0 %v722
  %1328 = vmatmul.mubr.bf16.gmra.mrb[0].mxu0 %v721
  %v1329 = vpop.f32.mrb[0].mxu0
  %v1330 = vadd.f32 0.0, %v1329
  %v1331 = vpop.f32.mrb[0].mxu0
  %v1332 = vpop.f32.mrb[0].mxu0
  %v1333 = vadd.f32 0.0, %v1332
  %v1334 = vpop.f32.mrb[0].mxu0
  %1335 = vmatprep.mubr.bf16.mxu0 %v731
  %1336 = vmatmul.mubr.bf16.gmra.mrb[0].mxu0 %v730
  %v1337 = vpop.f32.mrb[0].mxu0
  %v1338 = vadd.f32 0.0, %v1337
  %v1339 = vpop.f32.mrb[0].mxu0
  %v1340 = vpop.f32.mrb[0].mxu0
  %v1341 = vadd.f32 0.0, %v1340
  %v1342 = vpop.f32.mrb[0].mxu0
  %1343 = vmatprep.mubr.bf16.mxu0 %v740
  %1344 = vmatmul.mubr.bf16.gmra.mrb[0].mxu0 %v739
  %v1345 = vpop.f32.mrb[0].mxu0
  %v1346 = vadd.f32 0.0, %v1345
  %v1347 = vpop.f32.mrb[0].mxu0
  %v1348 = vpop.f32.mrb[0].mxu0
  %v1349 = vadd.f32 0.0, %v1348
  %v1350 = vpop.f32.mrb[0].mxu0
  %1351 = vmatprep.mubr.bf16.mxu0 %v749
  %1352 = vmatmul.mubr.bf16.gmra.mrb[0].mxu0 %v748
  %v1353 = vpop.f32.mrb[0].mxu0
  %v1354 = vadd.f32 0.0, %v1353
  %v1355 = vpop.f32.mrb[0].mxu0
  %v1356 = vpop.f32.mrb[0].mxu0
  %v1357 = vadd.f32 0.0, %v1356
  %v1358 = vpop.f32.mrb[0].mxu0
  %1359 = vmatprep.mubr.bf16.mxu0 %v758
  %1360 = vmatmul.mubr.bf16.gmra.mrb[0].mxu0 %v757
  %v1361 = vpop.f32.mrb[0].mxu0
  %v1362 = vadd.f32 0.0, %v1361
  %v1363 = vpop.f32.mrb[0].mxu0
  %v1364 = vpop.f32.mrb[0].mxu0
  %v1365 = vadd.f32 0.0, %v1364
  %v1366 = vpop.f32.mrb[0].mxu0
  %1367 = vmatprep.mubr.bf16.mxu0 %v767
  %1368 = vmatmul.mubr.bf16.gmra.mrb[0].mxu0 %v766
  %v1369 = vpop.f32.mrb[0].mxu0
  %v1370 = vadd.f32 0.0, %v1369
  %v1371 = vpop.f32.mrb[0].mxu0
  %v1372 = vpop.f32.mrb[0].mxu0
  %v1373 = vadd.f32 0.0, %v1372
  %v1374 = vpop.f32.mrb[0].mxu0
  %1375 = vdwg.mxu0
  %1376 = vmatprep.subr.bf16.mxu0 0
  %1377 = vmatpush1.bf16.msra.mxu0 %v1151
  %1378 = vmatprep.subr.bf16.mxu0 0
  %1379 = vmatpush1.bf16.msra.mxu0 %v1152
  %1380 = vmatprep.subr.bf16.mxu0 0
  %1381 = vmatpush1.bf16.msra.mxu0 %v1153
  %1382 = vmatprep.subr.bf16.mxu0 0
  %1383 = vmatpush1.bf16.msra.mxu0 %v1154
  %1384 = vmatprep.subr.bf16.mxu0 0
  %1385 = vmatpush1.bf16.msra.mxu0 %v1155
  %1386 = vmatprep.subr.bf16.mxu0 0
  %1387 = vmatpush1.bf16.msra.mxu0 %v1156
  %1388 = vmatprep.subr.bf16.mxu0 0
  %1389 = vmatpush1.bf16.msra.mxu0 %v1157
  %1390 = vmatprep.subr.bf16.mxu0 0
  %1391 = vmatpush1.bf16.msra.mxu0 %v1158
  %1392 = vmatprep.subr.bf16.mxu0 0
  %1393 = vmatpush1.bf16.msra.mxu0 %v1159
  %1394 = vmatprep.subr.bf16.mxu0 0
  %1395 = vmatpush1.bf16.msra.mxu0 %v1160
  %1396 = vmatprep.subr.bf16.mxu0 0
  %1397 = vmatpush1.bf16.msra.mxu0 %v1161
  %1398 = vmatprep.subr.bf16.mxu0 0
  %1399 = vmatpush1.bf16.msra.mxu0 %v1162
  %1400 = vmatprep.subr.bf16.mxu0 0
  %1401 = vmatpush1.bf16.msra.mxu0 %v1163
  %1402 = vmatprep.subr.bf16.mxu0 0
  %1403 = vmatpush1.bf16.msra.mxu0 %v1164
  %1404 = vmatprep.subr.bf16.mxu0 0
  %1405 = vmatpush1.bf16.msra.mxu0 %v1165
  %1406 = vmatprep.subr.bf16.mxu0 0
  %1407 = vmatpush1.bf16.msra.mxu0 %v1166
  %1408 = vmatprep.mubr.bf16.mxu0 %v706
  %1409 = vmatmul.mubr.bf16.gmra.mrb[0].mxu0 %v705
  %v1410 = vpop.f32.mrb[0].mxu0
  %v1411 = vadd.f32 %v1314, %v1410
  %v1412 = vpop.f32.mrb[0].mxu0
  %v1413 = vpop.f32.mrb[0].mxu0
  %v1414 = vadd.f32 %v1317, %v1413
  %v1415 = vpop.f32.mrb[0].mxu0
  %1416 = vmatprep.mubr.bf16.mxu0 %v715
  %1417 = vmatmul.mubr.bf16.gmra.mrb[0].mxu0 %v714
  %v1418 = vpop.f32.mrb[0].mxu0
  %v1419 = vadd.f32 %v1322, %v1418
  %v1420 = vpop.f32.mrb[0].mxu0
  %v1421 = vpop.f32.mrb[0].mxu0
  %v1422 = vadd.f32 %v1325, %v1421
  %v1423 = vpop.f32.mrb[0].mxu0
  %1424 = vmatprep.mubr.bf16.mxu0 %v724
  %1425 = vmatmul.mubr.bf16.gmra.mrb[0].mxu0 %v723
  %v1426 = vpop.f32.mrb[0].mxu0
  %v1427 = vadd.f32 %v1330, %v1426
  %v1428 = vpop.f32.mrb[0].mxu0
  %v1429 = vpop.f32.mrb[0].mxu0
  %v1430 = vadd.f32 %v1333, %v1429
  %v1431 = vpop.f32.mrb[0].mxu0
  %1432 = vmatprep.mubr.bf16.mxu0 %v733
  %1433 = vmatmul.mubr.bf16.gmra.mrb[0].mxu0 %v732
  %v1434 = vpop.f32.mrb[0].mxu0
  %v1435 = vadd.f32 %v1338, %v1434
  %v1436 = vpop.f32.mrb[0].mxu0
  %v1437 = vpop.f32.mrb[0].mxu0
  %v1438 = vadd.f32 %v1341, %v1437
  %v1439 = vpop.f32.mrb[0].mxu0
  %1440 = vmatprep.mubr.bf16.mxu0 %v742
  %1441 = vmatmul.mubr.bf16.gmra.mrb[0].mxu0 %v741
  %v1442 = vpop.f32.mrb[0].mxu0
  %v1443 = vadd.f32 %v1346, %v1442
  %v1444 = vpop.f32.mrb[0].mxu0
  %v1445 = vpop.f32.mrb[0].mxu0
  %v1446 = vadd.f32 %v1349, %v1445
  %v1447 = vpop.f32.mrb[0].mxu0
  %1448 = vmatprep.mubr.bf16.mxu0 %v751
  %1449 = vmatmul.mubr.bf16.gmra.mrb[0].mxu0 %v750
  %v1450 = vpop.f32.mrb[0].mxu0
  %v1451 = vadd.f32 %v1354, %v1450
  %v1452 = vpop.f32.mrb[0].mxu0
  %v1453 = vpop.f32.mrb[0].mxu0
  %v1454 = vadd.f32 %v1357, %v1453
  %v1455 = vpop.f32.mrb[0].mxu0
  %1456 = vmatprep.mubr.bf16.mxu0 %v760
  %1457 = vmatmul.mubr.bf16.gmra.mrb[0].mxu0 %v759
  %v1458 = vpop.f32.mrb[0].mxu0
  %v1459 = vadd.f32 %v1362, %v1458
  %v1460 = vpop.f32.mrb[0].mxu0
  %v1461 = vpop.f32.mrb[0].mxu0
  %v1462 = vadd.f32 %v1365, %v1461
  %v1463 = vpop.f32.mrb[0].mxu0
  %1464 = vmatprep.mubr.bf16.mxu0 %v769
  %1465 = vmatmul.mubr.bf16.gmra.mrb[0].mxu0 %v768
  %v1466 = vpop.f32.mrb[0].mxu0
  %v1467 = vadd.f32 %v1370, %v1466
  %v1468 = vpop.f32.mrb[0].mxu0
  %v1469 = vpop.f32.mrb[0].mxu0
  %v1470 = vadd.f32 %v1373, %v1469
  %v1471 = vpop.f32.mrb[0].mxu0
  %1472 = vdwg.mxu0
  %1473 = vmatprep.subr.bf16.mxu0 0
  %1474 = vmatpush1.bf16.msra.mxu0 %v1167
  %1475 = vmatprep.subr.bf16.mxu0 0
  %1476 = vmatpush1.bf16.msra.mxu0 %v1168
  %1477 = vmatprep.subr.bf16.mxu0 0
  %1478 = vmatpush1.bf16.msra.mxu0 %v1169
  %1479 = vmatprep.subr.bf16.mxu0 0
  %1480 = vmatpush1.bf16.msra.mxu0 %v1170
  %1481 = vmatprep.subr.bf16.mxu0 0
  %1482 = vmatpush1.bf16.msra.mxu0 %v1171
  %1483 = vmatprep.subr.bf16.mxu0 0
  %1484 = vmatpush1.bf16.msra.mxu0 %v1172
  %1485 = vmatprep.subr.bf16.mxu0 0
  %1486 = vmatpush1.bf16.msra.mxu0 %v1173
  %1487 = vmatprep.subr.bf16.mxu0 0
  %1488 = vmatpush1.bf16.msra.mxu0 %v1174
  %1489 = vmatprep.subr.bf16.mxu0 0
  %1490 = vmatpush1.bf16.msra.mxu0 %v1175
  %1491 = vmatprep.subr.bf16.mxu0 0
  %1492 = vmatpush1.bf16.msra.mxu0 %v1176
  %1493 = vmatprep.subr.bf16.mxu0 0
  %1494 = vmatpush1.bf16.msra.mxu0 %v1177
  %1495 = vmatprep.subr.bf16.mxu0 0
  %1496 = vmatpush1.bf16.msra.mxu0 %v1178
  %1497 = vmatprep.subr.bf16.mxu0 0
  %1498 = vmatpush1.bf16.msra.mxu0 %v1179
  %1499 = vmatprep.subr.bf16.mxu0 0
  %1500 = vmatpush1.bf16.msra.mxu0 %v1180
  %1501 = vmatprep.subr.bf16.mxu0 0
  %1502 = vmatpush1.bf16.msra.mxu0 %v1181
  %1503 = vmatprep.subr.bf16.mxu0 0
  %1504 = vmatpush1.bf16.msra.mxu0 %v1182
  %1505 = vmatprep.mubr.bf16.mxu0 %v708
  %1506 = vmatmul.mubr.bf16.gmra.mrb[0].mxu0 %v707
  %v1507 = vpop.f32.mrb[0].mxu0
  %v1508 = vadd.f32 %v1411, %v1507
  %v1509 = vpop.f32.mrb[0].mxu0
  %v1510 = vpop.f32.mrb[0].mxu0
  %v1511 = vadd.f32 %v1414, %v1510
  %v1512 = vpop.f32.mrb[0].mxu0
  %1513 = vmatprep.mubr.bf16.mxu0 %v717
  %1514 = vmatmul.mubr.bf16.gmra.mrb[0].mxu0 %v716
  %v1515 = vpop.f32.mrb[0].mxu0
  %v1516 = vadd.f32 %v1419, %v1515
  %v1517 = vpop.f32.mrb[0].mxu0
  %v1518 = vpop.f32.mrb[0].mxu0
  %v1519 = vadd.f32 %v1422, %v1518
  %v1520 = vpop.f32.mrb[0].mxu0
  %1521 = vmatprep.mubr.bf16.mxu0 %v726
  %1522 = vmatmul.mubr.bf16.gmra.mrb[0].mxu0 %v725
  %v1523 = vpop.f32.mrb[0].mxu0
  %v1524 = vadd.f32 %v1427, %v1523
  %v1525 = vpop.f32.mrb[0].mxu0
  %v1526 = vpop.f32.mrb[0].mxu0
  %v1527 = vadd.f32 %v1430, %v1526
  %v1528 = vpop.f32.mrb[0].mxu0
  %1529 = vmatprep.mubr.bf16.mxu0 %v735
  %1530 = vmatmul.mubr.bf16.gmra.mrb[0].mxu0 %v734
  %v1531 = vpop.f32.mrb[0].mxu0
  %v1532 = vadd.f32 %v1435, %v1531
  %v1533 = vpop.f32.mrb[0].mxu0
  %v1534 = vpop.f32.mrb[0].mxu0
  %v1535 = vadd.f32 %v1438, %v1534
  %v1536 = vpop.f32.mrb[0].mxu0
  %1537 = vmatprep.mubr.bf16.mxu0 %v744
  %1538 = vmatmul.mubr.bf16.gmra.mrb[0].mxu0 %v743
  %v1539 = vpop.f32.mrb[0].mxu0
  %v1540 = vadd.f32 %v1443, %v1539
  %v1541 = vpop.f32.mrb[0].mxu0
  %v1542 = vpop.f32.mrb[0].mxu0
  %v1543 = vadd.f32 %v1446, %v1542
  %v1544 = vpop.f32.mrb[0].mxu0
  %1545 = vmatprep.mubr.bf16.mxu0 %v753
  %1546 = vmatmul.mubr.bf16.gmra.mrb[0].mxu0 %v752
  %v1547 = vpop.f32.mrb[0].mxu0
  %v1548 = vadd.f32 %v1451, %v1547
  %v1549 = vpop.f32.mrb[0].mxu0
  %v1550 = vpop.f32.mrb[0].mxu0
  %v1551 = vadd.f32 %v1454, %v1550
  %v1552 = vpop.f32.mrb[0].mxu0
  %1553 = vmatprep.mubr.bf16.mxu0 %v762
  %1554 = vmatmul.mubr.bf16.gmra.mrb[0].mxu0 %v761
  %v1555 = vpop.f32.mrb[0].mxu0
  %v1556 = vadd.f32 %v1459, %v1555
  %v1557 = vpop.f32.mrb[0].mxu0
  %v1558 = vpop.f32.mrb[0].mxu0
  %v1559 = vadd.f32 %v1462, %v1558
  %v1560 = vpop.f32.mrb[0].mxu0
  %1561 = vmatprep.mubr.bf16.mxu0 %v771
  %1562 = vmatmul.mubr.bf16.gmra.mrb[0].mxu0 %v770
  %v1563 = vpop.f32.mrb[0].mxu0
  %v1564 = vadd.f32 %v1467, %v1563
  %v1565 = vpop.f32.mrb[0].mxu0
  %v1566 = vpop.f32.mrb[0].mxu0
  %v1567 = vadd.f32 %v1470, %v1566
  %v1568 = vpop.f32.mrb[0].mxu0
  %1569 = vdwg.mxu0
  %1570 = vmatprep.subr.bf16.mxu0 0
  %1571 = vmatpush1.bf16.msra.mxu0 %v1183
  %1572 = vmatprep.subr.bf16.mxu0 0
  %1573 = vmatpush1.bf16.msra.mxu0 %v1184
  %1574 = vmatprep.subr.bf16.mxu0 0
  %1575 = vmatpush1.bf16.msra.mxu0 %v1185
  %1576 = vmatprep.subr.bf16.mxu0 0
  %1577 = vmatpush1.bf16.msra.mxu0 %v1186
  %1578 = vmatprep.subr.bf16.mxu0 0
  %1579 = vmatpush1.bf16.msra.mxu0 %v1187
  %1580 = vmatprep.subr.bf16.mxu0 0
  %1581 = vmatpush1.bf16.msra.mxu0 %v1188
  %1582 = vmatprep.subr.bf16.mxu0 0
  %1583 = vmatpush1.bf16.msra.mxu0 %v1189
  %1584 = vmatprep.subr.bf16.mxu0 0
  %1585 = vmatpush1.bf16.msra.mxu0 %v1190
  %1586 = vmatprep.subr.bf16.mxu0 0
  %1587 = vmatpush1.bf16.msra.mxu0 %v1191
  %1588 = vmatprep.subr.bf16.mxu0 0
  %1589 = vmatpush1.bf16.msra.mxu0 %v1192
  %1590 = vmatprep.subr.bf16.mxu0 0
  %1591 = vmatpush1.bf16.msra.mxu0 %v1193
  %1592 = vmatprep.subr.bf16.mxu0 0
  %1593 = vmatpush1.bf16.msra.mxu0 %v1194
  %1594 = vmatprep.subr.bf16.mxu0 0
  %1595 = vmatpush1.bf16.msra.mxu0 %v1195
  %1596 = vmatprep.subr.bf16.mxu0 0
  %1597 = vmatpush1.bf16.msra.mxu0 %v1196
  %1598 = vmatprep.subr.bf16.mxu0 0
  %1599 = vmatpush1.bf16.msra.mxu0 %v1197
  %1600 = vmatprep.subr.bf16.mxu0 0
  %1601 = vmatpush1.bf16.msra.mxu0 %v1198
  %1602 = vmatprep.mubr.bf16.mxu0 %v710
  %1603 = vmatmul.mubr.bf16.gmra.mrb[0].mxu0 %v709
  %v1604 = vpop.f32.mrb[0].mxu0
  %v1605 = vadd.f32 %v1508, %v1604
  %v1606 = vpop.f32.mrb[0].mxu0
  %v1607 = vpop.f32.mrb[0].mxu0
  %v1608 = vadd.f32 %v1511, %v1607
  %v1609 = vpop.f32.mrb[0].mxu0
  %1610 = vmatprep.mubr.bf16.mxu0 %v719
  %1611 = vmatmul.mubr.bf16.gmra.mrb[0].mxu0 %v718
  %v1612 = vpop.f32.mrb[0].mxu0
  %v1613 = vadd.f32 %v1516, %v1612
  %v1614 = vpop.f32.mrb[0].mxu0
  %v1615 = vpop.f32.mrb[0].mxu0
  %v1616 = vadd.f32 %v1519, %v1615
  %v1617 = vpop.f32.mrb[0].mxu0
  %1618 = vmatprep.mubr.bf16.mxu0 %v728
  %1619 = vmatmul.mubr.bf16.gmra.mrb[0].mxu0 %v727
  %v1620 = vpop.f32.mrb[0].mxu0
  %v1621 = vadd.f32 %v1524, %v1620
  %v1622 = vpop.f32.mrb[0].mxu0
  %v1623 = vpop.f32.mrb[0].mxu0
  %v1624 = vadd.f32 %v1527, %v1623
  %v1625 = vpop.f32.mrb[0].mxu0
  %1626 = vmatprep.mubr.bf16.mxu0 %v737
  %1627 = vmatmul.mubr.bf16.gmra.mrb[0].mxu0 %v736
  %v1628 = vpop.f32.mrb[0].mxu0
  %v1629 = vadd.f32 %v1532, %v1628
  %v1630 = vpop.f32.mrb[0].mxu0
  %v1631 = vpop.f32.mrb[0].mxu0
  %v1632 = vadd.f32 %v1535, %v1631
  %v1633 = vpop.f32.mrb[0].mxu0
  %1634 = vmatprep.mubr.bf16.mxu0 %v746
  %1635 = vmatmul.mubr.bf16.gmra.mrb[0].mxu0 %v745
  %v1636 = vpop.f32.mrb[0].mxu0
  %v1637 = vadd.f32 %v1540, %v1636
  %v1638 = vpop.f32.mrb[0].mxu0
  %v1639 = vpop.f32.mrb[0].mxu0
  %v1640 = vadd.f32 %v1543, %v1639
  %v1641 = vpop.f32.mrb[0].mxu0
  %1642 = vmatprep.mubr.bf16.mxu0 %v755
  %1643 = vmatmul.mubr.bf16.gmra.mrb[0].mxu0 %v754
  %v1644 = vpop.f32.mrb[0].mxu0
  %v1645 = vadd.f32 %v1548, %v1644
  %v1646 = vpop.f32.mrb[0].mxu0
  %v1647 = vpop.f32.mrb[0].mxu0
  %v1648 = vadd.f32 %v1551, %v1647
  %v1649 = vpop.f32.mrb[0].mxu0
  %1650 = vmatprep.mubr.bf16.mxu0 %v764
  %1651 = vmatmul.mubr.bf16.gmra.mrb[0].mxu0 %v763
  %v1652 = vpop.f32.mrb[0].mxu0
  %v1653 = vadd.f32 %v1556, %v1652
  %v1654 = vpop.f32.mrb[0].mxu0
  %v1655 = vpop.f32.mrb[0].mxu0
  %v1656 = vadd.f32 %v1559, %v1655
  %v1657 = vpop.f32.mrb[0].mxu0
  %1658 = vmatprep.mubr.bf16.mxu0 %v773
  %1659 = vmatmul.mubr.bf16.gmra.mrb[0].mxu0 %v772
  %v1660 = vpop.f32.mrb[0].mxu0
  %v1661 = vadd.f32 %v1564, %v1660
  %v1662 = vpop.f32.mrb[0].mxu0
  %v1663 = vpop.f32.mrb[0].mxu0
  %v1664 = vadd.f32 %v1567, %v1663
  %v1665 = vpop.f32.mrb[0].mxu0
  %1666 = vdwg.mxu0
  %1667 = vmatprep.subr.bf16.mxu0 0
  %1668 = vmatpush1.bf16.msra.mxu0 %v1199
  %1669 = vmatprep.subr.bf16.mxu0 0
  %1670 = vmatpush1.bf16.msra.mxu0 %v1200
  %1671 = vmatprep.subr.bf16.mxu0 0
  %1672 = vmatpush1.bf16.msra.mxu0 %v1201
  %1673 = vmatprep.subr.bf16.mxu0 0
  %1674 = vmatpush1.bf16.msra.mxu0 %v1202
  %1675 = vmatprep.subr.bf16.mxu0 0
  %1676 = vmatpush1.bf16.msra.mxu0 %v1203
  %1677 = vmatprep.subr.bf16.mxu0 0
  %1678 = vmatpush1.bf16.msra.mxu0 %v1204
  %1679 = vmatprep.subr.bf16.mxu0 0
  %1680 = vmatpush1.bf16.msra.mxu0 %v1205
  %1681 = vmatprep.subr.bf16.mxu0 0
  %1682 = vmatpush1.bf16.msra.mxu0 %v1206
  %1683 = vmatprep.subr.bf16.mxu0 0
  %1684 = vmatpush1.bf16.msra.mxu0 0
  %1685 = vmatprep.subr.bf16.mxu0 0
  %1686 = vmatpush1.bf16.msra.mxu0 0
  %1687 = vmatprep.subr.bf16.mxu0 0
  %1688 = vmatpush1.bf16.msra.mxu0 0
  %1689 = vmatprep.subr.bf16.mxu0 0
  %1690 = vmatpush1.bf16.msra.mxu0 0
  %1691 = vmatprep.subr.bf16.mxu0 0
  %1692 = vmatpush1.bf16.msra.mxu0 0
  %1693 = vmatprep.subr.bf16.mxu0 0
  %1694 = vmatpush1.bf16.msra.mxu0 0
  %1695 = vmatprep.subr.bf16.mxu0 0
  %1696 = vmatpush1.bf16.msra.mxu0 0
  %1697 = vmatprep.subr.bf16.mxu0 0
  %1698 = vmatpush1.bf16.msra.mxu0 0
  %1699 = vmatprep.mubr.bf16.mxu0 0
  %1700 = vmatmul.mubr.bf16.gmra.mrb[0].mxu0 %v711
  %v1701 = vpop.f32.mrb[0].mxu0
  %v1702 = vadd.f32 %v1605, %v1701
  %v1703 = vpop.f32.mrb[0].mxu0
  %v1704 = vpop.f32.mrb[0].mxu0
  %v1705 = vadd.f32 %v1608, %v1704
  %v1706 = vpop.f32.mrb[0].mxu0
  %1707 = vmatprep.mubr.bf16.mxu0 0
  %1708 = vmatmul.mubr.bf16.gmra.mrb[0].mxu0 %v720
  %v1709 = vpop.f32.mrb[0].mxu0
  %v1710 = vadd.f32 %v1613, %v1709
  %v1711 = vpop.f32.mrb[0].mxu0
  %v1712 = vpop.f32.mrb[0].mxu0
  %v1713 = vadd.f32 %v1616, %v1712
  %v1714 = vpop.f32.mrb[0].mxu0
  %1715 = vmatprep.mubr.bf16.mxu0 0
  %1716 = vmatmul.mubr.bf16.gmra.mrb[0].mxu0 %v729
  %v1717 = vpop.f32.mrb[0].mxu0
  %v1718 = vadd.f32 %v1621, %v1717
  %v1719 = vpop.f32.mrb[0].mxu0
  %v1720 = vpop.f32.mrb[0].mxu0
  %v1721 = vadd.f32 %v1624, %v1720
  %v1722 = vpop.f32.mrb[0].mxu0
  %1723 = vmatprep.mubr.bf16.mxu0 0
  %1724 = vmatmul.mubr.bf16.gmra.mrb[0].mxu0 %v738
  %v1725 = vpop.f32.mrb[0].mxu0
  %v1726 = vadd.f32 %v1629, %v1725
  %v1727 = vpop.f32.mrb[0].mxu0
  %v1728 = vpop.f32.mrb[0].mxu0
  %v1729 = vadd.f32 %v1632, %v1728
  %v1730 = vpop.f32.mrb[0].mxu0
  %1731 = vmatprep.mubr.bf16.mxu0 0
  %1732 = vmatmul.mubr.bf16.gmra.mrb[0].mxu0 %v747
  %v1733 = vpop.f32.mrb[0].mxu0
  %v1734 = vadd.f32 %v1637, %v1733
  %v1735 = vpop.f32.mrb[0].mxu0
  %v1736 = vpop.f32.mrb[0].mxu0
  %v1737 = vadd.f32 %v1640, %v1736
  %v1738 = vpop.f32.mrb[0].mxu0
  %1739 = vmatprep.mubr.bf16.mxu0 0
  %1740 = vmatmul.mubr.bf16.gmra.mrb[0].mxu0 %v756
  %v1741 = vpop.f32.mrb[0].mxu0
  %v1742 = vadd.f32 %v1645, %v1741
  %v1743 = vpop.f32.mrb[0].mxu0
  %v1744 = vpop.f32.mrb[0].mxu0
  %v1745 = vadd.f32 %v1648, %v1744
  %v1746 = vpop.f32.mrb[0].mxu0
  %1747 = vmatprep.mubr.bf16.mxu0 0
  %1748 = vmatmul.mubr.bf16.gmra.mrb[0].mxu0 %v765
  %v1749 = vpop.f32.mrb[0].mxu0
  %v1750 = vadd.f32 %v1653, %v1749
  %v1751 = vpop.f32.mrb[0].mxu0
  %v1752 = vpop.f32.mrb[0].mxu0
  %v1753 = vadd.f32 %v1656, %v1752
  %v1754 = vpop.f32.mrb[0].mxu0
  %1755 = vmatprep.mubr.bf16.mxu0 0
  %1756 = vmatmul.mubr.bf16.gmra.mrb[0].mxu0 %v774
  %v1757 = vpop.f32.mrb[0].mxu0
  %v1758 = vadd.f32 %v1661, %v1757
  %v1759 = vpop.f32.mrb[0].mxu0
  %v1760 = vpop.f32.mrb[0].mxu0
  %v1761 = vadd.f32 %v1664, %v1760
  %v1762 = vpop.f32.mrb[0].mxu0
  %1763 = vdwg.mxu0
  %v1764 = vld [vmem:[%s3] sm:$0x1]
  %v1766 = vlaneseq
  %v1767 = vshrl.u32 %v1766, 7
  %v1768 = vsub.s32 0, %v1767
  %v1769 = vrot.slane %v1764, %v1768
  %v1771 = vmul.f32 %v1702, %v1769
  %v1772 = vmul.f32 %v1705, %v1769
  %v1773 = vmul.f32 %v1710, %v1769
  %v1774 = vmul.f32 %v1713, %v1769
  %v1775 = vmul.f32 %v1718, %v1769
  %v1776 = vmul.f32 %v1721, %v1769
  %v1777 = vmul.f32 %v1726, %v1769
  %v1778 = vmul.f32 %v1729, %v1769
  %v1779 = vmul.f32 %v1734, %v1769
  %v1780 = vmul.f32 %v1737, %v1769
  %v1781 = vmul.f32 %v1742, %v1769
  %v1782 = vmul.f32 %v1745, %v1769
  %v1783 = vmul.f32 %v1750, %v1769
  %v1784 = vmul.f32 %v1753, %v1769
  %v1785 = vmul.f32 %v1758, %v1769
  %v1786 = vmul.f32 %v1761, %v1769
  %v1787 = vld [vmem:[%s4] sm:$0x1]
  %v1789 = vlaneseq
  %v1790 = vshrl.u32 %v1789, 7
  %v1791 = vsub.s32 0, %v1790
  %v1792 = vrot.slane %v1787, %v1791
  %v1794 = vadd.f32 %v1771, %v1792
  %v1795 = vadd.f32 %v1772, %v1792
  %v1796 = vadd.f32 %v1773, %v1792
  %v1797 = vadd.f32 %v1774, %v1792
  %v1798 = vadd.f32 %v1775, %v1792
  %v1799 = vadd.f32 %v1776, %v1792
  %v1800 = vadd.f32 %v1777, %v1792
  %v1801 = vadd.f32 %v1778, %v1792
  %v1802 = vadd.f32 %v1779, %v1792
  %v1803 = vadd.f32 %v1780, %v1792
  %v1804 = vadd.f32 %v1781, %v1792
  %v1805 = vadd.f32 %v1782, %v1792
  %v1806 = vadd.f32 %v1783, %v1792
  %v1807 = vadd.f32 %v1784, %v1792
  %v1808 = vadd.f32 %v1785, %v1792
  %v1809 = vadd.f32 %v1786, %v1792
  %v1810 = vld [vmem:[%s6] sm:$0x1]
  %v1812 = vlaneseq
  %v1813 = vshrl.u32 %v1812, 7
  %v1814 = vsub.s32 0, %v1813
  %v1815 = vrot.slane %v1810, %v1814
  %v1817 = vmul.f32 %v193, %v1815
  %v1818 = vmul.f32 %v196, %v1815
  %v1819 = vmul.f32 %v201, %v1815
  %v1820 = vmul.f32 %v204, %v1815
  %v1821 = vmul.f32 %v209, %v1815
  %v1822 = vmul.f32 %v212, %v1815
  %v1823 = vmul.f32 %v217, %v1815
  %v1824 = vmul.f32 %v220, %v1815
  %v1825 = vmul.f32 %v225, %v1815
  %v1826 = vmul.f32 %v228, %v1815
  %v1827 = vmul.f32 %v233, %v1815
  %v1828 = vmul.f32 %v236, %v1815
  %v1829 = vmul.f32 %v241, %v1815
  %v1830 = vmul.f32 %v244, %v1815
  %v1831 = vmul.f32 %v249, %v1815
  %v1832 = vmul.f32 %v252, %v1815
  %v1833 = vadd.f32 %v1794, %v1817
  %v1834 = vadd.f32 %v1795, %v1818
  %v1835 = vadd.f32 %v1796, %v1819
  %v1836 = vadd.f32 %v1797, %v1820
  %v1837 = vadd.f32 %v1798, %v1821
  %v1838 = vadd.f32 %v1799, %v1822
  %v1839 = vadd.f32 %v1800, %v1823
  %v1840 = vadd.f32 %v1801, %v1824
  %v1841 = vadd.f32 %v1802, %v1825
  %v1842 = vadd.f32 %v1803, %v1826
  %v1843 = vadd.f32 %v1804, %v1827
  %v1844 = vadd.f32 %v1805, %v1828
  %v1845 = vadd.f32 %v1806, %v1829
  %v1846 = vadd.f32 %v1807, %v1830
  %v1847 = vadd.f32 %v1808, %v1831
  %v1848 = vadd.f32 %v1809, %v1832
  %v1849 = vld [vmem:[%s7] sm:$0x1]
  %v1851 = vlaneseq
  %v1852 = vshrl.u32 %v1851, 7
  %v1853 = vsub.s32 0, %v1852
  %v1854 = vrot.slane %v1849, %v1853
  %v1856 = vadd.f32 %v1833, %v1854
  %v1857 = vadd.f32 %v1834, %v1854
  %v1858 = vadd.f32 %v1835, %v1854
  %v1859 = vadd.f32 %v1836, %v1854
  %v1860 = vadd.f32 %v1837, %v1854
  %v1861 = vadd.f32 %v1838, %v1854
  %v1862 = vadd.f32 %v1839, %v1854
  %v1863 = vadd.f32 %v1840, %v1854
  %v1864 = vadd.f32 %v1841, %v1854
  %v1865 = vadd.f32 %v1842, %v1854
  %v1866 = vadd.f32 %v1843, %v1854
  %v1867 = vadd.f32 %v1844, %v1854
  %v1868 = vadd.f32 %v1845, %v1854
  %v1869 = vadd.f32 %v1846, %v1854
  %v1870 = vadd.f32 %v1847, %v1854
  %v1871 = vadd.f32 %v1848, %v1854
  %1872 = vst [vmem:[%s8] sm:$0xff] %v1856
  %1873 = vst [vmem:[%s8 + $0x8] sm:$0xff] %v1857
  %1874 = vst [vmem:[%s8 + $0x10] sm:$0xff] %v1858
  %1875 = vst [vmem:[%s8 + $0x18] sm:$0xff] %v1859
  %1876 = vst [vmem:[%s8 + $0x20] sm:$0xff] %v1860
  %1877 = vst [vmem:[%s8 + $0x28] sm:$0xff] %v1861
  %1878 = vst [vmem:[%s8 + $0x30] sm:$0xff] %v1862
  %1879 = vst [vmem:[%s8 + $0x38] sm:$0xff] %v1863
  %1880 = vst [vmem:[%s8 + $0x40] sm:$0xff] %v1864
  %1881 = vst [vmem:[%s8 + $0x48] sm:$0xff] %v1865
  %1882 = vst [vmem:[%s8 + $0x50] sm:$0xff] %v1866
  %1883 = vst [vmem:[%s8 + $0x58] sm:$0xff] %v1867
  %1884 = vst [vmem:[%s8 + $0x60] sm:$0xff] %v1868
  %1885 = vst [vmem:[%s8 + $0x68] sm:$0xff] %v1869
  %1886 = vst [vmem:[%s8 + $0x70] sm:$0xff] %v1870
  %1887 = vst [vmem:[%s8 + $0x78] sm:$0xff] %v1871
  // Predicated region
  $region34: #{bottleneck_ir_forward.3} parent=0 // pred_check
    _
  $region35: #{bottleneck_ir_forward.3} parent=0 // pred_check_branch
    %1889 = sbr.rel (0) target = $region37
  $region36: #{bottleneck_ir_forward.3} parent=0 // pred_region
    _
  $region37: #{bottleneck_ir_forward.3} parent=0 // pred_fallthru
    _
  // Predicated region
  $region38: #{bottleneck_ir_forward.3} parent=0 // pred_check
    _
  $region39: #{bottleneck_ir_forward.3} parent=0 // pred_check_branch
    %1891 = sbr.rel (0) target = $region41
  $region40: #{bottleneck_ir_forward.3} parent=0 // pred_region
    _
  $region41: #{bottleneck_ir_forward.3} parent=0 // pred_fallthru
    _

// kernel: bottleneck_ir_forward.2
$region0: #{bottleneck_ir_forward.2}
  #allocation0 [shape = 'u32[]', space=smem, size = 0x4, offset = 0x4, fixed_abs, tag = 'smem constant byte address 0x4 - core index']
  #allocation1 [shape = 'u32[144,128]{1,0:T(1,128)}', space=vmem, size = 0x12000, scoped, tag = 'internal scratch']
  %s0 = inlined_call_operand.vmem [shape: bf16[512,1152], index: 0, kind: input, shape index: {}]
  %s1 = inlined_call_operand.vmem [shape: bf16[1152,128], index: 1, kind: input, shape index: {}]
  %s2 = inlined_call_operand.vmem [shape: f32[1,128], index: 2, kind: input, shape index: {}]
  %s3 = inlined_call_operand.vmem [shape: f32[1,128], index: 3, kind: input, shape index: {}]
  %s4 = inlined_call_operand.vmem [shape: f32[1,128], index: 4, kind: input, shape index: {}]
  %s5 = inlined_call_operand.vmem [shape: bf16[512,128], index: 5, kind: output, shape index: {}]
  %s6 = sld [smem:[#allocation0]]
  $region53: #{bottleneck_ir_forward.2} parent=0
    _
  %s8 = ssub.s32 1, %s6
  %s9 = scalar_select 0, %s8, %s6
  loop: start=0, step=1, limit=4
  $region2: #{bottleneck_ir_forward.2} parent=0 // loop_pre_header
    _
  $region3: #{bottleneck_ir_forward.2} parent=0 // loop_header
    %s11 = sphi 0, %s15
    %p12 = scmp.ge.s32.totalorder %s11, 4
    %s21 = sphi 0, %s23
    %s24 = sphi 0, %s21
    %s25 = sphi 0, %s24
    %s41 = sphi 0, %s25
    %s45 = sphi 0, %s45
    %s47 = sphi 0, %s45
    %s48 = sphi 0, %s47
    %s62 = sphi 0, %s48
    %s66 = sphi 0, %s66
    %s68 = sphi 0, %s66
    %s69 = sphi 0, %s68
    %s83 = sphi 0, %s69
    %s87 = sphi 0, %s87
    %s89 = sphi 0, %s87
    %s90 = sphi 0, %s89
    %s104 = sphi 0, %s90
    %s108 = sphi 0, %s108
    %s110 = sphi 0, %s108
    %s111 = sphi 0, %s110
    %s125 = sphi 0, %s111
    %s131 = sphi 0, %s133
    %s134 = sphi 0, %s131
    %s135 = sphi 0, %s134
    %s151 = sphi 0, %s135
  $region4: #{bottleneck_ir_forward.2} parent=0 // loop_header_branch
    %14 = sbr.rel (%p12) target = $region8
  $region5: #{bottleneck_ir_forward.2} parent=0 // loop_body
    %s16 = ssub.s32 %s11, 1
    %s17 = ssub.s32 %s11, 2
    %s18 = sadd.s32 %s11, 1
    %s19 = ssub.s32 %s11, %s18
    %p20 = scmp.eq.s32.totalorder %s19, 0
    %s22 = sadd.s32 %s21, 1
    %s23 = scalar_select %p20, %s21, %s22
    %p26 = pneg %p20
    %p27 = scmp.eq.s32.totalorder %s11, 1
    %p28 = por %p26, %p27
    %p29 = scmp.ne.s32.totalorder %s21, %s24
    %p30 = scmp.eq.s32.totalorder %s11, 0
    %p31 = por %p29, %p30
    %p32 = scmp.ne.s32.totalorder %s21, %s24
    %p33 = scmp.eq.s32.totalorder %s16, 1
    %p34 = por %p32, %p33
    %p35 = scmp.ne.s32.totalorder %s24, %s25
    %p36 = scmp.eq.s32.totalorder %s16, 0
    %p37 = por %p35, %p36
    %p38 = scmp.ne.s32.totalorder %s24, %s25
    %p39 = scmp.eq.s32.totalorder %s17, 1
    %p40 = por %p38, %p39
    %p42 = scmp.ne.s32.totalorder %s25, %s41
    %p43 = scmp.eq.s32.totalorder %s17, 0
    %p44 = por %p42, %p43
    %s46 = sadd.s32 %s45, 1
    %p49 = scmp.eq.s32.totalorder %s11, 1
    %p50 = scmp.ne.s32.totalorder %s45, %s47
    %p51 = scmp.eq.s32.totalorder %s11, 0
    %p52 = por %p50, %p51
    %p53 = scmp.ne.s32.totalorder %s45, %s47
    %p54 = scmp.eq.s32.totalorder %s16, 1
    %p55 = por %p53, %p54
    %p56 = scmp.ne.s32.totalorder %s47, %s48
    %p57 = scmp.eq.s32.totalorder %s16, 0
    %p58 = por %p56, %p57
    %p59 = scmp.ne.s32.totalorder %s47, %s48
    %p60 = scmp.eq.s32.totalorder %s17, 1
    %p61 = por %p59, %p60
    %p63 = scmp.ne.s32.totalorder %s48, %s62
    %p64 = scmp.eq.s32.totalorder %s17, 0
    %p65 = por %p63, %p64
    %s67 = sadd.s32 %s66, 1
    %p70 = scmp.eq.s32.totalorder %s11, 1
    %p71 = scmp.ne.s32.totalorder %s66, %s68
    %p72 = scmp.eq.s32.totalorder %s11, 0
    %p73 = por %p71, %p72
    %p74 = scmp.ne.s32.totalorder %s66, %s68
    %p75 = scmp.eq.s32.totalorder %s16, 1
    %p76 = por %p74, %p75
    %p77 = scmp.ne.s32.totalorder %s68, %s69
    %p78 = scmp.eq.s32.totalorder %s16, 0
    %p79 = por %p77, %p78
    %p80 = scmp.ne.s32.totalorder %s68, %s69
    %p81 = scmp.eq.s32.totalorder %s17, 1
    %p82 = por %p80, %p81
    %p84 = scmp.ne.s32.totalorder %s69, %s83
    %p85 = scmp.eq.s32.totalorder %s17, 0
    %p86 = por %p84, %p85
    %s88 = sadd.s32 %s87, 1
    %p91 = scmp.eq.s32.totalorder %s11, 1
    %p92 = scmp.ne.s32.totalorder %s87, %s89
    %p93 = scmp.eq.s32.totalorder %s11, 0
    %p94 = por %p92, %p93
    %p95 = scmp.ne.s32.totalorder %s87, %s89
    %p96 = scmp.eq.s32.totalorder %s16, 1
    %p97 = por %p95, %p96
    %p98 = scmp.ne.s32.totalorder %s89, %s90
    %p99 = scmp.eq.s32.totalorder %s16, 0
    %p100 = por %p98, %p99
    %p101 = scmp.ne.s32.totalorder %s89, %s90
    %p102 = scmp.eq.s32.totalorder %s17, 1
    %p103 = por %p101, %p102
    %p105 = scmp.ne.s32.totalorder %s90, %s104
    %p106 = scmp.eq.s32.totalorder %s17, 0
    %p107 = por %p105, %p106
    %s109 = sadd.s32 %s108, 1
    %p112 = scmp.eq.s32.totalorder %s11, 1
    %p113 = scmp.ne.s32.totalorder %s108, %s110
    %p114 = scmp.eq.s32.totalorder %s11, 0
    %p115 = por %p113, %p114
    %p116 = scmp.ne.s32.totalorder %s108, %s110
    %p117 = scmp.eq.s32.totalorder %s16, 1
    %p118 = por %p116, %p117
    %p119 = scmp.ne.s32.totalorder %s110, %s111
    %p120 = scmp.eq.s32.totalorder %s16, 0
    %p121 = por %p119, %p120
    %p122 = scmp.ne.s32.totalorder %s110, %s111
    %p123 = scmp.eq.s32.totalorder %s17, 1
    %p124 = por %p122, %p123
    %p126 = scmp.ne.s32.totalorder %s111, %s125
    %p127 = scmp.eq.s32.totalorder %s17, 0
    %p128 = por %p126, %p127
    %s129 = ssub.s32 %s11, %s18
    %p130 = scmp.eq.s32.totalorder %s129, 0
    %s132 = sadd.s32 %s131, 1
    %s133 = scalar_select %p130, %s131, %s132
    %p136 = pneg %p130
    %p137 = scmp.eq.s32.totalorder %s11, 1
    %p138 = por %p136, %p137
    %p139 = scmp.ne.s32.totalorder %s131, %s134
    %p140 = scmp.eq.s32.totalorder %s11, 0
    %p141 = por %p139, %p140
    %p142 = scmp.ne.s32.totalorder %s131, %s134
    %p143 = scmp.eq.s32.totalorder %s16, 1
    %p144 = por %p142, %p143
    %p145 = scmp.ne.s32.totalorder %s134, %s135
    %p146 = scmp.eq.s32.totalorder %s16, 0
    %p147 = por %p145, %p146
    %p148 = scmp.ne.s32.totalorder %s134, %s135
    %p149 = scmp.eq.s32.totalorder %s17, 1
    %p150 = por %p148, %p149
    %p152 = scmp.ne.s32.totalorder %s135, %s151
    %p153 = scmp.eq.s32.totalorder %s17, 0
    %p154 = por %p152, %p153
    %p155 = scmp.le.s32.totalorder 1, %s11
    %p156 = scmp.lt.s32.totalorder %s11, 3
    %p157 = pnand %p155, %p156
    %p158 = pneg %p157
    // Predicated region
    $region9: #{bottleneck_ir_forward.2} parent=5 // pred_check
      _
    $region10: #{bottleneck_ir_forward.2} parent=5 // pred_check_branch
      %160 = sbr.rel (%p157) target = $region12
    $region11: #{bottleneck_ir_forward.2} parent=5 // pred_region
      %s161 = ssub.s32 %s11, 1
      // Predicated region
      $region13: #{bottleneck_ir_forward.2} parent=11 // pred_check
        %p162 = pneg %p58
      $region14: #{bottleneck_ir_forward.2} parent=11 // pred_check_branch
        %164 = sbr.rel (%p162) target = $region16
      $region15: #{bottleneck_ir_forward.2} parent=11 // pred_region
        _
      $region16: #{bottleneck_ir_forward.2} parent=11 // pred_fallthru
        _
      // Predicated region
      $region17: #{bottleneck_ir_forward.2} parent=11 // pred_check
        %p165 = pneg %p79
      $region18: #{bottleneck_ir_forward.2} parent=11 // pred_check_branch
        %167 = sbr.rel (%p165) target = $region20
      $region19: #{bottleneck_ir_forward.2} parent=11 // pred_region
        _
      $region20: #{bottleneck_ir_forward.2} parent=11 // pred_fallthru
        _
      // Predicated region
      $region21: #{bottleneck_ir_forward.2} parent=11 // pred_check
        %p168 = pneg %p100
      $region22: #{bottleneck_ir_forward.2} parent=11 // pred_check_branch
        %170 = sbr.rel (%p168) target = $region24
      $region23: #{bottleneck_ir_forward.2} parent=11 // pred_region
        _
      $region24: #{bottleneck_ir_forward.2} parent=11 // pred_fallthru
        _
      // Predicated region
      $region25: #{bottleneck_ir_forward.2} parent=11 // pred_check
        %p171 = pneg %p121
      $region26: #{bottleneck_ir_forward.2} parent=11 // pred_check_branch
        %173 = sbr.rel (%p171) target = $region28
      $region27: #{bottleneck_ir_forward.2} parent=11 // pred_region
        _
      $region28: #{bottleneck_ir_forward.2} parent=11 // pred_fallthru
        _
    $region12: #{bottleneck_ir_forward.2} parent=5 // pred_fallthru
      _
    %p174 = scmp.lt.s32.totalorder %s11, 2
    // Predicated region
    $region29: #{bottleneck_ir_forward.2} parent=5 // pred_check
      %p175 = pneg %p174
    $region30: #{bottleneck_ir_forward.2} parent=5 // pred_check_branch
      %177 = sbr.rel (%p175) target = $region32
    $region31: #{bottleneck_ir_forward.2} parent=5 // pred_region
      // Predicated region
      $region33: #{bottleneck_ir_forward.2} parent=31 // pred_check
        %p178 = pneg %p31
      $region34: #{bottleneck_ir_forward.2} parent=31 // pred_check_branch
        %180 = sbr.rel (%p178) target = $region36
      $region35: #{bottleneck_ir_forward.2} parent=31 // pred_region
        %s181 = smul.u32 32, %s11
        %p182 = scmp.lt.s32.totalorder %s181, 63
        %s183 = scalar_select %p182, %s181, 63
        %s184 = smul.addr %s183, 9
        %s185 = smul.addr %s184, 4
        %s186 = scalar_lea.vmem %s0, %s185
        %s187 = smul.u32 32, %s11
      $region36: #{bottleneck_ir_forward.2} parent=31 // pred_fallthru
        _
    $region32: #{bottleneck_ir_forward.2} parent=5 // pred_fallthru
      _
    %p188 = scmp.le.s32.totalorder 1, %s11
    %p189 = scmp.lt.s32.totalorder %s11, 3
    %p190 = pnand %p188, %p189
    %p191 = pneg %p190
    // Predicated region
    $region37: #{bottleneck_ir_forward.2} parent=5 // pred_check
      _
    $region38: #{bottleneck_ir_forward.2} parent=5 // pred_check_branch
      %193 = sbr.rel (%p190) target = $region40
    $region39: #{bottleneck_ir_forward.2} parent=5 // pred_region
      %s194 = ssub.s32 %s11, 1
      %s195 = smul.u32 32, %s16
      %p196 = scmp.lt.s32.totalorder %s195, 63
      %s197 = scalar_select %p196, %s195, 63
      %s198 = smul.addr %s197, 9
      %s199 = smul.addr %s198, 4
      %s200 = scalar_lea.vmem %s0, %s199
      %p201 = pneg %p37
      %p202 = pneg %p34
      %p203 = pneg %p58
      %p204 = pneg %p55
      %p205 = pneg %p79
      %p206 = pneg %p76
      %p207 = pneg %p100
      %p208 = pneg %p97
      %p209 = pneg %p121
      %p210 = pneg %p118
      %p211 = pneg %p147
      %p212 = pneg %p144
      %s213 = smul.u32 32, %s16
      %p214 = scmp.lt.s32.totalorder %s213, 63
      %s215 = scalar_select %p214, %s213, 63
      %s216 = smul.addr %s215, 4
      %s217 = scalar_lea.vmem %s5, %s216
      %s218 = smul.u32 32, %s16
      %p219 = scmp.lt.s32.totalorder %s218, 63
      %s220 = scalar_select %p219, %s218, 63
      %s221 = smul.addr %s220, 9
      %s222 = smul.addr %s221, 4
      %s223 = scalar_lea.vmem %s0, %s222
      %s224 = smul.u32 32, %s16
      %s225 = smul.u32 32, %s16
      %p226 = scmp.lt.s32.totalorder %s225, 63
      %s227 = scalar_select %p226, %s225, 63
      %s228 = smul.addr %s227, 4
      %s229 = scalar_lea.vmem %s5, %s228
      %s230 = smul.u32 32, %s16
      %v232 = vld [vmem:[%s223] sm:$0xff]
      %v233 = vld [vmem:[%s223 + $0x8] sm:$0xff]
      %v234 = vld [vmem:[%s223 + $0x10] sm:$0xff]
      %v235 = vld [vmem:[%s223 + $0x18] sm:$0xff]
      %v236 = vld [vmem:[%s223 + $0x20] sm:$0xf]
      %v237 = vld [vmem:[%s223 + $0x24] sm:$0xff]
      %v238 = vld [vmem:[%s223 + $0x2c] sm:$0xff]
      %v239 = vld [vmem:[%s223 + $0x34] sm:$0xff]
      %v240 = vld [vmem:[%s223 + $0x3c] sm:$0xff]
      %v241 = vld [vmem:[%s223 + $0x44] sm:$0xf]
      %v242 = vld [vmem:[%s223 + $0x48] sm:$0xff]
      %v243 = vld [vmem:[%s223 + $0x50] sm:$0xff]
      %v244 = vld [vmem:[%s223 + $0x58] sm:$0xff]
      %v245 = vld [vmem:[%s223 + $0x60] sm:$0xff]
      %v246 = vld [vmem:[%s223 + $0x68] sm:$0xf]
      %v247 = vld [vmem:[%s223 + $0x6c] sm:$0xff]
      %v248 = vld [vmem:[%s223 + $0x74] sm:$0xff]
      %v249 = vld [vmem:[%s223 + $0x7c] sm:$0xff]
      %v250 = vld [vmem:[%s223 + $0x84] sm:$0xff]
      %v251 = vld [vmem:[%s223 + $0x8c] sm:$0xf]
      %v252 = vld [vmem:[%s223 + $0x90] sm:$0xff]
      %v253 = vld [vmem:[%s223 + $0x98] sm:$0xff]
      %v254 = vld [vmem:[%s223 + $0xa0] sm:$0xff]
      %v255 = vld [vmem:[%s223 + $0xa8] sm:$0xff]
      %v256 = vld [vmem:[%s223 + $0xb0] sm:$0xf]
      %v257 = vld [vmem:[%s223 + $0xb4] sm:$0xff]
      %v258 = vld [vmem:[%s223 + $0xbc] sm:$0xff]
      %v259 = vld [vmem:[%s223 + $0xc4] sm:$0xff]
      %v260 = vld [vmem:[%s223 + $0xcc] sm:$0xff]
      %v261 = vld [vmem:[%s223 + $0xd4] sm:$0xf]
      %v262 = vld [vmem:[%s223 + $0xd8] sm:$0xff]
      %v263 = vld [vmem:[%s223 + $0xe0] sm:$0xff]
      %v264 = vld [vmem:[%s223 + $0xe8] sm:$0xff]
      %v265 = vld [vmem:[%s223 + $0xf0] sm:$0xff]
      %v266 = vld [vmem:[%s223 + $0xf8] sm:$0xf]
      %v267 = vld [vmem:[%s223 + $0xfc] sm:$0xff]
      %v268 = vld [vmem:[%s223 + $0x104] sm:$0xff]
      %v269 = vld [vmem:[%s223 + $0x10c] sm:$0xff]
      %v270 = vld [vmem:[%s223 + $0x114] sm:$0xff]
      %v271 = vld [vmem:[%s223 + $0x11c] sm:$0xf]
      %v272 = vld [vmem:[%s223 + $0x120] sm:$0xff]
      %v273 = vld [vmem:[%s223 + $0x128] sm:$0xff]
      %v274 = vld [vmem:[%s223 + $0x130] sm:$0xff]
      %v275 = vld [vmem:[%s223 + $0x138] sm:$0xff]
      %v276 = vld [vmem:[%s223 + $0x140] sm:$0xf]
      %v277 = vld [vmem:[%s223 + $0x144] sm:$0xff]
      %v278 = vld [vmem:[%s223 + $0x14c] sm:$0xff]
      %v279 = vld [vmem:[%s223 + $0x154] sm:$0xff]
      %v280 = vld [vmem:[%s223 + $0x15c] sm:$0xff]
      %v281 = vld [vmem:[%s223 + $0x164] sm:$0xf]
      %v282 = vld [vmem:[%s223 + $0x168] sm:$0xff]
      %v283 = vld [vmem:[%s223 + $0x170] sm:$0xff]
      %v284 = vld [vmem:[%s223 + $0x178] sm:$0xff]
      %v285 = vld [vmem:[%s223 + $0x180] sm:$0xff]
      %v286 = vld [vmem:[%s223 + $0x188] sm:$0xf]
      %v287 = vld [vmem:[%s223 + $0x18c] sm:$0xff]
      %v288 = vld [vmem:[%s223 + $0x194] sm:$0xff]
      %v289 = vld [vmem:[%s223 + $0x19c] sm:$0xff]
      %v290 = vld [vmem:[%s223 + $0x1a4] sm:$0xff]
      %v291 = vld [vmem:[%s223 + $0x1ac] sm:$0xf]
      %v292 = vld [vmem:[%s223 + $0x1b0] sm:$0xff]
      %v293 = vld [vmem:[%s223 + $0x1b8] sm:$0xff]
      %v294 = vld [vmem:[%s223 + $0x1c0] sm:$0xff]
      %v295 = vld [vmem:[%s223 + $0x1c8] sm:$0xff]
      %v296 = vld [vmem:[%s223 + $0x1d0] sm:$0xf]
      %v297 = vld [vmem:[%s223 + $0x1d4] sm:$0xff]
      %v298 = vld [vmem:[%s223 + $0x1dc] sm:$0xff]
      %v299 = vld [vmem:[%s223 + $0x1e4] sm:$0xff]
      %v300 = vld [vmem:[%s223 + $0x1ec] sm:$0xff]
      %v301 = vld [vmem:[%s223 + $0x1f4] sm:$0xf]
      %v302 = vld [vmem:[%s223 + $0x1f8] sm:$0xff]
      %v303 = vld [vmem:[%s223 + $0x200] sm:$0xff]
      %v304 = vld [vmem:[%s223 + $0x208] sm:$0xff]
      %v305 = vld [vmem:[%s223 + $0x210] sm:$0xff]
      %v306 = vld [vmem:[%s223 + $0x218] sm:$0xf]
      %v307 = vld [vmem:[%s223 + $0x21c] sm:$0xff]
      %v308 = vld [vmem:[%s223 + $0x224] sm:$0xff]
      %v309 = vld [vmem:[%s223 + $0x22c] sm:$0xff]
      %v310 = vld [vmem:[%s223 + $0x234] sm:$0xff]
      %v311 = vld [vmem:[%s223 + $0x23c] sm:$0xf]
      %v312 = vld [vmem:[%s223 + $0x240] sm:$0xff]
      %v313 = vld [vmem:[%s223 + $0x248] sm:$0xff]
      %v314 = vld [vmem:[%s223 + $0x250] sm:$0xff]
      %v315 = vld [vmem:[%s223 + $0x258] sm:$0xff]
      %v316 = vld [vmem:[%s223 + $0x260] sm:$0xf]
      %v317 = vld [vmem:[%s223 + $0x264] sm:$0xff]
      %v318 = vld [vmem:[%s223 + $0x26c] sm:$0xff]
      %v319 = vld [vmem:[%s223 + $0x274] sm:$0xff]
      %v320 = vld [vmem:[%s223 + $0x27c] sm:$0xff]
      %v321 = vld [vmem:[%s223 + $0x284] sm:$0xf]
      %v322 = vld [vmem:[%s223 + $0x288] sm:$0xff]
      %v323 = vld [vmem:[%s223 + $0x290] sm:$0xff]
      %v324 = vld [vmem:[%s223 + $0x298] sm:$0xff]
      %v325 = vld [vmem:[%s223 + $0x2a0] sm:$0xff]
      %v326 = vld [vmem:[%s223 + $0x2a8] sm:$0xf]
      %v327 = vld [vmem:[%s223 + $0x2ac] sm:$0xff]
      %v328 = vld [vmem:[%s223 + $0x2b4] sm:$0xff]
      %v329 = vld [vmem:[%s223 + $0x2bc] sm:$0xff]
      %v330 = vld [vmem:[%s223 + $0x2c4] sm:$0xff]
      %v331 = vld [vmem:[%s223 + $0x2cc] sm:$0xf]
      %v332 = vld [vmem:[%s223 + $0x2d0] sm:$0xff]
      %v333 = vld [vmem:[%s223 + $0x2d8] sm:$0xff]
      %v334 = vld [vmem:[%s223 + $0x2e0] sm:$0xff]
      %v335 = vld [vmem:[%s223 + $0x2e8] sm:$0xff]
      %v336 = vld [vmem:[%s223 + $0x2f0] sm:$0xf]
      %v337 = vld [vmem:[%s223 + $0x2f4] sm:$0xff]
      %v338 = vld [vmem:[%s223 + $0x2fc] sm:$0xff]
      %v339 = vld [vmem:[%s223 + $0x304] sm:$0xff]
      %v340 = vld [vmem:[%s223 + $0x30c] sm:$0xff]
      %v341 = vld [vmem:[%s223 + $0x314] sm:$0xf]
      %v342 = vld [vmem:[%s223 + $0x318] sm:$0xff]
      %v343 = vld [vmem:[%s223 + $0x320] sm:$0xff]
      %v344 = vld [vmem:[%s223 + $0x328] sm:$0xff]
      %v345 = vld [vmem:[%s223 + $0x330] sm:$0xff]
      %v346 = vld [vmem:[%s223 + $0x338] sm:$0xf]
      %v347 = vld [vmem:[%s223 + $0x33c] sm:$0xff]
      %v348 = vld [vmem:[%s223 + $0x344] sm:$0xff]
      %v349 = vld [vmem:[%s223 + $0x34c] sm:$0xff]
      %v350 = vld [vmem:[%s223 + $0x354] sm:$0xff]
      %v351 = vld [vmem:[%s223 + $0x35c] sm:$0xf]
      %v352 = vld [vmem:[%s223 + $0x360] sm:$0xff]
      %v353 = vld [vmem:[%s223 + $0x368] sm:$0xff]
      %v354 = vld [vmem:[%s223 + $0x370] sm:$0xff]
      %v355 = vld [vmem:[%s223 + $0x378] sm:$0xff]
      %v356 = vld [vmem:[%s223 + $0x380] sm:$0xf]
      %v357 = vld [vmem:[%s223 + $0x384] sm:$0xff]
      %v358 = vld [vmem:[%s223 + $0x38c] sm:$0xff]
      %v359 = vld [vmem:[%s223 + $0x394] sm:$0xff]
      %v360 = vld [vmem:[%s223 + $0x39c] sm:$0xff]
      %v361 = vld [vmem:[%s223 + $0x3a4] sm:$0xf]
      %v362 = vld [vmem:[%s223 + $0x3a8] sm:$0xff]
      %v363 = vld [vmem:[%s223 + $0x3b0] sm:$0xff]
      %v364 = vld [vmem:[%s223 + $0x3b8] sm:$0xff]
      %v365 = vld [vmem:[%s223 + $0x3c0] sm:$0xff]
      %v366 = vld [vmem:[%s223 + $0x3c8] sm:$0xf]
      %v367 = vld [vmem:[%s223 + $0x3cc] sm:$0xff]
      %v368 = vld [vmem:[%s223 + $0x3d4] sm:$0xff]
      %v369 = vld [vmem:[%s223 + $0x3dc] sm:$0xff]
      %v370 = vld [vmem:[%s223 + $0x3e4] sm:$0xff]
      %v371 = vld [vmem:[%s223 + $0x3ec] sm:$0xf]
      %v372 = vld [vmem:[%s223 + $0x3f0] sm:$0xff]
      %v373 = vld [vmem:[%s223 + $0x3f8] sm:$0xff]
      %v374 = vld [vmem:[%s223 + $0x400] sm:$0xff]
      %v375 = vld [vmem:[%s223 + $0x408] sm:$0xff]
      %v376 = vld [vmem:[%s223 + $0x410] sm:$0xf]
      %v377 = vld [vmem:[%s223 + $0x414] sm:$0xff]
      %v378 = vld [vmem:[%s223 + $0x41c] sm:$0xff]
      %v379 = vld [vmem:[%s223 + $0x424] sm:$0xff]
      %v380 = vld [vmem:[%s223 + $0x42c] sm:$0xff]
      %v381 = vld [vmem:[%s223 + $0x434] sm:$0xf]
      %v382 = vld [vmem:[%s223 + $0x438] sm:$0xff]
      %v383 = vld [vmem:[%s223 + $0x440] sm:$0xff]
      %v384 = vld [vmem:[%s223 + $0x448] sm:$0xff]
      %v385 = vld [vmem:[%s223 + $0x450] sm:$0xff]
      %v386 = vld [vmem:[%s223 + $0x458] sm:$0xf]
      %v387 = vld [vmem:[%s223 + $0x45c] sm:$0xff]
      %v388 = vld [vmem:[%s223 + $0x464] sm:$0xff]
      %v389 = vld [vmem:[%s223 + $0x46c] sm:$0xff]
      %v390 = vld [vmem:[%s223 + $0x474] sm:$0xff]
      %v391 = vld [vmem:[%s223 + $0x47c] sm:$0xf]
      %v392 = vld [vmem:[%s1] sm:$0xf]
      %v393 = vld [vmem:[%s1 + $0x4] sm:$0xf]
      %v394 = vld [vmem:[%s1 + $0x8] sm:$0xf]
      %v395 = vld [vmem:[%s1 + $0xc] sm:$0xf]
      %v396 = vld [vmem:[%s1 + $0x10] sm:$0xf]
      %v397 = vld [vmem:[%s1 + $0x14] sm:$0xf]
      %v398 = vld [vmem:[%s1 + $0x18] sm:$0xf]
      %v399 = vld [vmem:[%s1 + $0x1c] sm:$0xf]
      %v400 = vld [vmem:[%s1 + $0x20] sm:$0xf]
      %v401 = vld [vmem:[%s1 + $0x24] sm:$0xf]
      %v402 = vld [vmem:[%s1 + $0x28] sm:$0xf]
      %v403 = vld [vmem:[%s1 + $0x2c] sm:$0xf]
      %v404 = vld [vmem:[%s1 + $0x30] sm:$0xf]
      %v405 = vld [vmem:[%s1 + $0x34] sm:$0xf]
      %v406 = vld [vmem:[%s1 + $0x38] sm:$0xf]
      %v407 = vld [vmem:[%s1 + $0x3c] sm:$0xf]
      %v408 = vld [vmem:[%s1 + $0x40] sm:$0xf]
      %v409 = vld [vmem:[%s1 + $0x44] sm:$0xf]
      %v410 = vld [vmem:[%s1 + $0x48] sm:$0xf]
      %v411 = vld [vmem:[%s1 + $0x4c] sm:$0xf]
      %v412 = vld [vmem:[%s1 + $0x50] sm:$0xf]
      %v413 = vld [vmem:[%s1 + $0x54] sm:$0xf]
      %v414 = vld [vmem:[%s1 + $0x58] sm:$0xf]
      %v415 = vld [vmem:[%s1 + $0x5c] sm:$0xf]
      %v416 = vld [vmem:[%s1 + $0x60] sm:$0xf]
      %v417 = vld [vmem:[%s1 + $0x64] sm:$0xf]
      %v418 = vld [vmem:[%s1 + $0x68] sm:$0xf]
      %v419 = vld [vmem:[%s1 + $0x6c] sm:$0xf]
      %v420 = vld [vmem:[%s1 + $0x70] sm:$0xf]
      %v421 = vld [vmem:[%s1 + $0x74] sm:$0xf]
      %v422 = vld [vmem:[%s1 + $0x78] sm:$0xf]
      %v423 = vld [vmem:[%s1 + $0x7c] sm:$0xf]
      %v424 = vld [vmem:[%s1 + $0x80] sm:$0xf]
      %v425 = vld [vmem:[%s1 + $0x84] sm:$0xf]
      %v426 = vld [vmem:[%s1 + $0x88] sm:$0xf]
      %v427 = vld [vmem:[%s1 + $0x8c] sm:$0xf]
      %v428 = vld [vmem:[%s1 + $0x90] sm:$0xf]
      %v429 = vld [vmem:[%s1 + $0x94] sm:$0xf]
      %v430 = vld [vmem:[%s1 + $0x98] sm:$0xf]
      %v431 = vld [vmem:[%s1 + $0x9c] sm:$0xf]
      %v432 = vld [vmem:[%s1 + $0xa0] sm:$0xf]
      %v433 = vld [vmem:[%s1 + $0xa4] sm:$0xf]
      %v434 = vld [vmem:[%s1 + $0xa8] sm:$0xf]
      %v435 = vld [vmem:[%s1 + $0xac] sm:$0xf]
      %v436 = vld [vmem:[%s1 + $0xb0] sm:$0xf]
      %v437 = vld [vmem:[%s1 + $0xb4] sm:$0xf]
      %v438 = vld [vmem:[%s1 + $0xb8] sm:$0xf]
      %v439 = vld [vmem:[%s1 + $0xbc] sm:$0xf]
      %v440 = vld [vmem:[%s1 + $0xc0] sm:$0xf]
      %v441 = vld [vmem:[%s1 + $0xc4] sm:$0xf]
      %v442 = vld [vmem:[%s1 + $0xc8] sm:$0xf]
      %v443 = vld [vmem:[%s1 + $0xcc] sm:$0xf]
      %v444 = vld [vmem:[%s1 + $0xd0] sm:$0xf]
      %v445 = vld [vmem:[%s1 + $0xd4] sm:$0xf]
      %v446 = vld [vmem:[%s1 + $0xd8] sm:$0xf]
      %v447 = vld [vmem:[%s1 + $0xdc] sm:$0xf]
      %v448 = vld [vmem:[%s1 + $0xe0] sm:$0xf]
      %v449 = vld [vmem:[%s1 + $0xe4] sm:$0xf]
      %v450 = vld [vmem:[%s1 + $0xe8] sm:$0xf]
      %v451 = vld [vmem:[%s1 + $0xec] sm:$0xf]
      %v452 = vld [vmem:[%s1 + $0xf0] sm:$0xf]
      %v453 = vld [vmem:[%s1 + $0xf4] sm:$0xf]
      %v454 = vld [vmem:[%s1 + $0xf8] sm:$0xf]
      %v455 = vld [vmem:[%s1 + $0xfc] sm:$0xf]
      %v456 = vld [vmem:[%s1 + $0x100] sm:$0xf]
      %v457 = vld [vmem:[%s1 + $0x104] sm:$0xf]
      %v458 = vld [vmem:[%s1 + $0x108] sm:$0xf]
      %v459 = vld [vmem:[%s1 + $0x10c] sm:$0xf]
      %v460 = vld [vmem:[%s1 + $0x110] sm:$0xf]
      %v461 = vld [vmem:[%s1 + $0x114] sm:$0xf]
      %v462 = vld [vmem:[%s1 + $0x118] sm:$0xf]
      %v463 = vld [vmem:[%s1 + $0x11c] sm:$0xf]
      %v464 = vld [vmem:[%s1 + $0x120] sm:$0xf]
      %v465 = vld [vmem:[%s1 + $0x124] sm:$0xf]
      %v466 = vld [vmem:[%s1 + $0x128] sm:$0xf]
      %v467 = vld [vmem:[%s1 + $0x12c] sm:$0xf]
      %v468 = vld [vmem:[%s1 + $0x130] sm:$0xf]
      %v469 = vld [vmem:[%s1 + $0x134] sm:$0xf]
      %v470 = vld [vmem:[%s1 + $0x138] sm:$0xf]
      %v471 = vld [vmem:[%s1 + $0x13c] sm:$0xf]
      %v472 = vld [vmem:[%s1 + $0x140] sm:$0xf]
      %v473 = vld [vmem:[%s1 + $0x144] sm:$0xf]
      %v474 = vld [vmem:[%s1 + $0x148] sm:$0xf]
      %v475 = vld [vmem:[%s1 + $0x14c] sm:$0xf]
      %v476 = vld [vmem:[%s1 + $0x150] sm:$0xf]
      %v477 = vld [vmem:[%s1 + $0x154] sm:$0xf]
      %v478 = vld [vmem:[%s1 + $0x158] sm:$0xf]
      %v479 = vld [vmem:[%s1 + $0x15c] sm:$0xf]
      %v480 = vld [vmem:[%s1 + $0x160] sm:$0xf]
      %v481 = vld [vmem:[%s1 + $0x164] sm:$0xf]
      %v482 = vld [vmem:[%s1 + $0x168] sm:$0xf]
      %v483 = vld [vmem:[%s1 + $0x16c] sm:$0xf]
      %v484 = vld [vmem:[%s1 + $0x170] sm:$0xf]
      %v485 = vld [vmem:[%s1 + $0x174] sm:$0xf]
      %v486 = vld [vmem:[%s1 + $0x178] sm:$0xf]
      %v487 = vld [vmem:[%s1 + $0x17c] sm:$0xf]
      %v488 = vld [vmem:[%s1 + $0x180] sm:$0xf]
      %v489 = vld [vmem:[%s1 + $0x184] sm:$0xf]
      %v490 = vld [vmem:[%s1 + $0x188] sm:$0xf]
      %v491 = vld [vmem:[%s1 + $0x18c] sm:$0xf]
      %v492 = vld [vmem:[%s1 + $0x190] sm:$0xf]
      %v493 = vld [vmem:[%s1 + $0x194] sm:$0xf]
      %v494 = vld [vmem:[%s1 + $0x198] sm:$0xf]
      %v495 = vld [vmem:[%s1 + $0x19c] sm:$0xf]
      %v496 = vld [vmem:[%s1 + $0x1a0] sm:$0xf]
      %v497 = vld [vmem:[%s1 + $0x1a4] sm:$0xf]
      %v498 = vld [vmem:[%s1 + $0x1a8] sm:$0xf]
      %v499 = vld [vmem:[%s1 + $0x1ac] sm:$0xf]
      %v500 = vld [vmem:[%s1 + $0x1b0] sm:$0xf]
      %v501 = vld [vmem:[%s1 + $0x1b4] sm:$0xf]
      %v502 = vld [vmem:[%s1 + $0x1b8] sm:$0xf]
      %v503 = vld [vmem:[%s1 + $0x1bc] sm:$0xf]
      %v504 = vld [vmem:[%s1 + $0x1c0] sm:$0xf]
      %v505 = vld [vmem:[%s1 + $0x1c4] sm:$0xf]
      %v506 = vld [vmem:[%s1 + $0x1c8] sm:$0xf]
      %v507 = vld [vmem:[%s1 + $0x1cc] sm:$0xf]
      %v508 = vld [vmem:[%s1 + $0x1d0] sm:$0xf]
      %v509 = vld [vmem:[%s1 + $0x1d4] sm:$0xf]
      %v510 = vld [vmem:[%s1 + $0x1d8] sm:$0xf]
      %v511 = vld [vmem:[%s1 + $0x1dc] sm:$0xf]
      %v512 = vld [vmem:[%s1 + $0x1e0] sm:$0xf]
      %v513 = vld [vmem:[%s1 + $0x1e4] sm:$0xf]
      %v514 = vld [vmem:[%s1 + $0x1e8] sm:$0xf]
      %v515 = vld [vmem:[%s1 + $0x1ec] sm:$0xf]
      %v516 = vld [vmem:[%s1 + $0x1f0] sm:$0xf]
      %v517 = vld [vmem:[%s1 + $0x1f4] sm:$0xf]
      %v518 = vld [vmem:[%s1 + $0x1f8] sm:$0xf]
      %v519 = vld [vmem:[%s1 + $0x1fc] sm:$0xf]
      %v520 = vld [vmem:[%s1 + $0x200] sm:$0xf]
      %v521 = vld [vmem:[%s1 + $0x204] sm:$0xf]
      %v522 = vld [vmem:[%s1 + $0x208] sm:$0xf]
      %v523 = vld [vmem:[%s1 + $0x20c] sm:$0xf]
      %v524 = vld [vmem:[%s1 + $0x210] sm:$0xf]
      %v525 = vld [vmem:[%s1 + $0x214] sm:$0xf]
      %v526 = vld [vmem:[%s1 + $0x218] sm:$0xf]
      %v527 = vld [vmem:[%s1 + $0x21c] sm:$0xf]
      %v528 = vld [vmem:[%s1 + $0x220] sm:$0xf]
      %v529 = vld [vmem:[%s1 + $0x224] sm:$0xf]
      %v530 = vld [vmem:[%s1 + $0x228] sm:$0xf]
      %v531 = vld [vmem:[%s1 + $0x22c] sm:$0xf]
      %v532 = vld [vmem:[%s1 + $0x230] sm:$0xf]
      %v533 = vld [vmem:[%s1 + $0x234] sm:$0xf]
      %v534 = vld [vmem:[%s1 + $0x238] sm:$0xf]
      %v535 = vld [vmem:[%s1 + $0x23c] sm:$0xf]
      %v696 = vunpack.c.l.b16 %v232
      %v697 = vunpack.c.h.b16 %v232
      %v698 = vunpack.c.l.b16 %v233
      %v699 = vunpack.c.h.b16 %v233
      %v700 = vunpack.c.l.b16 %v234
      %v701 = vunpack.c.h.b16 %v234
      %v702 = vunpack.c.l.b16 %v235
      %v703 = vunpack.c.h.b16 %v235
      %v704 = vunpack.c.l.b16 %v236
      %v705 = vunpack.c.l.b16 %v237
      %v706 = vunpack.c.h.b16 %v237
      %v707 = vunpack.c.l.b16 %v238
      %v708 = vunpack.c.h.b16 %v238
      %v709 = vunpack.c.l.b16 %v239
      %v710 = vunpack.c.h.b16 %v239
      %v711 = vunpack.c.l.b16 %v240
      %v712 = vunpack.c.h.b16 %v240
      %v713 = vunpack.c.l.b16 %v241
      %v714 = vunpack.c.l.b16 %v242
      %v715 = vunpack.c.h.b16 %v242
      %v716 = vunpack.c.l.b16 %v243
      %v717 = vunpack.c.h.b16 %v243
      %v718 = vunpack.c.l.b16 %v244
      %v719 = vunpack.c.h.b16 %v244
      %v720 = vunpack.c.l.b16 %v245
      %v721 = vunpack.c.h.b16 %v245
      %v722 = vunpack.c.l.b16 %v246
      %v723 = vunpack.c.l.b16 %v247
      %v724 = vunpack.c.h.b16 %v247
      %v725 = vunpack.c.l.b16 %v248
      %v726 = vunpack.c.h.b16 %v248
      %v727 = vunpack.c.l.b16 %v249
      %v728 = vunpack.c.h.b16 %v249
      %v729 = vunpack.c.l.b16 %v250
      %v730 = vunpack.c.h.b16 %v250
      %v731 = vunpack.c.l.b16 %v251
      %v732 = vunpack.c.l.b16 %v252
      %v733 = vunpack.c.h.b16 %v252
      %v734 = vunpack.c.l.b16 %v253
      %v735 = vunpack.c.h.b16 %v253
      %v736 = vunpack.c.l.b16 %v254
      %v737 = vunpack.c.h.b16 %v254
      %v738 = vunpack.c.l.b16 %v255
      %v739 = vunpack.c.h.b16 %v255
      %v740 = vunpack.c.l.b16 %v256
      %v741 = vunpack.c.l.b16 %v257
      %v742 = vunpack.c.h.b16 %v257
      %v743 = vunpack.c.l.b16 %v258
      %v744 = vunpack.c.h.b16 %v258
      %v745 = vunpack.c.l.b16 %v259
      %v746 = vunpack.c.h.b16 %v259
      %v747 = vunpack.c.l.b16 %v260
      %v748 = vunpack.c.h.b16 %v260
      %v749 = vunpack.c.l.b16 %v261
      %v750 = vunpack.c.l.b16 %v262
      %v751 = vunpack.c.h.b16 %v262
      %v752 = vunpack.c.l.b16 %v263
      %v753 = vunpack.c.h.b16 %v263
      %v754 = vunpack.c.l.b16 %v264
      %v755 = vunpack.c.h.b16 %v264
      %v756 = vunpack.c.l.b16 %v265
      %v757 = vunpack.c.h.b16 %v265
      %v758 = vunpack.c.l.b16 %v266
      %v759 = vunpack.c.l.b16 %v267
      %v760 = vunpack.c.h.b16 %v267
      %v761 = vunpack.c.l.b16 %v268
      %v762 = vunpack.c.h.b16 %v268
      %v763 = vunpack.c.l.b16 %v269
      %v764 = vunpack.c.h.b16 %v269
      %v765 = vunpack.c.l.b16 %v270
      %v766 = vunpack.c.h.b16 %v270
      %v767 = vunpack.c.l.b16 %v271
      %v768 = vunpack.c.l.b16 %v272
      %v769 = vunpack.c.h.b16 %v272
      %v770 = vunpack.c.l.b16 %v273
      %v771 = vunpack.c.h.b16 %v273
      %v772 = vunpack.c.l.b16 %v274
      %v773 = vunpack.c.h.b16 %v274
      %v774 = vunpack.c.l.b16 %v275
      %v775 = vunpack.c.h.b16 %v275
      %v776 = vunpack.c.l.b16 %v276
      %v777 = vunpack.c.l.b16 %v277
      %v778 = vunpack.c.h.b16 %v277
      %v779 = vunpack.c.l.b16 %v278
      %v780 = vunpack.c.h.b16 %v278
      %v781 = vunpack.c.l.b16 %v279
      %v782 = vunpack.c.h.b16 %v279
      %v783 = vunpack.c.l.b16 %v280
      %v784 = vunpack.c.h.b16 %v280
      %v785 = vunpack.c.l.b16 %v281
      %v786 = vunpack.c.l.b16 %v282
      %v787 = vunpack.c.h.b16 %v282
      %v788 = vunpack.c.l.b16 %v283
      %v789 = vunpack.c.h.b16 %v283
      %v790 = vunpack.c.l.b16 %v284
      %v791 = vunpack.c.h.b16 %v284
      %v792 = vunpack.c.l.b16 %v285
      %v793 = vunpack.c.h.b16 %v285
      %v794 = vunpack.c.l.b16 %v286
      %v795 = vunpack.c.l.b16 %v287
      %v796 = vunpack.c.h.b16 %v287
      %v797 = vunpack.c.l.b16 %v288
      %v798 = vunpack.c.h.b16 %v288
      %v799 = vunpack.c.l.b16 %v289
      %v800 = vunpack.c.h.b16 %v289
      %v801 = vunpack.c.l.b16 %v290
      %v802 = vunpack.c.h.b16 %v290
      %v803 = vunpack.c.l.b16 %v291
      %v804 = vunpack.c.l.b16 %v292
      %v805 = vunpack.c.h.b16 %v292
      %v806 = vunpack.c.l.b16 %v293
      %v807 = vunpack.c.h.b16 %v293
      %v808 = vunpack.c.l.b16 %v294
      %v809 = vunpack.c.h.b16 %v294
      %v810 = vunpack.c.l.b16 %v295
      %v811 = vunpack.c.h.b16 %v295
      %v812 = vunpack.c.l.b16 %v296
      %v813 = vunpack.c.l.b16 %v297
      %v814 = vunpack.c.h.b16 %v297
      %v815 = vunpack.c.l.b16 %v298
      %v816 = vunpack.c.h.b16 %v298
      %v817 = vunpack.c.l.b16 %v299
      %v818 = vunpack.c.h.b16 %v299
      %v819 = vunpack.c.l.b16 %v300
      %v820 = vunpack.c.h.b16 %v300
      %v821 = vunpack.c.l.b16 %v301
      %v822 = vunpack.c.l.b16 %v302
      %v823 = vunpack.c.h.b16 %v302
      %v824 = vunpack.c.l.b16 %v303
      %v825 = vunpack.c.h.b16 %v303
      %v826 = vunpack.c.l.b16 %v304
      %v827 = vunpack.c.h.b16 %v304
      %v828 = vunpack.c.l.b16 %v305
      %v829 = vunpack.c.h.b16 %v305
      %v830 = vunpack.c.l.b16 %v306
      %v831 = vunpack.c.l.b16 %v307
      %v832 = vunpack.c.h.b16 %v307
      %v833 = vunpack.c.l.b16 %v308
      %v834 = vunpack.c.h.b16 %v308
      %v835 = vunpack.c.l.b16 %v309
      %v836 = vunpack.c.h.b16 %v309
      %v837 = vunpack.c.l.b16 %v310
      %v838 = vunpack.c.h.b16 %v310
      %v839 = vunpack.c.l.b16 %v311
      %v840 = vunpack.c.l.b16 %v312
      %v841 = vunpack.c.h.b16 %v312
      %v842 = vunpack.c.l.b16 %v313
      %v843 = vunpack.c.h.b16 %v313
      %v844 = vunpack.c.l.b16 %v314
      %v845 = vunpack.c.h.b16 %v314
      %v846 = vunpack.c.l.b16 %v315
      %v847 = vunpack.c.h.b16 %v315
      %v848 = vunpack.c.l.b16 %v316
      %v849 = vunpack.c.l.b16 %v317
      %v850 = vunpack.c.h.b16 %v317
      %v851 = vunpack.c.l.b16 %v318
      %v852 = vunpack.c.h.b16 %v318
      %v853 = vunpack.c.l.b16 %v319
      %v854 = vunpack.c.h.b16 %v319
      %v855 = vunpack.c.l.b16 %v320
      %v856 = vunpack.c.h.b16 %v320
      %v857 = vunpack.c.l.b16 %v321
      %v858 = vunpack.c.l.b16 %v322
      %v859 = vunpack.c.h.b16 %v322
      %v860 = vunpack.c.l.b16 %v323
      %v861 = vunpack.c.h.b16 %v323
      %v862 = vunpack.c.l.b16 %v324
      %v863 = vunpack.c.h.b16 %v324
      %v864 = vunpack.c.l.b16 %v325
      %v865 = vunpack.c.h.b16 %v325
      %v866 = vunpack.c.l.b16 %v326
      %v867 = vunpack.c.l.b16 %v327
      %v868 = vunpack.c.h.b16 %v327
      %v869 = vunpack.c.l.b16 %v328
      %v870 = vunpack.c.h.b16 %v328
      %v871 = vunpack.c.l.b16 %v329
      %v872 = vunpack.c.h.b16 %v329
      %v873 = vunpack.c.l.b16 %v330
      %v874 = vunpack.c.h.b16 %v330
      %v875 = vunpack.c.l.b16 %v331
      %v876 = vunpack.c.l.b16 %v332
      %v877 = vunpack.c.h.b16 %v332
      %v878 = vunpack.c.l.b16 %v333
      %v879 = vunpack.c.h.b16 %v333
      %v880 = vunpack.c.l.b16 %v334
      %v881 = vunpack.c.h.b16 %v334
      %v882 = vunpack.c.l.b16 %v335
      %v883 = vunpack.c.h.b16 %v335
      %v884 = vunpack.c.l.b16 %v336
      %v885 = vunpack.c.l.b16 %v337
      %v886 = vunpack.c.h.b16 %v337
      %v887 = vunpack.c.l.b16 %v338
      %v888 = vunpack.c.h.b16 %v338
      %v889 = vunpack.c.l.b16 %v339
      %v890 = vunpack.c.h.b16 %v339
      %v891 = vunpack.c.l.b16 %v340
      %v892 = vunpack.c.h.b16 %v340
      %v893 = vunpack.c.l.b16 %v341
      %v894 = vunpack.c.l.b16 %v342
      %v895 = vunpack.c.h.b16 %v342
      %v896 = vunpack.c.l.b16 %v343
      %v897 = vunpack.c.h.b16 %v343
      %v898 = vunpack.c.l.b16 %v344
      %v899 = vunpack.c.h.b16 %v344
      %v900 = vunpack.c.l.b16 %v345
      %v901 = vunpack.c.h.b16 %v345
      %v902 = vunpack.c.l.b16 %v346
      %v903 = vunpack.c.l.b16 %v347
      %v904 = vunpack.c.h.b16 %v347
      %v905 = vunpack.c.l.b16 %v348
      %v906 = vunpack.c.h.b16 %v348
      %v907 = vunpack.c.l.b16 %v349
      %v908 = vunpack.c.h.b16 %v349
      %v909 = vunpack.c.l.b16 %v350
      %v910 = vunpack.c.h.b16 %v350
      %v911 = vunpack.c.l.b16 %v351
      %v912 = vunpack.c.l.b16 %v352
      %v913 = vunpack.c.h.b16 %v352
      %v914 = vunpack.c.l.b16 %v353
      %v915 = vunpack.c.h.b16 %v353
      %v916 = vunpack.c.l.b16 %v354
      %v917 = vunpack.c.h.b16 %v354
      %v918 = vunpack.c.l.b16 %v355
      %v919 = vunpack.c.h.b16 %v355
      %v920 = vunpack.c.l.b16 %v356
      %v921 = vunpack.c.l.b16 %v357
      %v922 = vunpack.c.h.b16 %v357
      %v923 = vunpack.c.l.b16 %v358
      %v924 = vunpack.c.h.b16 %v358
      %v925 = vunpack.c.l.b16 %v359
      %v926 = vunpack.c.h.b16 %v359
      %v927 = vunpack.c.l.b16 %v360
      %v928 = vunpack.c.h.b16 %v360
      %v929 = vunpack.c.l.b16 %v361
      %v930 = vunpack.c.l.b16 %v362
      %v931 = vunpack.c.h.b16 %v362
      %v932 = vunpack.c.l.b16 %v363
      %v933 = vunpack.c.h.b16 %v363
      %v934 = vunpack.c.l.b16 %v364
      %v935 = vunpack.c.h.b16 %v364
      %v936 = vunpack.c.l.b16 %v365
      %v937 = vunpack.c.h.b16 %v365
      %v938 = vunpack.c.l.b16 %v366
      %v939 = vunpack.c.l.b16 %v367
      %v940 = vunpack.c.h.b16 %v367
      %v941 = vunpack.c.l.b16 %v368
      %v942 = vunpack.c.h.b16 %v368
      %v943 = vunpack.c.l.b16 %v369
      %v944 = vunpack.c.h.b16 %v369
      %v945 = vunpack.c.l.b16 %v370
      %v946 = vunpack.c.h.b16 %v370
      %v947 = vunpack.c.l.b16 %v371
      %v948 = vunpack.c.l.b16 %v372
      %v949 = vunpack.c.h.b16 %v372
      %v950 = vunpack.c.l.b16 %v373
      %v951 = vunpack.c.h.b16 %v373
      %v952 = vunpack.c.l.b16 %v374
      %v953 = vunpack.c.h.b16 %v374
      %v954 = vunpack.c.l.b16 %v375
      %v955 = vunpack.c.h.b16 %v375
      %v956 = vunpack.c.l.b16 %v376
      %v957 = vunpack.c.l.b16 %v377
      %v958 = vunpack.c.h.b16 %v377
      %v959 = vunpack.c.l.b16 %v378
      %v960 = vunpack.c.h.b16 %v378
      %v961 = vunpack.c.l.b16 %v379
      %v962 = vunpack.c.h.b16 %v379
      %v963 = vunpack.c.l.b16 %v380
      %v964 = vunpack.c.h.b16 %v380
      %v965 = vunpack.c.l.b16 %v381
      %v966 = vunpack.c.l.b16 %v382
      %v967 = vunpack.c.h.b16 %v382
      %v968 = vunpack.c.l.b16 %v383
      %v969 = vunpack.c.h.b16 %v383
      %v970 = vunpack.c.l.b16 %v384
      %v971 = vunpack.c.h.b16 %v384
      %v972 = vunpack.c.l.b16 %v385
      %v973 = vunpack.c.h.b16 %v385
      %v974 = vunpack.c.l.b16 %v386
      %v975 = vunpack.c.l.b16 %v387
      %v976 = vunpack.c.h.b16 %v387
      %v977 = vunpack.c.l.b16 %v388
      %v978 = vunpack.c.h.b16 %v388
      %v979 = vunpack.c.l.b16 %v389
      %v980 = vunpack.c.h.b16 %v389
      %v981 = vunpack.c.l.b16 %v390
      %v982 = vunpack.c.h.b16 %v390
      %v983 = vunpack.c.l.b16 %v391
      %v984 = vpack.c.b16 %v705, %v696
      %v985 = vpack.c.b16 %v706, %v697
      %v986 = vpack.c.b16 %v707, %v698
      %v987 = vpack.c.b16 %v708, %v699
      %v988 = vpack.c.b16 %v709, %v700
      %v989 = vpack.c.b16 %v710, %v701
      %v990 = vpack.c.b16 %v711, %v702
      %v991 = vpack.c.b16 %v712, %v703
      %v992 = vpack.c.b16 %v713, %v704
      %v993 = vpack.c.b16 %v723, %v714
      %v994 = vpack.c.b16 %v724, %v715
      %v995 = vpack.c.b16 %v725, %v716
      %v996 = vpack.c.b16 %v726, %v717
      %v997 = vpack.c.b16 %v727, %v718
      %v998 = vpack.c.b16 %v728, %v719
      %v999 = vpack.c.b16 %v729, %v720
      %v1000 = vpack.c.b16 %v730, %v721
      %v1001 = vpack.c.b16 %v731, %v722
      %v1002 = vpack.c.b16 %v741, %v732
      %v1003 = vpack.c.b16 %v742, %v733
      %v1004 = vpack.c.b16 %v743, %v734
      %v1005 = vpack.c.b16 %v744, %v735
      %v1006 = vpack.c.b16 %v745, %v736
      %v1007 = vpack.c.b16 %v746, %v737
      %v1008 = vpack.c.b16 %v747, %v738
      %v1009 = vpack.c.b16 %v748, %v739
      %v1010 = vpack.c.b16 %v749, %v740
      %v1011 = vpack.c.b16 %v759, %v750
      %v1012 = vpack.c.b16 %v760, %v751
      %v1013 = vpack.c.b16 %v761, %v752
      %v1014 = vpack.c.b16 %v762, %v753
      %v1015 = vpack.c.b16 %v763, %v754
      %v1016 = vpack.c.b16 %v764, %v755
      %v1017 = vpack.c.b16 %v765, %v756
      %v1018 = vpack.c.b16 %v766, %v757
      %v1019 = vpack.c.b16 %v767, %v758
      %v1020 = vpack.c.b16 %v777, %v768
      %v1021 = vpack.c.b16 %v778, %v769
      %v1022 = vpack.c.b16 %v779, %v770
      %v1023 = vpack.c.b16 %v780, %v771
      %v1024 = vpack.c.b16 %v781, %v772
      %v1025 = vpack.c.b16 %v782, %v773
      %v1026 = vpack.c.b16 %v783, %v774
      %v1027 = vpack.c.b16 %v784, %v775
      %v1028 = vpack.c.b16 %v785, %v776
      %v1029 = vpack.c.b16 %v795, %v786
      %v1030 = vpack.c.b16 %v796, %v787
      %v1031 = vpack.c.b16 %v797, %v788
      %v1032 = vpack.c.b16 %v798, %v789
      %v1033 = vpack.c.b16 %v799, %v790
      %v1034 = vpack.c.b16 %v800, %v791
      %v1035 = vpack.c.b16 %v801, %v792
      %v1036 = vpack.c.b16 %v802, %v793
      %v1037 = vpack.c.b16 %v803, %v794
      %v1038 = vpack.c.b16 %v813, %v804
      %v1039 = vpack.c.b16 %v814, %v805
      %v1040 = vpack.c.b16 %v815, %v806
      %v1041 = vpack.c.b16 %v816, %v807
      %v1042 = vpack.c.b16 %v817, %v808
      %v1043 = vpack.c.b16 %v818, %v809
      %v1044 = vpack.c.b16 %v819, %v810
      %v1045 = vpack.c.b16 %v820, %v811
      %v1046 = vpack.c.b16 %v821, %v812
      %v1047 = vpack.c.b16 %v831, %v822
      %v1048 = vpack.c.b16 %v832, %v823
      %v1049 = vpack.c.b16 %v833, %v824
      %v1050 = vpack.c.b16 %v834, %v825
      %v1051 = vpack.c.b16 %v835, %v826
      %v1052 = vpack.c.b16 %v836, %v827
      %v1053 = vpack.c.b16 %v837, %v828
      %v1054 = vpack.c.b16 %v838, %v829
      %v1055 = vpack.c.b16 %v839, %v830
      %v1056 = vpack.c.b16 %v849, %v840
      %v1057 = vpack.c.b16 %v850, %v841
      %v1058 = vpack.c.b16 %v851, %v842
      %v1059 = vpack.c.b16 %v852, %v843
      %v1060 = vpack.c.b16 %v853, %v844
      %v1061 = vpack.c.b16 %v854, %v845
      %v1062 = vpack.c.b16 %v855, %v846
      %v1063 = vpack.c.b16 %v856, %v847
      %v1064 = vpack.c.b16 %v857, %v848
      %v1065 = vpack.c.b16 %v867, %v858
      %v1066 = vpack.c.b16 %v868, %v859
      %v1067 = vpack.c.b16 %v869, %v860
      %v1068 = vpack.c.b16 %v870, %v861
      %v1069 = vpack.c.b16 %v871, %v862
      %v1070 = vpack.c.b16 %v872, %v863
      %v1071 = vpack.c.b16 %v873, %v864
      %v1072 = vpack.c.b16 %v874, %v865
      %v1073 = vpack.c.b16 %v875, %v866
      %v1074 = vpack.c.b16 %v885, %v876
      %v1075 = vpack.c.b16 %v886, %v877
      %v1076 = vpack.c.b16 %v887, %v878
      %v1077 = vpack.c.b16 %v888, %v879
      %v1078 = vpack.c.b16 %v889, %v880
      %v1079 = vpack.c.b16 %v890, %v881
      %v1080 = vpack.c.b16 %v891, %v882
      %v1081 = vpack.c.b16 %v892, %v883
      %v1082 = vpack.c.b16 %v893, %v884
      %v1083 = vpack.c.b16 %v903, %v894
      %v1084 = vpack.c.b16 %v904, %v895
      %v1085 = vpack.c.b16 %v905, %v896
      %v1086 = vpack.c.b16 %v906, %v897
      %v1087 = vpack.c.b16 %v907, %v898
      %v1088 = vpack.c.b16 %v908, %v899
      %v1089 = vpack.c.b16 %v909, %v900
      %v1090 = vpack.c.b16 %v910, %v901
      %v1091 = vpack.c.b16 %v911, %v902
      %v1092 = vpack.c.b16 %v921, %v912
      %v1093 = vpack.c.b16 %v922, %v913
      %v1094 = vpack.c.b16 %v923, %v914
      %v1095 = vpack.c.b16 %v924, %v915
      %v1096 = vpack.c.b16 %v925, %v916
      %v1097 = vpack.c.b16 %v926, %v917
      %v1098 = vpack.c.b16 %v927, %v918
      %v1099 = vpack.c.b16 %v928, %v919
      %v1100 = vpack.c.b16 %v929, %v920
      %v1101 = vpack.c.b16 %v939, %v930
      %v1102 = vpack.c.b16 %v940, %v931
      %v1103 = vpack.c.b16 %v941, %v932
      %v1104 = vpack.c.b16 %v942, %v933
      %v1105 = vpack.c.b16 %v943, %v934
      %v1106 = vpack.c.b16 %v944, %v935
      %v1107 = vpack.c.b16 %v945, %v936
      %v1108 = vpack.c.b16 %v946, %v937
      %v1109 = vpack.c.b16 %v947, %v938
      %v1110 = vpack.c.b16 %v957, %v948
      %v1111 = vpack.c.b16 %v958, %v949
      %v1112 = vpack.c.b16 %v959, %v950
      %v1113 = vpack.c.b16 %v960, %v951
      %v1114 = vpack.c.b16 %v961, %v952
      %v1115 = vpack.c.b16 %v962, %v953
      %v1116 = vpack.c.b16 %v963, %v954
      %v1117 = vpack.c.b16 %v964, %v955
      %v1118 = vpack.c.b16 %v965, %v956
      %v1119 = vpack.c.b16 %v975, %v966
      %v1120 = vpack.c.b16 %v976, %v967
      %v1121 = vpack.c.b16 %v977, %v968
      %v1122 = vpack.c.b16 %v978, %v969
      %v1123 = vpack.c.b16 %v979, %v970
      %v1124 = vpack.c.b16 %v980, %v971
      %v1125 = vpack.c.b16 %v981, %v972
      %v1126 = vpack.c.b16 %v982, %v973
      %v1127 = vpack.c.b16 %v983, %v974
      %v1416 = vunpack.c.l.b16 %v392
      %v1417 = vunpack.c.l.b16 %v393
      %v1418 = vunpack.c.l.b16 %v394
      %v1419 = vunpack.c.l.b16 %v395
      %v1420 = vunpack.c.l.b16 %v396
      %v1421 = vunpack.c.l.b16 %v397
      %v1422 = vunpack.c.l.b16 %v398
      %v1423 = vunpack.c.l.b16 %v399
      %v1424 = vunpack.c.l.b16 %v400
      %v1425 = vunpack.c.l.b16 %v401
      %v1426 = vunpack.c.l.b16 %v402
      %v1427 = vunpack.c.l.b16 %v403
      %v1428 = vunpack.c.l.b16 %v404
      %v1429 = vunpack.c.l.b16 %v405
      %v1430 = vunpack.c.l.b16 %v406
      %v1431 = vunpack.c.l.b16 %v407
      %v1432 = vunpack.c.l.b16 %v408
      %v1433 = vunpack.c.l.b16 %v409
      %v1434 = vunpack.c.l.b16 %v410
      %v1435 = vunpack.c.l.b16 %v411
      %v1436 = vunpack.c.l.b16 %v412
      %v1437 = vunpack.c.l.b16 %v413
      %v1438 = vunpack.c.l.b16 %v414
      %v1439 = vunpack.c.l.b16 %v415
      %v1440 = vunpack.c.l.b16 %v416
      %v1441 = vunpack.c.l.b16 %v417
      %v1442 = vunpack.c.l.b16 %v418
      %v1443 = vunpack.c.l.b16 %v419
      %v1444 = vunpack.c.l.b16 %v420
      %v1445 = vunpack.c.l.b16 %v421
      %v1446 = vunpack.c.l.b16 %v422
      %v1447 = vunpack.c.l.b16 %v423
      %v1448 = vunpack.c.l.b16 %v424
      %v1449 = vunpack.c.l.b16 %v425
      %v1450 = vunpack.c.l.b16 %v426
      %v1451 = vunpack.c.l.b16 %v427
      %v1452 = vunpack.c.l.b16 %v428
      %v1453 = vunpack.c.l.b16 %v429
      %v1454 = vunpack.c.l.b16 %v430
      %v1455 = vunpack.c.l.b16 %v431
      %v1456 = vunpack.c.l.b16 %v432
      %v1457 = vunpack.c.l.b16 %v433
      %v1458 = vunpack.c.l.b16 %v434
      %v1459 = vunpack.c.l.b16 %v435
      %v1460 = vunpack.c.l.b16 %v436
      %v1461 = vunpack.c.l.b16 %v437
      %v1462 = vunpack.c.l.b16 %v438
      %v1463 = vunpack.c.l.b16 %v439
      %v1464 = vunpack.c.l.b16 %v440
      %v1465 = vunpack.c.l.b16 %v441
      %v1466 = vunpack.c.l.b16 %v442
      %v1467 = vunpack.c.l.b16 %v443
      %v1468 = vunpack.c.l.b16 %v444
      %v1469 = vunpack.c.l.b16 %v445
      %v1470 = vunpack.c.l.b16 %v446
      %v1471 = vunpack.c.l.b16 %v447
      %v1472 = vunpack.c.l.b16 %v448
      %v1473 = vunpack.c.l.b16 %v449
      %v1474 = vunpack.c.l.b16 %v450
      %v1475 = vunpack.c.l.b16 %v451
      %v1476 = vunpack.c.l.b16 %v452
      %v1477 = vunpack.c.l.b16 %v453
      %v1478 = vunpack.c.l.b16 %v454
      %v1479 = vunpack.c.l.b16 %v455
      %v1480 = vunpack.c.l.b16 %v456
      %v1481 = vunpack.c.l.b16 %v457
      %v1482 = vunpack.c.l.b16 %v458
      %v1483 = vunpack.c.l.b16 %v459
      %v1484 = vunpack.c.l.b16 %v460
      %v1485 = vunpack.c.l.b16 %v461
      %v1486 = vunpack.c.l.b16 %v462
      %v1487 = vunpack.c.l.b16 %v463
      %v1488 = vunpack.c.l.b16 %v464
      %v1489 = vunpack.c.l.b16 %v465
      %v1490 = vunpack.c.l.b16 %v466
      %v1491 = vunpack.c.l.b16 %v467
      %v1492 = vunpack.c.l.b16 %v468
      %v1493 = vunpack.c.l.b16 %v469
      %v1494 = vunpack.c.l.b16 %v470
      %v1495 = vunpack.c.l.b16 %v471
      %v1496 = vunpack.c.l.b16 %v472
      %v1497 = vunpack.c.l.b16 %v473
      %v1498 = vunpack.c.l.b16 %v474
      %v1499 = vunpack.c.l.b16 %v475
      %v1500 = vunpack.c.l.b16 %v476
      %v1501 = vunpack.c.l.b16 %v477
      %v1502 = vunpack.c.l.b16 %v478
      %v1503 = vunpack.c.l.b16 %v479
      %v1504 = vunpack.c.l.b16 %v480
      %v1505 = vunpack.c.l.b16 %v481
      %v1506 = vunpack.c.l.b16 %v482
      %v1507 = vunpack.c.l.b16 %v483
      %v1508 = vunpack.c.l.b16 %v484
      %v1509 = vunpack.c.l.b16 %v485
      %v1510 = vunpack.c.l.b16 %v486
      %v1511 = vunpack.c.l.b16 %v487
      %v1512 = vunpack.c.l.b16 %v488
      %v1513 = vunpack.c.l.b16 %v489
      %v1514 = vunpack.c.l.b16 %v490
      %v1515 = vunpack.c.l.b16 %v491
      %v1516 = vunpack.c.l.b16 %v492
      %v1517 = vunpack.c.l.b16 %v493
      %v1518 = vunpack.c.l.b16 %v494
      %v1519 = vunpack.c.l.b16 %v495
      %v1520 = vunpack.c.l.b16 %v496
      %v1521 = vunpack.c.l.b16 %v497
      %v1522 = vunpack.c.l.b16 %v498
      %v1523 = vunpack.c.l.b16 %v499
      %v1524 = vunpack.c.l.b16 %v500
      %v1525 = vunpack.c.l.b16 %v501
      %v1526 = vunpack.c.l.b16 %v502
      %v1527 = vunpack.c.l.b16 %v503
      %v1528 = vunpack.c.l.b16 %v504
      %v1529 = vunpack.c.l.b16 %v505
      %v1530 = vunpack.c.l.b16 %v506
      %v1531 = vunpack.c.l.b16 %v507
      %v1532 = vunpack.c.l.b16 %v508
      %v1533 = vunpack.c.l.b16 %v509
      %v1534 = vunpack.c.l.b16 %v510
      %v1535 = vunpack.c.l.b16 %v511
      %v1536 = vunpack.c.l.b16 %v512
      %v1537 = vunpack.c.l.b16 %v513
      %v1538 = vunpack.c.l.b16 %v514
      %v1539 = vunpack.c.l.b16 %v515
      %v1540 = vunpack.c.l.b16 %v516
      %v1541 = vunpack.c.l.b16 %v517
      %v1542 = vunpack.c.l.b16 %v518
      %v1543 = vunpack.c.l.b16 %v519
      %v1544 = vunpack.c.l.b16 %v520
      %v1545 = vunpack.c.l.b16 %v521
      %v1546 = vunpack.c.l.b16 %v522
      %v1547 = vunpack.c.l.b16 %v523
      %v1548 = vunpack.c.l.b16 %v524
      %v1549 = vunpack.c.l.b16 %v525
      %v1550 = vunpack.c.l.b16 %v526
      %v1551 = vunpack.c.l.b16 %v527
      %v1552 = vunpack.c.l.b16 %v528
      %v1553 = vunpack.c.l.b16 %v529
      %v1554 = vunpack.c.l.b16 %v530
      %v1555 = vunpack.c.l.b16 %v531
      %v1556 = vunpack.c.l.b16 %v532
      %v1557 = vunpack.c.l.b16 %v533
      %v1558 = vunpack.c.l.b16 %v534
      %v1559 = vunpack.c.l.b16 %v535
      %v1560 = vpack.c.b16 %v1417, %v1416
      %v1561 = vpack.c.b16 %v1419, %v1418
      %v1562 = vpack.c.b16 %v1421, %v1420
      %v1563 = vpack.c.b16 %v1423, %v1422
      %v1564 = vpack.c.b16 %v1425, %v1424
      %v1565 = vpack.c.b16 %v1427, %v1426
      %v1566 = vpack.c.b16 %v1429, %v1428
      %v1567 = vpack.c.b16 %v1431, %v1430
      %v1568 = vpack.c.b16 %v1433, %v1432
      %v1569 = vpack.c.b16 %v1435, %v1434
      %v1570 = vpack.c.b16 %v1437, %v1436
      %v1571 = vpack.c.b16 %v1439, %v1438
      %v1572 = vpack.c.b16 %v1441, %v1440
      %v1573 = vpack.c.b16 %v1443, %v1442
      %v1574 = vpack.c.b16 %v1445, %v1444
      %v1575 = vpack.c.b16 %v1447, %v1446
      %v1576 = vpack.c.b16 %v1449, %v1448
      %v1577 = vpack.c.b16 %v1451, %v1450
      %v1578 = vpack.c.b16 %v1453, %v1452
      %v1579 = vpack.c.b16 %v1455, %v1454
      %v1580 = vpack.c.b16 %v1457, %v1456
      %v1581 = vpack.c.b16 %v1459, %v1458
      %v1582 = vpack.c.b16 %v1461, %v1460
      %v1583 = vpack.c.b16 %v1463, %v1462
      %v1584 = vpack.c.b16 %v1465, %v1464
      %v1585 = vpack.c.b16 %v1467, %v1466
      %v1586 = vpack.c.b16 %v1469, %v1468
      %v1587 = vpack.c.b16 %v1471, %v1470
      %v1588 = vpack.c.b16 %v1473, %v1472
      %v1589 = vpack.c.b16 %v1475, %v1474
      %v1590 = vpack.c.b16 %v1477, %v1476
      %v1591 = vpack.c.b16 %v1479, %v1478
      %v1592 = vpack.c.b16 %v1481, %v1480
      %v1593 = vpack.c.b16 %v1483, %v1482
      %v1594 = vpack.c.b16 %v1485, %v1484
      %v1595 = vpack.c.b16 %v1487, %v1486
      %v1596 = vpack.c.b16 %v1489, %v1488
      %v1597 = vpack.c.b16 %v1491, %v1490
      %v1598 = vpack.c.b16 %v1493, %v1492
      %v1599 = vpack.c.b16 %v1495, %v1494
      %v1600 = vpack.c.b16 %v1497, %v1496
      %v1601 = vpack.c.b16 %v1499, %v1498
      %v1602 = vpack.c.b16 %v1501, %v1500
      %v1603 = vpack.c.b16 %v1503, %v1502
      %v1604 = vpack.c.b16 %v1505, %v1504
      %v1605 = vpack.c.b16 %v1507, %v1506
      %v1606 = vpack.c.b16 %v1509, %v1508
      %v1607 = vpack.c.b16 %v1511, %v1510
      %v1608 = vpack.c.b16 %v1513, %v1512
      %v1609 = vpack.c.b16 %v1515, %v1514
      %v1610 = vpack.c.b16 %v1517, %v1516
      %v1611 = vpack.c.b16 %v1519, %v1518
      %v1612 = vpack.c.b16 %v1521, %v1520
      %v1613 = vpack.c.b16 %v1523, %v1522
      %v1614 = vpack.c.b16 %v1525, %v1524
      %v1615 = vpack.c.b16 %v1527, %v1526
      %v1616 = vpack.c.b16 %v1529, %v1528
      %v1617 = vpack.c.b16 %v1531, %v1530
      %v1618 = vpack.c.b16 %v1533, %v1532
      %v1619 = vpack.c.b16 %v1535, %v1534
      %v1620 = vpack.c.b16 %v1537, %v1536
      %v1621 = vpack.c.b16 %v1539, %v1538
      %v1622 = vpack.c.b16 %v1541, %v1540
      %v1623 = vpack.c.b16 %v1543, %v1542
      %v1624 = vpack.c.b16 %v1545, %v1544
      %v1625 = vpack.c.b16 %v1547, %v1546
      %v1626 = vpack.c.b16 %v1549, %v1548
      %v1627 = vpack.c.b16 %v1551, %v1550
      %v1628 = vpack.c.b16 %v1553, %v1552
      %v1629 = vpack.c.b16 %v1555, %v1554
      %v1630 = vpack.c.b16 %v1557, %v1556
      %v1631 = vpack.c.b16 %v1559, %v1558
      %1704 = vmatprep.subr.bf16.mxu0 0
      %1705 = vmatpush1.bf16.msra.mxu0 %v1560
      %1706 = vmatprep.subr.bf16.mxu0 0
      %1707 = vmatpush1.bf16.msra.mxu0 %v1561
      %1708 = vmatprep.subr.bf16.mxu0 0
      %1709 = vmatpush1.bf16.msra.mxu0 %v1562
      %1710 = vmatprep.subr.bf16.mxu0 0
      %1711 = vmatpush1.bf16.msra.mxu0 %v1563
      %1712 = vmatprep.subr.bf16.mxu0 0
      %1713 = vmatpush1.bf16.msra.mxu0 %v1564
      %1714 = vmatprep.subr.bf16.mxu0 0
      %1715 = vmatpush1.bf16.msra.mxu0 %v1565
      %1716 = vmatprep.subr.bf16.mxu0 0
      %1717 = vmatpush1.bf16.msra.mxu0 %v1566
      %1718 = vmatprep.subr.bf16.mxu0 0
      %1719 = vmatpush1.bf16.msra.mxu0 %v1567
      %1720 = vmatprep.subr.bf16.mxu0 0
      %1721 = vmatpush1.bf16.msra.mxu0 %v1568
      %1722 = vmatprep.subr.bf16.mxu0 0
      %1723 = vmatpush1.bf16.msra.mxu0 %v1569
      %1724 = vmatprep.subr.bf16.mxu0 0
      %1725 = vmatpush1.bf16.msra.mxu0 %v1570
      %1726 = vmatprep.subr.bf16.mxu0 0
      %1727 = vmatpush1.bf16.msra.mxu0 %v1571
      %1728 = vmatprep.subr.bf16.mxu0 0
      %1729 = vmatpush1.bf16.msra.mxu0 %v1572
      %1730 = vmatprep.subr.bf16.mxu0 0
      %1731 = vmatpush1.bf16.msra.mxu0 %v1573
      %1732 = vmatprep.subr.bf16.mxu0 0
      %1733 = vmatpush1.bf16.msra.mxu0 %v1574
      %1734 = vmatprep.subr.bf16.mxu0 0
      %1735 = vmatpush1.bf16.msra.mxu0 %v1575
      %1736 = vmatprep.mubr.bf16.mxu0 %v985
      %1737 = vmatmul.mubr.bf16.gmra.mrb[0].mxu0 %v984
      %v1738 = vpop.f32.mrb[0].mxu0
      %v1739 = vadd.f32 0.0, %v1738
      %v1740 = vpop.f32.mrb[0].mxu0
      %v1741 = vpop.f32.mrb[0].mxu0
      %v1742 = vadd.f32 0.0, %v1741
      %v1743 = vpop.f32.mrb[0].mxu0
      %1744 = vmatprep.mubr.bf16.mxu0 %v994
      %1745 = vmatmul.mubr.bf16.gmra.mrb[0].mxu0 %v993
      %v1746 = vpop.f32.mrb[0].mxu0
      %v1747 = vadd.f32 0.0, %v1746
      %v1748 = vpop.f32.mrb[0].mxu0
      %v1749 = vpop.f32.mrb[0].mxu0
      %v1750 = vadd.f32 0.0, %v1749
      %v1751 = vpop.f32.mrb[0].mxu0
      %1752 = vmatprep.mubr.bf16.mxu0 %v1003
      %1753 = vmatmul.mubr.bf16.gmra.mrb[0].mxu0 %v1002
      %v1754 = vpop.f32.mrb[0].mxu0
      %v1755 = vadd.f32 0.0, %v1754
      %v1756 = vpop.f32.mrb[0].mxu0
      %v1757 = vpop.f32.mrb[0].mxu0
      %v1758 = vadd.f32 0.0, %v1757
      %v1759 = vpop.f32.mrb[0].mxu0
      %1760 = vmatprep.mubr.bf16.mxu0 %v1012
      %1761 = vmatmul.mubr.bf16.gmra.mrb[0].mxu0 %v1011
      %v1762 = vpop.f32.mrb[0].mxu0
      %v1763 = vadd.f32 0.0, %v1762
      %v1764 = vpop.f32.mrb[0].mxu0
      %v1765 = vpop.f32.mrb[0].mxu0
      %v1766 = vadd.f32 0.0, %v1765
      %v1767 = vpop.f32.mrb[0].mxu0
      %1768 = vmatprep.mubr.bf16.mxu0 %v1021
      %1769 = vmatmul.mubr.bf16.gmra.mrb[0].mxu0 %v1020
      %v1770 = vpop.f32.mrb[0].mxu0
      %v1771 = vadd.f32 0.0, %v1770
      %v1772 = vpop.f32.mrb[0].mxu0
      %v1773 = vpop.f32.mrb[0].mxu0
      %v1774 = vadd.f32 0.0, %v1773
      %v1775 = vpop.f32.mrb[0].mxu0
      %1776 = vmatprep.mubr.bf16.mxu0 %v1030
      %1777 = vmatmul.mubr.bf16.gmra.mrb[0].mxu0 %v1029
      %v1778 = vpop.f32.mrb[0].mxu0
      %v1779 = vadd.f32 0.0, %v1778
      %v1780 = vpop.f32.mrb[0].mxu0
      %v1781 = vpop.f32.mrb[0].mxu0
      %v1782 = vadd.f32 0.0, %v1781
      %v1783 = vpop.f32.mrb[0].mxu0
      %1784 = vmatprep.mubr.bf16.mxu0 %v1039
      %1785 = vmatmul.mubr.bf16.gmra.mrb[0].mxu0 %v1038
      %v1786 = vpop.f32.mrb[0].mxu0
      %v1787 = vadd.f32 0.0, %v1786
      %v1788 = vpop.f32.mrb[0].mxu0
      %v1789 = vpop.f32.mrb[0].mxu0
      %v1790 = vadd.f32 0.0, %v1789
      %v1791 = vpop.f32.mrb[0].mxu0
      %1792 = vmatprep.mubr.bf16.mxu0 %v1048
      %1793 = vmatmul.mubr.bf16.gmra.mrb[0].mxu0 %v1047
      %v1794 = vpop.f32.mrb[0].mxu0
      %v1795 = vadd.f32 0.0, %v1794
      %v1796 = vpop.f32.mrb[0].mxu0
      %v1797 = vpop.f32.mrb[0].mxu0
      %v1798 = vadd.f32 0.0, %v1797
      %v1799 = vpop.f32.mrb[0].mxu0
      %1800 = vmatprep.mubr.bf16.mxu0 %v1057
      %1801 = vmatmul.mubr.bf16.gmra.mrb[0].mxu0 %v1056
      %v1802 = vpop.f32.mrb[0].mxu0
      %v1803 = vadd.f32 0.0, %v1802
      %v1804 = vpop.f32.mrb[0].mxu0
      %v1805 = vpop.f32.mrb[0].mxu0
      %v1806 = vadd.f32 0.0, %v1805
      %v1807 = vpop.f32.mrb[0].mxu0
      %1808 = vmatprep.mubr.bf16.mxu0 %v1066
      %1809 = vmatmul.mubr.bf16.gmra.mrb[0].mxu0 %v1065
      %v1810 = vpop.f32.mrb[0].mxu0
      %v1811 = vadd.f32 0.0, %v1810
      %v1812 = vpop.f32.mrb[0].mxu0
      %v1813 = vpop.f32.mrb[0].mxu0
      %v1814 = vadd.f32 0.0, %v1813
      %v1815 = vpop.f32.mrb[0].mxu0
      %1816 = vmatprep.mubr.bf16.mxu0 %v1075
      %1817 = vmatmul.mubr.bf16.gmra.mrb[0].mxu0 %v1074
      %v1818 = vpop.f32.mrb[0].mxu0
      %v1819 = vadd.f32 0.0, %v1818
      %v1820 = vpop.f32.mrb[0].mxu0
      %v1821 = vpop.f32.mrb[0].mxu0
      %v1822 = vadd.f32 0.0, %v1821
      %v1823 = vpop.f32.mrb[0].mxu0
      %1824 = vmatprep.mubr.bf16.mxu0 %v1084
      %1825 = vmatmul.mubr.bf16.gmra.mrb[0].mxu0 %v1083
      %v1826 = vpop.f32.mrb[0].mxu0
      %v1827 = vadd.f32 0.0, %v1826
      %v1828 = vpop.f32.mrb[0].mxu0
      %v1829 = vpop.f32.mrb[0].mxu0
      %v1830 = vadd.f32 0.0, %v1829
      %v1831 = vpop.f32.mrb[0].mxu0
      %1832 = vmatprep.mubr.bf16.mxu0 %v1093
      %1833 = vmatmul.mubr.bf16.gmra.mrb[0].mxu0 %v1092
      %v1834 = vpop.f32.mrb[0].mxu0
      %v1835 = vadd.f32 0.0, %v1834
      %v1836 = vpop.f32.mrb[0].mxu0
      %v1837 = vpop.f32.mrb[0].mxu0
      %v1838 = vadd.f32 0.0, %v1837
      %v1839 = vpop.f32.mrb[0].mxu0
      %1840 = vmatprep.mubr.bf16.mxu0 %v1102
      %1841 = vmatmul.mubr.bf16.gmra.mrb[0].mxu0 %v1101
      %v1842 = vpop.f32.mrb[0].mxu0
      %v1843 = vadd.f32 0.0, %v1842
      %v1844 = vpop.f32.mrb[0].mxu0
      %v1845 = vpop.f32.mrb[0].mxu0
      %v1846 = vadd.f32 0.0, %v1845
      %v1847 = vpop.f32.mrb[0].mxu0
      %1848 = vmatprep.mubr.bf16.mxu0 %v1111
      %1849 = vmatmul.mubr.bf16.gmra.mrb[0].mxu0 %v1110
      %v1850 = vpop.f32.mrb[0].mxu0
      %v1851 = vadd.f32 0.0, %v1850
      %v1852 = vpop.f32.mrb[0].mxu0
      %v1853 = vpop.f32.mrb[0].mxu0
      %v1854 = vadd.f32 0.0, %v1853
      %v1855 = vpop.f32.mrb[0].mxu0
      %1856 = vmatprep.mubr.bf16.mxu0 %v1120
      %1857 = vmatmul.mubr.bf16.gmra.mrb[0].mxu0 %v1119
      %v1858 = vpop.f32.mrb[0].mxu0
      %v1859 = vadd.f32 0.0, %v1858
      %v1860 = vpop.f32.mrb[0].mxu0
      %v1861 = vpop.f32.mrb[0].mxu0
      %v1862 = vadd.f32 0.0, %v1861
      %v1863 = vpop.f32.mrb[0].mxu0
      %1864 = vdwg.mxu0
      %1865 = vmatprep.subr.bf16.mxu0 0
      %1866 = vmatpush1.bf16.msra.mxu0 %v1576
      %1867 = vmatprep.subr.bf16.mxu0 0
      %1868 = vmatpush1.bf16.msra.mxu0 %v1577
      %1869 = vmatprep.subr.bf16.mxu0 0
      %1870 = vmatpush1.bf16.msra.mxu0 %v1578
      %1871 = vmatprep.subr.bf16.mxu0 0
      %1872 = vmatpush1.bf16.msra.mxu0 %v1579
      %1873 = vmatprep.subr.bf16.mxu0 0
      %1874 = vmatpush1.bf16.msra.mxu0 %v1580
      %1875 = vmatprep.subr.bf16.mxu0 0
      %1876 = vmatpush1.bf16.msra.mxu0 %v1581
      %1877 = vmatprep.subr.bf16.mxu0 0
      %1878 = vmatpush1.bf16.msra.mxu0 %v1582
      %1879 = vmatprep.subr.bf16.mxu0 0
      %1880 = vmatpush1.bf16.msra.mxu0 %v1583
      %1881 = vmatprep.subr.bf16.mxu0 0
      %1882 = vmatpush1.bf16.msra.mxu0 %v1584
      %1883 = vmatprep.subr.bf16.mxu0 0
      %1884 = vmatpush1.bf16.msra.mxu0 %v1585
      %1885 = vmatprep.subr.bf16.mxu0 0
      %1886 = vmatpush1.bf16.msra.mxu0 %v1586
      %1887 = vmatprep.subr.bf16.mxu0 0
      %1888 = vmatpush1.bf16.msra.mxu0 %v1587
      %1889 = vmatprep.subr.bf16.mxu0 0
      %1890 = vmatpush1.bf16.msra.mxu0 %v1588
      %1891 = vmatprep.subr.bf16.mxu0 0
      %1892 = vmatpush1.bf16.msra.mxu0 %v1589
      %1893 = vmatprep.subr.bf16.mxu0 0
      %1894 = vmatpush1.bf16.msra.mxu0 %v1590
      %1895 = vmatprep.subr.bf16.mxu0 0
      %1896 = vmatpush1.bf16.msra.mxu0 %v1591
      %1897 = vmatprep.mubr.bf16.mxu0 %v987
      %1898 = vmatmul.mubr.bf16.gmra.mrb[0].mxu0 %v986
      %v1899 = vpop.f32.mrb[0].mxu0
      %v1900 = vadd.f32 %v1739, %v1899
      %v1901 = vpop.f32.mrb[0].mxu0
      %v1902 = vpop.f32.mrb[0].mxu0
      %v1903 = vadd.f32 %v1742, %v1902
      %v1904 = vpop.f32.mrb[0].mxu0
      %1905 = vmatprep.mubr.bf16.mxu0 %v996
      %1906 = vmatmul.mubr.bf16.gmra.mrb[0].mxu0 %v995
      %v1907 = vpop.f32.mrb[0].mxu0
      %v1908 = vadd.f32 %v1747, %v1907
      %v1909 = vpop.f32.mrb[0].mxu0
      %v1910 = vpop.f32.mrb[0].mxu0
      %v1911 = vadd.f32 %v1750, %v1910
      %v1912 = vpop.f32.mrb[0].mxu0
      %1913 = vmatprep.mubr.bf16.mxu0 %v1005
      %1914 = vmatmul.mubr.bf16.gmra.mrb[0].mxu0 %v1004
      %v1915 = vpop.f32.mrb[0].mxu0
      %v1916 = vadd.f32 %v1755, %v1915
      %v1917 = vpop.f32.mrb[0].mxu0
      %v1918 = vpop.f32.mrb[0].mxu0
      %v1919 = vadd.f32 %v1758, %v1918
      %v1920 = vpop.f32.mrb[0].mxu0
      %1921 = vmatprep.mubr.bf16.mxu0 %v1014
      %1922 = vmatmul.mubr.bf16.gmra.mrb[0].mxu0 %v1013
      %v1923 = vpop.f32.mrb[0].mxu0
      %v1924 = vadd.f32 %v1763, %v1923
      %v1925 = vpop.f32.mrb[0].mxu0
      %v1926 = vpop.f32.mrb[0].mxu0
      %v1927 = vadd.f32 %v1766, %v1926
      %v1928 = vpop.f32.mrb[0].mxu0
      %1929 = vmatprep.mubr.bf16.mxu0 %v1023
      %1930 = vmatmul.mubr.bf16.gmra.mrb[0].mxu0 %v1022
      %v1931 = vpop.f32.mrb[0].mxu0
      %v1932 = vadd.f32 %v1771, %v1931
      %v1933 = vpop.f32.mrb[0].mxu0
      %v1934 = vpop.f32.mrb[0].mxu0
      %v1935 = vadd.f32 %v1774, %v1934
      %v1936 = vpop.f32.mrb[0].mxu0
      %1937 = vmatprep.mubr.bf16.mxu0 %v1032
      %1938 = vmatmul.mubr.bf16.gmra.mrb[0].mxu0 %v1031
      %v1939 = vpop.f32.mrb[0].mxu0
      %v1940 = vadd.f32 %v1779, %v1939
      %v1941 = vpop.f32.mrb[0].mxu0
      %v1942 = vpop.f32.mrb[0].mxu0
      %v1943 = vadd.f32 %v1782, %v1942
      %v1944 = vpop.f32.mrb[0].mxu0
      %1945 = vmatprep.mubr.bf16.mxu0 %v1041
      %1946 = vmatmul.mubr.bf16.gmra.mrb[0].mxu0 %v1040
      %v1947 = vpop.f32.mrb[0].mxu0
      %v1948 = vadd.f32 %v1787, %v1947
      %v1949 = vpop.f32.mrb[0].mxu0
      %v1950 = vpop.f32.mrb[0].mxu0
      %v1951 = vadd.f32 %v1790, %v1950
      %v1952 = vpop.f32.mrb[0].mxu0
      %1953 = vmatprep.mubr.bf16.mxu0 %v1050
      %1954 = vmatmul.mubr.bf16.gmra.mrb[0].mxu0 %v1049
      %v1955 = vpop.f32.mrb[0].mxu0
      %v1956 = vadd.f32 %v1795, %v1955
      %v1957 = vpop.f32.mrb[0].mxu0
      %v1958 = vpop.f32.mrb[0].mxu0
      %v1959 = vadd.f32 %v1798, %v1958
      %v1960 = vpop.f32.mrb[0].mxu0
      %1961 = vmatprep.mubr.bf16.mxu0 %v1059
      %1962 = vmatmul.mubr.bf16.gmra.mrb[0].mxu0 %v1058
      %v1963 = vpop.f32.mrb[0].mxu0
      %v1964 = vadd.f32 %v1803, %v1963
      %v1965 = vpop.f32.mrb[0].mxu0
      %v1966 = vpop.f32.mrb[0].mxu0
      %v1967 = vadd.f32 %v1806, %v1966
      %v1968 = vpop.f32.mrb[0].mxu0
      %1969 = vmatprep.mubr.bf16.mxu0 %v1068
      %1970 = vmatmul.mubr.bf16.gmra.mrb[0].mxu0 %v1067
      %v1971 = vpop.f32.mrb[0].mxu0
      %v1972 = vadd.f32 %v1811, %v1971
      %v1973 = vpop.f32.mrb[0].mxu0
      %v1974 = vpop.f32.mrb[0].mxu0
      %v1975 = vadd.f32 %v1814, %v1974
      %v1976 = vpop.f32.mrb[0].mxu0
      %1977 = vmatprep.mubr.bf16.mxu0 %v1077
      %1978 = vmatmul.mubr.bf16.gmra.mrb[0].mxu0 %v1076
      %v1979 = vpop.f32.mrb[0].mxu0
      %v1980 = vadd.f32 %v1819, %v1979
      %v1981 = vpop.f32.mrb[0].mxu0
      %v1982 = vpop.f32.mrb[0].mxu0
      %v1983 = vadd.f32 %v1822, %v1982
      %v1984 = vpop.f32.mrb[0].mxu0
      %1985 = vmatprep.mubr.bf16.mxu0 %v1086
      %1986 = vmatmul.mubr.bf16.gmra.mrb[0].mxu0 %v1085
      %v1987 = vpop.f32.mrb[0].mxu0
      %v1988 = vadd.f32 %v1827, %v1987
      %v1989 = vpop.f32.mrb[0].mxu0
      %v1990 = vpop.f32.mrb[0].mxu0
      %v1991 = vadd.f32 %v1830, %v1990
      %v1992 = vpop.f32.mrb[0].mxu0
      %1993 = vmatprep.mubr.bf16.mxu0 %v1095
      %1994 = vmatmul.mubr.bf16.gmra.mrb[0].mxu0 %v1094
      %v1995 = vpop.f32.mrb[0].mxu0
      %v1996 = vadd.f32 %v1835, %v1995
      %v1997 = vpop.f32.mrb[0].mxu0
      %v1998 = vpop.f32.mrb[0].mxu0
      %v1999 = vadd.f32 %v1838, %v1998
      %v2000 = vpop.f32.mrb[0].mxu0
      %2001 = vmatprep.mubr.bf16.mxu0 %v1104
      %2002 = vmatmul.mubr.bf16.gmra.mrb[0].mxu0 %v1103
      %v2003 = vpop.f32.mrb[0].mxu0
      %v2004 = vadd.f32 %v1843, %v2003
      %v2005 = vpop.f32.mrb[0].mxu0
      %v2006 = vpop.f32.mrb[0].mxu0
      %v2007 = vadd.f32 %v1846, %v2006
      %v2008 = vpop.f32.mrb[0].mxu0
      %2009 = vmatprep.mubr.bf16.mxu0 %v1113
      %2010 = vmatmul.mubr.bf16.gmra.mrb[0].mxu0 %v1112
      %v2011 = vpop.f32.mrb[0].mxu0
      %v2012 = vadd.f32 %v1851, %v2011
      %v2013 = vpop.f32.mrb[0].mxu0
      %v2014 = vpop.f32.mrb[0].mxu0
      %v2015 = vadd.f32 %v1854, %v2014
      %v2016 = vpop.f32.mrb[0].mxu0
      %2017 = vmatprep.mubr.bf16.mxu0 %v1122
      %2018 = vmatmul.mubr.bf16.gmra.mrb[0].mxu0 %v1121
      %v2019 = vpop.f32.mrb[0].mxu0
      %v2020 = vadd.f32 %v1859, %v2019
      %v2021 = vpop.f32.mrb[0].mxu0
      %v2022 = vpop.f32.mrb[0].mxu0
      %v2023 = vadd.f32 %v1862, %v2022
      %v2024 = vpop.f32.mrb[0].mxu0
      %2025 = vdwg.mxu0
      %2026 = vmatprep.subr.bf16.mxu0 0
      %2027 = vmatpush1.bf16.msra.mxu0 %v1592
      %2028 = vmatprep.subr.bf16.mxu0 0
      %2029 = vmatpush1.bf16.msra.mxu0 %v1593
      %2030 = vmatprep.subr.bf16.mxu0 0
      %2031 = vmatpush1.bf16.msra.mxu0 %v1594
      %2032 = vmatprep.subr.bf16.mxu0 0
      %2033 = vmatpush1.bf16.msra.mxu0 %v1595
      %2034 = vmatprep.subr.bf16.mxu0 0
      %2035 = vmatpush1.bf16.msra.mxu0 %v1596
      %2036 = vmatprep.subr.bf16.mxu0 0
      %2037 = vmatpush1.bf16.msra.mxu0 %v1597
      %2038 = vmatprep.subr.bf16.mxu0 0
      %2039 = vmatpush1.bf16.msra.mxu0 %v1598
      %2040 = vmatprep.subr.bf16.mxu0 0
      %2041 = vmatpush1.bf16.msra.mxu0 %v1599
      %2042 = vmatprep.subr.bf16.mxu0 0
      %2043 = vmatpush1.bf16.msra.mxu0 %v1600
      %2044 = vmatprep.subr.bf16.mxu0 0
      %2045 = vmatpush1.bf16.msra.mxu0 %v1601
      %2046 = vmatprep.subr.bf16.mxu0 0
      %2047 = vmatpush1.bf16.msra.mxu0 %v1602
      %2048 = vmatprep.subr.bf16.mxu0 0
      %2049 = vmatpush1.bf16.msra.mxu0 %v1603
      %2050 = vmatprep.subr.bf16.mxu0 0
      %2051 = vmatpush1.bf16.msra.mxu0 %v1604
      %2052 = vmatprep.subr.bf16.mxu0 0
      %2053 = vmatpush1.bf16.msra.mxu0 %v1605
      %2054 = vmatprep.subr.bf16.mxu0 0
      %2055 = vmatpush1.bf16.msra.mxu0 %v1606
      %2056 = vmatprep.subr.bf16.mxu0 0
      %2057 = vmatpush1.bf16.msra.mxu0 %v1607
      %2058 = vmatprep.mubr.bf16.mxu0 %v989
      %2059 = vmatmul.mubr.bf16.gmra.mrb[0].mxu0 %v988
      %v2060 = vpop.f32.mrb[0].mxu0
      %v2061 = vadd.f32 %v1900, %v2060
      %v2062 = vpop.f32.mrb[0].mxu0
      %v2063 = vpop.f32.mrb[0].mxu0
      %v2064 = vadd.f32 %v1903, %v2063
      %v2065 = vpop.f32.mrb[0].mxu0
      %2066 = vmatprep.mubr.bf16.mxu0 %v998
      %2067 = vmatmul.mubr.bf16.gmra.mrb[0].mxu0 %v997
      %v2068 = vpop.f32.mrb[0].mxu0
      %v2069 = vadd.f32 %v1908, %v2068
      %v2070 = vpop.f32.mrb[0].mxu0
      %v2071 = vpop.f32.mrb[0].mxu0
      %v2072 = vadd.f32 %v1911, %v2071
      %v2073 = vpop.f32.mrb[0].mxu0
      %2074 = vmatprep.mubr.bf16.mxu0 %v1007
      %2075 = vmatmul.mubr.bf16.gmra.mrb[0].mxu0 %v1006
      %v2076 = vpop.f32.mrb[0].mxu0
      %v2077 = vadd.f32 %v1916, %v2076
      %v2078 = vpop.f32.mrb[0].mxu0
      %v2079 = vpop.f32.mrb[0].mxu0
      %v2080 = vadd.f32 %v1919, %v2079
      %v2081 = vpop.f32.mrb[0].mxu0
      %2082 = vmatprep.mubr.bf16.mxu0 %v1016
      %2083 = vmatmul.mubr.bf16.gmra.mrb[0].mxu0 %v1015
      %v2084 = vpop.f32.mrb[0].mxu0
      %v2085 = vadd.f32 %v1924, %v2084
      %v2086 = vpop.f32.mrb[0].mxu0
      %v2087 = vpop.f32.mrb[0].mxu0
      %v2088 = vadd.f32 %v1927, %v2087
      %v2089 = vpop.f32.mrb[0].mxu0
      %2090 = vmatprep.mubr.bf16.mxu0 %v1025
      %2091 = vmatmul.mubr.bf16.gmra.mrb[0].mxu0 %v1024
      %v2092 = vpop.f32.mrb[0].mxu0
      %v2093 = vadd.f32 %v1932, %v2092
      %v2094 = vpop.f32.mrb[0].mxu0
      %v2095 = vpop.f32.mrb[0].mxu0
      %v2096 = vadd.f32 %v1935, %v2095
      %v2097 = vpop.f32.mrb[0].mxu0
      %2098 = vmatprep.mubr.bf16.mxu0 %v1034
      %2099 = vmatmul.mubr.bf16.gmra.mrb[0].mxu0 %v1033
      %v2100 = vpop.f32.mrb[0].mxu0
      %v2101 = vadd.f32 %v1940, %v2100
      %v2102 = vpop.f32.mrb[0].mxu0
      %v2103 = vpop.f32.mrb[0].mxu0
      %v2104 = vadd.f32 %v1943, %v2103
      %v2105 = vpop.f32.mrb[0].mxu0
      %2106 = vmatprep.mubr.bf16.mxu0 %v1043
      %2107 = vmatmul.mubr.bf16.gmra.mrb[0].mxu0 %v1042
      %v2108 = vpop.f32.mrb[0].mxu0
      %v2109 = vadd.f32 %v1948, %v2108
      %v2110 = vpop.f32.mrb[0].mxu0
      %v2111 = vpop.f32.mrb[0].mxu0
      %v2112 = vadd.f32 %v1951, %v2111
      %v2113 = vpop.f32.mrb[0].mxu0
      %2114 = vmatprep.mubr.bf16.mxu0 %v1052
      %2115 = vmatmul.mubr.bf16.gmra.mrb[0].mxu0 %v1051
      %v2116 = vpop.f32.mrb[0].mxu0
      %v2117 = vadd.f32 %v1956, %v2116
      %v2118 = vpop.f32.mrb[0].mxu0
      %v2119 = vpop.f32.mrb[0].mxu0
      %v2120 = vadd.f32 %v1959, %v2119
      %v2121 = vpop.f32.mrb[0].mxu0
      %2122 = vmatprep.mubr.bf16.mxu0 %v1061
      %2123 = vmatmul.mubr.bf16.gmra.mrb[0].mxu0 %v1060
      %v2124 = vpop.f32.mrb[0].mxu0
      %v2125 = vadd.f32 %v1964, %v2124
      %v2126 = vpop.f32.mrb[0].mxu0
      %v2127 = vpop.f32.mrb[0].mxu0
      %v2128 = vadd.f32 %v1967, %v2127
      %v2129 = vpop.f32.mrb[0].mxu0
      %2130 = vmatprep.mubr.bf16.mxu0 %v1070
      %2131 = vmatmul.mubr.bf16.gmra.mrb[0].mxu0 %v1069
      %v2132 = vpop.f32.mrb[0].mxu0
      %v2133 = vadd.f32 %v1972, %v2132
      %v2134 = vpop.f32.mrb[0].mxu0
      %v2135 = vpop.f32.mrb[0].mxu0
      %v2136 = vadd.f32 %v1975, %v2135
      %v2137 = vpop.f32.mrb[0].mxu0
      %2138 = vmatprep.mubr.bf16.mxu0 %v1079
      %2139 = vmatmul.mubr.bf16.gmra.mrb[0].mxu0 %v1078
      %v2140 = vpop.f32.mrb[0].mxu0
      %v2141 = vadd.f32 %v1980, %v2140
      %v2142 = vpop.f32.mrb[0].mxu0
      %v2143 = vpop.f32.mrb[0].mxu0
      %v2144 = vadd.f32 %v1983, %v2143
      %v2145 = vpop.f32.mrb[0].mxu0
      %2146 = vmatprep.mubr.bf16.mxu0 %v1088
      %2147 = vmatmul.mubr.bf16.gmra.mrb[0].mxu0 %v1087
      %v2148 = vpop.f32.mrb[0].mxu0
      %v2149 = vadd.f32 %v1988, %v2148
      %v2150 = vpop.f32.mrb[0].mxu0
      %v2151 = vpop.f32.mrb[0].mxu0
      %v2152 = vadd.f32 %v1991, %v2151
      %v2153 = vpop.f32.mrb[0].mxu0
      %2154 = vmatprep.mubr.bf16.mxu0 %v1097
      %2155 = vmatmul.mubr.bf16.gmra.mrb[0].mxu0 %v1096
      %v2156 = vpop.f32.mrb[0].mxu0
      %v2157 = vadd.f32 %v1996, %v2156
      %v2158 = vpop.f32.mrb[0].mxu0
      %v2159 = vpop.f32.mrb[0].mxu0
      %v2160 = vadd.f32 %v1999, %v2159
      %v2161 = vpop.f32.mrb[0].mxu0
      %2162 = vmatprep.mubr.bf16.mxu0 %v1106
      %2163 = vmatmul.mubr.bf16.gmra.mrb[0].mxu0 %v1105
      %v2164 = vpop.f32.mrb[0].mxu0
      %v2165 = vadd.f32 %v2004, %v2164
      %v2166 = vpop.f32.mrb[0].mxu0
      %v2167 = vpop.f32.mrb[0].mxu0
      %v2168 = vadd.f32 %v2007, %v2167
      %v2169 = vpop.f32.mrb[0].mxu0
      %2170 = vmatprep.mubr.bf16.mxu0 %v1115
      %2171 = vmatmul.mubr.bf16.gmra.mrb[0].mxu0 %v1114
      %v2172 = vpop.f32.mrb[0].mxu0
      %v2173 = vadd.f32 %v2012, %v2172
      %v2174 = vpop.f32.mrb[0].mxu0
      %v2175 = vpop.f32.mrb[0].mxu0
      %v2176 = vadd.f32 %v2015, %v2175
      %v2177 = vpop.f32.mrb[0].mxu0
      %2178 = vmatprep.mubr.bf16.mxu0 %v1124
      %2179 = vmatmul.mubr.bf16.gmra.mrb[0].mxu0 %v1123
      %v2180 = vpop.f32.mrb[0].mxu0
      %v2181 = vadd.f32 %v2020, %v2180
      %v2182 = vpop.f32.mrb[0].mxu0
      %v2183 = vpop.f32.mrb[0].mxu0
      %v2184 = vadd.f32 %v2023, %v2183
      %v2185 = vpop.f32.mrb[0].mxu0
      %2186 = vdwg.mxu0
      %2187 = vmatprep.subr.bf16.mxu0 0
      %2188 = vmatpush1.bf16.msra.mxu0 %v1608
      %2189 = vmatprep.subr.bf16.mxu0 0
      %2190 = vmatpush1.bf16.msra.mxu0 %v1609
      %2191 = vmatprep.subr.bf16.mxu0 0
      %2192 = vmatpush1.bf16.msra.mxu0 %v1610
      %2193 = vmatprep.subr.bf16.mxu0 0
      %2194 = vmatpush1.bf16.msra.mxu0 %v1611
      %2195 = vmatprep.subr.bf16.mxu0 0
      %2196 = vmatpush1.bf16.msra.mxu0 %v1612
      %2197 = vmatprep.subr.bf16.mxu0 0
      %2198 = vmatpush1.bf16.msra.mxu0 %v1613
      %2199 = vmatprep.subr.bf16.mxu0 0
      %2200 = vmatpush1.bf16.msra.mxu0 %v1614
      %2201 = vmatprep.subr.bf16.mxu0 0
      %2202 = vmatpush1.bf16.msra.mxu0 %v1615
      %2203 = vmatprep.subr.bf16.mxu0 0
      %2204 = vmatpush1.bf16.msra.mxu0 %v1616
      %2205 = vmatprep.subr.bf16.mxu0 0
      %2206 = vmatpush1.bf16.msra.mxu0 %v1617
      %2207 = vmatprep.subr.bf16.mxu0 0
      %2208 = vmatpush1.bf16.msra.mxu0 %v1618
      %2209 = vmatprep.subr.bf16.mxu0 0
      %2210 = vmatpush1.bf16.msra.mxu0 %v1619
      %2211 = vmatprep.subr.bf16.mxu0 0
      %2212 = vmatpush1.bf16.msra.mxu0 %v1620
      %2213 = vmatprep.subr.bf16.mxu0 0
      %2214 = vmatpush1.bf16.msra.mxu0 %v1621
      %2215 = vmatprep.subr.bf16.mxu0 0
      %2216 = vmatpush1.bf16.msra.mxu0 %v1622
      %2217 = vmatprep.subr.bf16.mxu0 0
      %2218 = vmatpush1.bf16.msra.mxu0 %v1623
      %2219 = vmatprep.mubr.bf16.mxu0 %v991
      %2220 = vmatmul.mubr.bf16.gmra.mrb[0].mxu0 %v990
      %v2221 = vpop.f32.mrb[0].mxu0
      %v2222 = vadd.f32 %v2061, %v2221
      %v2223 = vpop.f32.mrb[0].mxu0
      %v2224 = vpop.f32.mrb[0].mxu0
      %v2225 = vadd.f32 %v2064, %v2224
      %v2226 = vpop.f32.mrb[0].mxu0
      %2227 = vmatprep.mubr.bf16.mxu0 %v1000
      %2228 = vmatmul.mubr.bf16.gmra.mrb[0].mxu0 %v999
      %v2229 = vpop.f32.mrb[0].mxu0
      %v2230 = vadd.f32 %v2069, %v2229
      %v2231 = vpop.f32.mrb[0].mxu0
      %v2232 = vpop.f32.mrb[0].mxu0
      %v2233 = vadd.f32 %v2072, %v2232
      %v2234 = vpop.f32.mrb[0].mxu0
      %2235 = vmatprep.mubr.bf16.mxu0 %v1009
      %2236 = vmatmul.mubr.bf16.gmra.mrb[0].mxu0 %v1008
      %v2237 = vpop.f32.mrb[0].mxu0
      %v2238 = vadd.f32 %v2077, %v2237
      %v2239 = vpop.f32.mrb[0].mxu0
      %v2240 = vpop.f32.mrb[0].mxu0
      %v2241 = vadd.f32 %v2080, %v2240
      %v2242 = vpop.f32.mrb[0].mxu0
      %2243 = vmatprep.mubr.bf16.mxu0 %v1018
      %2244 = vmatmul.mubr.bf16.gmra.mrb[0].mxu0 %v1017
      %v2245 = vpop.f32.mrb[0].mxu0
      %v2246 = vadd.f32 %v2085, %v2245
      %v2247 = vpop.f32.mrb[0].mxu0
      %v2248 = vpop.f32.mrb[0].mxu0
      %v2249 = vadd.f32 %v2088, %v2248
      %v2250 = vpop.f32.mrb[0].mxu0
      %2251 = vmatprep.mubr.bf16.mxu0 %v1027
      %2252 = vmatmul.mubr.bf16.gmra.mrb[0].mxu0 %v1026
      %v2253 = vpop.f32.mrb[0].mxu0
      %v2254 = vadd.f32 %v2093, %v2253
      %v2255 = vpop.f32.mrb[0].mxu0
      %v2256 = vpop.f32.mrb[0].mxu0
      %v2257 = vadd.f32 %v2096, %v2256
      %v2258 = vpop.f32.mrb[0].mxu0
      %2259 = vmatprep.mubr.bf16.mxu0 %v1036
      %2260 = vmatmul.mubr.bf16.gmra.mrb[0].mxu0 %v1035
      %v2261 = vpop.f32.mrb[0].mxu0
      %v2262 = vadd.f32 %v2101, %v2261
      %v2263 = vpop.f32.mrb[0].mxu0
      %v2264 = vpop.f32.mrb[0].mxu0
      %v2265 = vadd.f32 %v2104, %v2264
      %v2266 = vpop.f32.mrb[0].mxu0
      %2267 = vmatprep.mubr.bf16.mxu0 %v1045
      %2268 = vmatmul.mubr.bf16.gmra.mrb[0].mxu0 %v1044
      %v2269 = vpop.f32.mrb[0].mxu0
      %v2270 = vadd.f32 %v2109, %v2269
      %v2271 = vpop.f32.mrb[0].mxu0
      %v2272 = vpop.f32.mrb[0].mxu0
      %v2273 = vadd.f32 %v2112, %v2272
      %v2274 = vpop.f32.mrb[0].mxu0
      %2275 = vmatprep.mubr.bf16.mxu0 %v1054
      %2276 = vmatmul.mubr.bf16.gmra.mrb[0].mxu0 %v1053
      %v2277 = vpop.f32.mrb[0].mxu0
      %v2278 = vadd.f32 %v2117, %v2277
      %v2279 = vpop.f32.mrb[0].mxu0
      %v2280 = vpop.f32.mrb[0].mxu0
      %v2281 = vadd.f32 %v2120, %v2280
      %v2282 = vpop.f32.mrb[0].mxu0
      %2283 = vmatprep.mubr.bf16.mxu0 %v1063
      %2284 = vmatmul.mubr.bf16.gmra.mrb[0].mxu0 %v1062
      %v2285 = vpop.f32.mrb[0].mxu0
      %v2286 = vadd.f32 %v2125, %v2285
      %v2287 = vpop.f32.mrb[0].mxu0
      %v2288 = vpop.f32.mrb[0].mxu0
      %v2289 = vadd.f32 %v2128, %v2288
      %v2290 = vpop.f32.mrb[0].mxu0
      %2291 = vmatprep.mubr.bf16.mxu0 %v1072
      %2292 = vmatmul.mubr.bf16.gmra.mrb[0].mxu0 %v1071
      %v2293 = vpop.f32.mrb[0].mxu0
      %v2294 = vadd.f32 %v2133, %v2293
      %v2295 = vpop.f32.mrb[0].mxu0
      %v2296 = vpop.f32.mrb[0].mxu0
      %v2297 = vadd.f32 %v2136, %v2296
      %v2298 = vpop.f32.mrb[0].mxu0
      %2299 = vmatprep.mubr.bf16.mxu0 %v1081
      %2300 = vmatmul.mubr.bf16.gmra.mrb[0].mxu0 %v1080
      %v2301 = vpop.f32.mrb[0].mxu0
      %v2302 = vadd.f32 %v2141, %v2301
      %v2303 = vpop.f32.mrb[0].mxu0
      %v2304 = vpop.f32.mrb[0].mxu0
      %v2305 = vadd.f32 %v2144, %v2304
      %v2306 = vpop.f32.mrb[0].mxu0
      %2307 = vmatprep.mubr.bf16.mxu0 %v1090
      %2308 = vmatmul.mubr.bf16.gmra.mrb[0].mxu0 %v1089
      %v2309 = vpop.f32.mrb[0].mxu0
      %v2310 = vadd.f32 %v2149, %v2309
      %v2311 = vpop.f32.mrb[0].mxu0
      %v2312 = vpop.f32.mrb[0].mxu0
      %v2313 = vadd.f32 %v2152, %v2312
      %v2314 = vpop.f32.mrb[0].mxu0
      %2315 = vmatprep.mubr.bf16.mxu0 %v1099
      %2316 = vmatmul.mubr.bf16.gmra.mrb[0].mxu0 %v1098
      %v2317 = vpop.f32.mrb[0].mxu0
      %v2318 = vadd.f32 %v2157, %v2317
      %v2319 = vpop.f32.mrb[0].mxu0
      %v2320 = vpop.f32.mrb[0].mxu0
      %v2321 = vadd.f32 %v2160, %v2320
      %v2322 = vpop.f32.mrb[0].mxu0
      %2323 = vmatprep.mubr.bf16.mxu0 %v1108
      %2324 = vmatmul.mubr.bf16.gmra.mrb[0].mxu0 %v1107
      %v2325 = vpop.f32.mrb[0].mxu0
      %v2326 = vadd.f32 %v2165, %v2325
      %v2327 = vpop.f32.mrb[0].mxu0
      %v2328 = vpop.f32.mrb[0].mxu0
      %v2329 = vadd.f32 %v2168, %v2328
      %v2330 = vpop.f32.mrb[0].mxu0
      %2331 = vmatprep.mubr.bf16.mxu0 %v1117
      %2332 = vmatmul.mubr.bf16.gmra.mrb[0].mxu0 %v1116
      %v2333 = vpop.f32.mrb[0].mxu0
      %v2334 = vadd.f32 %v2173, %v2333
      %v2335 = vpop.f32.mrb[0].mxu0
      %v2336 = vpop.f32.mrb[0].mxu0
      %v2337 = vadd.f32 %v2176, %v2336
      %v2338 = vpop.f32.mrb[0].mxu0
      %2339 = vmatprep.mubr.bf16.mxu0 %v1126
      %2340 = vmatmul.mubr.bf16.gmra.mrb[0].mxu0 %v1125
      %v2341 = vpop.f32.mrb[0].mxu0
      %v2342 = vadd.f32 %v2181, %v2341
      %v2343 = vpop.f32.mrb[0].mxu0
      %v2344 = vpop.f32.mrb[0].mxu0
      %v2345 = vadd.f32 %v2184, %v2344
      %v2346 = vpop.f32.mrb[0].mxu0
      %2347 = vdwg.mxu0
      %2348 = vmatprep.subr.bf16.mxu0 0
      %2349 = vmatpush1.bf16.msra.mxu0 %v1624
      %2350 = vmatprep.subr.bf16.mxu0 0
      %2351 = vmatpush1.bf16.msra.mxu0 %v1625
      %2352 = vmatprep.subr.bf16.mxu0 0
      %2353 = vmatpush1.bf16.msra.mxu0 %v1626
      %2354 = vmatprep.subr.bf16.mxu0 0
      %2355 = vmatpush1.bf16.msra.mxu0 %v1627
      %2356 = vmatprep.subr.bf16.mxu0 0
      %2357 = vmatpush1.bf16.msra.mxu0 %v1628
      %2358 = vmatprep.subr.bf16.mxu0 0
      %2359 = vmatpush1.bf16.msra.mxu0 %v1629
      %2360 = vmatprep.subr.bf16.mxu0 0
      %2361 = vmatpush1.bf16.msra.mxu0 %v1630
      %2362 = vmatprep.subr.bf16.mxu0 0
      %2363 = vmatpush1.bf16.msra.mxu0 %v1631
      %2364 = vmatprep.subr.bf16.mxu0 0
      %2365 = vmatpush1.bf16.msra.mxu0 0
      %2366 = vmatprep.subr.bf16.mxu0 0
      %2367 = vmatpush1.bf16.msra.mxu0 0
      %2368 = vmatprep.subr.bf16.mxu0 0
      %2369 = vmatpush1.bf16.msra.mxu0 0
      %2370 = vmatprep.subr.bf16.mxu0 0
      %2371 = vmatpush1.bf16.msra.mxu0 0
      %2372 = vmatprep.subr.bf16.mxu0 0
      %2373 = vmatpush1.bf16.msra.mxu0 0
      %2374 = vmatprep.subr.bf16.mxu0 0
      %2375 = vmatpush1.bf16.msra.mxu0 0
      %2376 = vmatprep.subr.bf16.mxu0 0
      %2377 = vmatpush1.bf16.msra.mxu0 0
      %2378 = vmatprep.subr.bf16.mxu0 0
      %2379 = vmatpush1.bf16.msra.mxu0 0
      %2380 = vmatprep.mubr.bf16.mxu0 0
      %2381 = vmatmul.mubr.bf16.gmra.mrb[0].mxu0 %v992
      %v2382 = vpop.f32.mrb[0].mxu0
      %v2383 = vadd.f32 %v2222, %v2382
      %v2384 = vpop.f32.mrb[0].mxu0
      %v2385 = vpop.f32.mrb[0].mxu0
      %v2386 = vadd.f32 %v2225, %v2385
      %v2387 = vpop.f32.mrb[0].mxu0
      %2388 = vmatprep.mubr.bf16.mxu0 0
      %2389 = vmatmul.mubr.bf16.gmra.mrb[0].mxu0 %v1001
      %v2390 = vpop.f32.mrb[0].mxu0
      %v2391 = vadd.f32 %v2230, %v2390
      %v2392 = vpop.f32.mrb[0].mxu0
      %v2393 = vpop.f32.mrb[0].mxu0
      %v2394 = vadd.f32 %v2233, %v2393
      %v2395 = vpop.f32.mrb[0].mxu0
      %2396 = vmatprep.mubr.bf16.mxu0 0
      %2397 = vmatmul.mubr.bf16.gmra.mrb[0].mxu0 %v1010
      %v2398 = vpop.f32.mrb[0].mxu0
      %v2399 = vadd.f32 %v2238, %v2398
      %v2400 = vpop.f32.mrb[0].mxu0
      %v2401 = vpop.f32.mrb[0].mxu0
      %v2402 = vadd.f32 %v2241, %v2401
      %v2403 = vpop.f32.mrb[0].mxu0
      %2404 = vmatprep.mubr.bf16.mxu0 0
      %2405 = vmatmul.mubr.bf16.gmra.mrb[0].mxu0 %v1019
      %v2406 = vpop.f32.mrb[0].mxu0
      %v2407 = vadd.f32 %v2246, %v2406
      %v2408 = vpop.f32.mrb[0].mxu0
      %v2409 = vpop.f32.mrb[0].mxu0
      %v2410 = vadd.f32 %v2249, %v2409
      %v2411 = vpop.f32.mrb[0].mxu0
      %2412 = vmatprep.mubr.bf16.mxu0 0
      %2413 = vmatmul.mubr.bf16.gmra.mrb[0].mxu0 %v1028
      %v2414 = vpop.f32.mrb[0].mxu0
      %v2415 = vadd.f32 %v2254, %v2414
      %v2416 = vpop.f32.mrb[0].mxu0
      %v2417 = vpop.f32.mrb[0].mxu0
      %v2418 = vadd.f32 %v2257, %v2417
      %v2419 = vpop.f32.mrb[0].mxu0
      %2420 = vmatprep.mubr.bf16.mxu0 0
      %2421 = vmatmul.mubr.bf16.gmra.mrb[0].mxu0 %v1037
      %v2422 = vpop.f32.mrb[0].mxu0
      %v2423 = vadd.f32 %v2262, %v2422
      %v2424 = vpop.f32.mrb[0].mxu0
      %v2425 = vpop.f32.mrb[0].mxu0
      %v2426 = vadd.f32 %v2265, %v2425
      %v2427 = vpop.f32.mrb[0].mxu0
      %2428 = vmatprep.mubr.bf16.mxu0 0
      %2429 = vmatmul.mubr.bf16.gmra.mrb[0].mxu0 %v1046
      %v2430 = vpop.f32.mrb[0].mxu0
      %v2431 = vadd.f32 %v2270, %v2430
      %v2432 = vpop.f32.mrb[0].mxu0
      %v2433 = vpop.f32.mrb[0].mxu0
      %v2434 = vadd.f32 %v2273, %v2433
      %v2435 = vpop.f32.mrb[0].mxu0
      %2436 = vmatprep.mubr.bf16.mxu0 0
      %2437 = vmatmul.mubr.bf16.gmra.mrb[0].mxu0 %v1055
      %v2438 = vpop.f32.mrb[0].mxu0
      %v2439 = vadd.f32 %v2278, %v2438
      %v2440 = vpop.f32.mrb[0].mxu0
      %v2441 = vpop.f32.mrb[0].mxu0
      %v2442 = vadd.f32 %v2281, %v2441
      %v2443 = vpop.f32.mrb[0].mxu0
      %2444 = vmatprep.mubr.bf16.mxu0 0
      %2445 = vmatmul.mubr.bf16.gmra.mrb[0].mxu0 %v1064
      %v2446 = vpop.f32.mrb[0].mxu0
      %v2447 = vadd.f32 %v2286, %v2446
      %v2448 = vpop.f32.mrb[0].mxu0
      %v2449 = vpop.f32.mrb[0].mxu0
      %v2450 = vadd.f32 %v2289, %v2449
      %v2451 = vpop.f32.mrb[0].mxu0
      %2452 = vmatprep.mubr.bf16.mxu0 0
      %2453 = vmatmul.mubr.bf16.gmra.mrb[0].mxu0 %v1073
      %v2454 = vpop.f32.mrb[0].mxu0
      %v2455 = vadd.f32 %v2294, %v2454
      %v2456 = vpop.f32.mrb[0].mxu0
      %v2457 = vpop.f32.mrb[0].mxu0
      %v2458 = vadd.f32 %v2297, %v2457
      %v2459 = vpop.f32.mrb[0].mxu0
      %2460 = vmatprep.mubr.bf16.mxu0 0
      %2461 = vmatmul.mubr.bf16.gmra.mrb[0].mxu0 %v1082
      %v2462 = vpop.f32.mrb[0].mxu0
      %v2463 = vadd.f32 %v2302, %v2462
      %v2464 = vpop.f32.mrb[0].mxu0
      %v2465 = vpop.f32.mrb[0].mxu0
      %v2466 = vadd.f32 %v2305, %v2465
      %v2467 = vpop.f32.mrb[0].mxu0
      %2468 = vmatprep.mubr.bf16.mxu0 0
      %2469 = vmatmul.mubr.bf16.gmra.mrb[0].mxu0 %v1091
      %v2470 = vpop.f32.mrb[0].mxu0
      %v2471 = vadd.f32 %v2310, %v2470
      %v2472 = vpop.f32.mrb[0].mxu0
      %v2473 = vpop.f32.mrb[0].mxu0
      %v2474 = vadd.f32 %v2313, %v2473
      %v2475 = vpop.f32.mrb[0].mxu0
      %2476 = vmatprep.mubr.bf16.mxu0 0
      %2477 = vmatmul.mubr.bf16.gmra.mrb[0].mxu0 %v1100
      %v2478 = vpop.f32.mrb[0].mxu0
      %v2479 = vadd.f32 %v2318, %v2478
      %v2480 = vpop.f32.mrb[0].mxu0
      %v2481 = vpop.f32.mrb[0].mxu0
      %v2482 = vadd.f32 %v2321, %v2481
      %v2483 = vpop.f32.mrb[0].mxu0
      %2484 = vmatprep.mubr.bf16.mxu0 0
      %2485 = vmatmul.mubr.bf16.gmra.mrb[0].mxu0 %v1109
      %v2486 = vpop.f32.mrb[0].mxu0
      %v2487 = vadd.f32 %v2326, %v2486
      %v2488 = vpop.f32.mrb[0].mxu0
      %v2489 = vpop.f32.mrb[0].mxu0
      %v2490 = vadd.f32 %v2329, %v2489
      %v2491 = vpop.f32.mrb[0].mxu0
      %2492 = vmatprep.mubr.bf16.mxu0 0
      %2493 = vmatmul.mubr.bf16.gmra.mrb[0].mxu0 %v1118
      %v2494 = vpop.f32.mrb[0].mxu0
      %v2495 = vadd.f32 %v2334, %v2494
      %v2496 = vpop.f32.mrb[0].mxu0
      %v2497 = vpop.f32.mrb[0].mxu0
      %v2498 = vadd.f32 %v2337, %v2497
      %v2499 = vpop.f32.mrb[0].mxu0
      %2500 = vmatprep.mubr.bf16.mxu0 0
      %2501 = vmatmul.mubr.bf16.gmra.mrb[0].mxu0 %v1127
      %v2502 = vpop.f32.mrb[0].mxu0
      %v2503 = vadd.f32 %v2342, %v2502
      %v2504 = vpop.f32.mrb[0].mxu0
      %v2505 = vpop.f32.mrb[0].mxu0
      %v2506 = vadd.f32 %v2345, %v2505
      %v2507 = vpop.f32.mrb[0].mxu0
      %2508 = vdwg.mxu0
      %v2509 = vld [vmem:[%s2] sm:$0x1]
      %v2511 = vlaneseq
      %v2512 = vshrl.u32 %v2511, 7
      %v2513 = vsub.s32 0, %v2512
      %v2514 = vrot.slane %v2509, %v2513
      %v2516 = vmul.f32 %v2383, %v2514
      %v2517 = vmul.f32 %v2386, %v2514
      %v2518 = vmul.f32 %v2391, %v2514
      %v2519 = vmul.f32 %v2394, %v2514
      %v2520 = vmul.f32 %v2399, %v2514
      %v2521 = vmul.f32 %v2402, %v2514
      %v2522 = vmul.f32 %v2407, %v2514
      %v2523 = vmul.f32 %v2410, %v2514
      %v2524 = vmul.f32 %v2415, %v2514
      %v2525 = vmul.f32 %v2418, %v2514
      %v2526 = vmul.f32 %v2423, %v2514
      %v2527 = vmul.f32 %v2426, %v2514
      %v2528 = vmul.f32 %v2431, %v2514
      %v2529 = vmul.f32 %v2434, %v2514
      %v2530 = vmul.f32 %v2439, %v2514
      %v2531 = vmul.f32 %v2442, %v2514
      %v2532 = vmul.f32 %v2447, %v2514
      %v2533 = vmul.f32 %v2450, %v2514
      %v2534 = vmul.f32 %v2455, %v2514
      %v2535 = vmul.f32 %v2458, %v2514
      %v2536 = vmul.f32 %v2463, %v2514
      %v2537 = vmul.f32 %v2466, %v2514
      %v2538 = vmul.f32 %v2471, %v2514
      %v2539 = vmul.f32 %v2474, %v2514
      %v2540 = vmul.f32 %v2479, %v2514
      %v2541 = vmul.f32 %v2482, %v2514
      %v2542 = vmul.f32 %v2487, %v2514
      %v2543 = vmul.f32 %v2490, %v2514
      %v2544 = vmul.f32 %v2495, %v2514
      %v2545 = vmul.f32 %v2498, %v2514
      %v2546 = vmul.f32 %v2503, %v2514
      %v2547 = vmul.f32 %v2506, %v2514
      %v2548 = vld [vmem:[%s3] sm:$0x1]
      %v2550 = vlaneseq
      %v2551 = vshrl.u32 %v2550, 7
      %v2552 = vsub.s32 0, %v2551
      %v2553 = vrot.slane %v2548, %v2552
      %v2555 = vadd.f32 %v2516, %v2553
      %v2556 = vadd.f32 %v2517, %v2553
      %v2557 = vadd.f32 %v2518, %v2553
      %v2558 = vadd.f32 %v2519, %v2553
      %v2559 = vadd.f32 %v2520, %v2553
      %v2560 = vadd.f32 %v2521, %v2553
      %v2561 = vadd.f32 %v2522, %v2553
      %v2562 = vadd.f32 %v2523, %v2553
      %v2563 = vadd.f32 %v2524, %v2553
      %v2564 = vadd.f32 %v2525, %v2553
      %v2565 = vadd.f32 %v2526, %v2553
      %v2566 = vadd.f32 %v2527, %v2553
      %v2567 = vadd.f32 %v2528, %v2553
      %v2568 = vadd.f32 %v2529, %v2553
      %v2569 = vadd.f32 %v2530, %v2553
      %v2570 = vadd.f32 %v2531, %v2553
      %v2571 = vadd.f32 %v2532, %v2553
      %v2572 = vadd.f32 %v2533, %v2553
      %v2573 = vadd.f32 %v2534, %v2553
      %v2574 = vadd.f32 %v2535, %v2553
      %v2575 = vadd.f32 %v2536, %v2553
      %v2576 = vadd.f32 %v2537, %v2553
      %v2577 = vadd.f32 %v2538, %v2553
      %v2578 = vadd.f32 %v2539, %v2553
      %v2579 = vadd.f32 %v2540, %v2553
      %v2580 = vadd.f32 %v2541, %v2553
      %v2581 = vadd.f32 %v2542, %v2553
      %v2582 = vadd.f32 %v2543, %v2553
      %v2583 = vadd.f32 %v2544, %v2553
      %v2584 = vadd.f32 %v2545, %v2553
      %v2585 = vadd.f32 %v2546, %v2553
      %v2586 = vadd.f32 %v2547, %v2553
      %vm2587 = vcmp.gt.f32.partialorder %v2555, 0.0
      %vm2588 = vcmp.gt.f32.partialorder %v2556, 0.0
      %vm2589 = vcmp.gt.f32.partialorder %v2557, 0.0
      %vm2590 = vcmp.gt.f32.partialorder %v2558, 0.0
      %vm2591 = vcmp.gt.f32.partialorder %v2559, 0.0
      %vm2592 = vcmp.gt.f32.partialorder %v2560, 0.0
      %vm2593 = vcmp.gt.f32.partialorder %v2561, 0.0
      %vm2594 = vcmp.gt.f32.partialorder %v2562, 0.0
      %vm2595 = vcmp.gt.f32.partialorder %v2563, 0.0
      %vm2596 = vcmp.gt.f32.partialorder %v2564, 0.0
      %vm2597 = vcmp.gt.f32.partialorder %v2565, 0.0
      %vm2598 = vcmp.gt.f32.partialorder %v2566, 0.0
      %vm2599 = vcmp.gt.f32.partialorder %v2567, 0.0
      %vm2600 = vcmp.gt.f32.partialorder %v2568, 0.0
      %vm2601 = vcmp.gt.f32.partialorder %v2569, 0.0
      %vm2602 = vcmp.gt.f32.partialorder %v2570, 0.0
      %vm2603 = vcmp.gt.f32.partialorder %v2571, 0.0
      %vm2604 = vcmp.gt.f32.partialorder %v2572, 0.0
      %vm2605 = vcmp.gt.f32.partialorder %v2573, 0.0
      %vm2606 = vcmp.gt.f32.partialorder %v2574, 0.0
      %vm2607 = vcmp.gt.f32.partialorder %v2575, 0.0
      %vm2608 = vcmp.gt.f32.partialorder %v2576, 0.0
      %vm2609 = vcmp.gt.f32.partialorder %v2577, 0.0
      %vm2610 = vcmp.gt.f32.partialorder %v2578, 0.0
      %vm2611 = vcmp.gt.f32.partialorder %v2579, 0.0
      %vm2612 = vcmp.gt.f32.partialorder %v2580, 0.0
      %vm2613 = vcmp.gt.f32.partialorder %v2581, 0.0
      %vm2614 = vcmp.gt.f32.partialorder %v2582, 0.0
      %vm2615 = vcmp.gt.f32.partialorder %v2583, 0.0
      %vm2616 = vcmp.gt.f32.partialorder %v2584, 0.0
      %vm2617 = vcmp.gt.f32.partialorder %v2585, 0.0
      %vm2618 = vcmp.gt.f32.partialorder %v2586, 0.0
      %v2619 = vld [vmem:[%s4] sm:$0x1]
      %v2621 = vlaneseq
      %v2622 = vshrl.u32 %v2621, 7
      %v2623 = vsub.s32 0, %v2622
      %v2624 = vrot.slane %v2619, %v2623
      %v2626 = vmul.f32 %v2624, %v2555
      %v2627 = vmul.f32 %v2624, %v2556
      %v2628 = vmul.f32 %v2624, %v2557
      %v2629 = vmul.f32 %v2624, %v2558
      %v2630 = vmul.f32 %v2624, %v2559
      %v2631 = vmul.f32 %v2624, %v2560
      %v2632 = vmul.f32 %v2624, %v2561
      %v2633 = vmul.f32 %v2624, %v2562
      %v2634 = vmul.f32 %v2624, %v2563
      %v2635 = vmul.f32 %v2624, %v2564
      %v2636 = vmul.f32 %v2624, %v2565
      %v2637 = vmul.f32 %v2624, %v2566
      %v2638 = vmul.f32 %v2624, %v2567
      %v2639 = vmul.f32 %v2624, %v2568
      %v2640 = vmul.f32 %v2624, %v2569
      %v2641 = vmul.f32 %v2624, %v2570
      %v2642 = vmul.f32 %v2624, %v2571
      %v2643 = vmul.f32 %v2624, %v2572
      %v2644 = vmul.f32 %v2624, %v2573
      %v2645 = vmul.f32 %v2624, %v2574
      %v2646 = vmul.f32 %v2624, %v2575
      %v2647 = vmul.f32 %v2624, %v2576
      %v2648 = vmul.f32 %v2624, %v2577
      %v2649 = vmul.f32 %v2624, %v2578
      %v2650 = vmul.f32 %v2624, %v2579
      %v2651 = vmul.f32 %v2624, %v2580
      %v2652 = vmul.f32 %v2624, %v2581
      %v2653 = vmul.f32 %v2624, %v2582
      %v2654 = vmul.f32 %v2624, %v2583
      %v2655 = vmul.f32 %v2624, %v2584
      %v2656 = vmul.f32 %v2624, %v2585
      %v2657 = vmul.f32 %v2624, %v2586
      %v2658 = vsel %vm2587, %v2555, %v2626
      %v2659 = vsel %vm2588, %v2556, %v2627
      %v2660 = vsel %vm2589, %v2557, %v2628
      %v2661 = vsel %vm2590, %v2558, %v2629
      %v2662 = vsel %vm2591, %v2559, %v2630
      %v2663 = vsel %vm2592, %v2560, %v2631
      %v2664 = vsel %vm2593, %v2561, %v2632
      %v2665 = vsel %vm2594, %v2562, %v2633
      %v2666 = vsel %vm2595, %v2563, %v2634
      %v2667 = vsel %vm2596, %v2564, %v2635
      %v2668 = vsel %vm2597, %v2565, %v2636
      %v2669 = vsel %vm2598, %v2566, %v2637
      %v2670 = vsel %vm2599, %v2567, %v2638
      %v2671 = vsel %vm2600, %v2568, %v2639
      %v2672 = vsel %vm2601, %v2569, %v2640
      %v2673 = vsel %vm2602, %v2570, %v2641
      %v2674 = vsel %vm2603, %v2571, %v2642
      %v2675 = vsel %vm2604, %v2572, %v2643
      %v2676 = vsel %vm2605, %v2573, %v2644
      %v2677 = vsel %vm2606, %v2574, %v2645
      %v2678 = vsel %vm2607, %v2575, %v2646
      %v2679 = vsel %vm2608, %v2576, %v2647
      %v2680 = vsel %vm2609, %v2577, %v2648
      %v2681 = vsel %vm2610, %v2578, %v2649
      %v2682 = vsel %vm2611, %v2579, %v2650
      %v2683 = vsel %vm2612, %v2580, %v2651
      %v2684 = vsel %vm2613, %v2581, %v2652
      %v2685 = vsel %vm2614, %v2582, %v2653
      %v2686 = vsel %vm2615, %v2583, %v2654
      %v2687 = vsel %vm2616, %v2584, %v2655
      %v2688 = vsel %vm2617, %v2585, %v2656
      %v2689 = vsel %vm2618, %v2586, %v2657
      %v2690 = vpack.c.bf16 %v2659, %v2658
      %v2691 = vpack.c.bf16 %v2661, %v2660
      %v2692 = vpack.c.bf16 %v2663, %v2662
      %v2693 = vpack.c.bf16 %v2665, %v2664
      %v2694 = vpack.c.bf16 %v2667, %v2666
      %v2695 = vpack.c.bf16 %v2669, %v2668
      %v2696 = vpack.c.bf16 %v2671, %v2670
      %v2697 = vpack.c.bf16 %v2673, %v2672
      %v2698 = vpack.c.bf16 %v2675, %v2674
      %v2699 = vpack.c.bf16 %v2677, %v2676
      %v2700 = vpack.c.bf16 %v2679, %v2678
      %v2701 = vpack.c.bf16 %v2681, %v2680
      %v2702 = vpack.c.bf16 %v2683, %v2682
      %v2703 = vpack.c.bf16 %v2685, %v2684
      %v2704 = vpack.c.bf16 %v2687, %v2686
      %v2705 = vpack.c.bf16 %v2689, %v2688
      %v2722 = vunpack.c.l.b16 %v2690
      %v2723 = vunpack.c.h.b16 %v2690
      %v2724 = vunpack.c.l.b16 %v2691
      %v2725 = vunpack.c.h.b16 %v2691
      %v2726 = vunpack.c.l.b16 %v2692
      %v2727 = vunpack.c.h.b16 %v2692
      %v2728 = vunpack.c.l.b16 %v2693
      %v2729 = vunpack.c.h.b16 %v2693
      %v2730 = vunpack.c.l.b16 %v2694
      %v2731 = vunpack.c.h.b16 %v2694
      %v2732 = vunpack.c.l.b16 %v2695
      %v2733 = vunpack.c.h.b16 %v2695
      %v2734 = vunpack.c.l.b16 %v2696
      %v2735 = vunpack.c.h.b16 %v2696
      %v2736 = vunpack.c.l.b16 %v2697
      %v2737 = vunpack.c.h.b16 %v2697
      %v2738 = vunpack.c.l.b16 %v2698
      %v2739 = vunpack.c.h.b16 %v2698
      %v2740 = vunpack.c.l.b16 %v2699
      %v2741 = vunpack.c.h.b16 %v2699
      %v2742 = vunpack.c.l.b16 %v2700
      %v2743 = vunpack.c.h.b16 %v2700
      %v2744 = vunpack.c.l.b16 %v2701
      %v2745 = vunpack.c.h.b16 %v2701
      %v2746 = vunpack.c.l.b16 %v2702
      %v2747 = vunpack.c.h.b16 %v2702
      %v2748 = vunpack.c.l.b16 %v2703
      %v2749 = vunpack.c.h.b16 %v2703
      %v2750 = vunpack.c.l.b16 %v2704
      %v2751 = vunpack.c.h.b16 %v2704
      %v2752 = vunpack.c.l.b16 %v2705
      %v2753 = vunpack.c.h.b16 %v2705
      %v2754 = vpack.c.b16 %v2722, %v2722
      %v2755 = vpack.c.b16 %v2723, %v2723
      %v2756 = vpack.c.b16 %v2724, %v2724
      %v2757 = vpack.c.b16 %v2725, %v2725
      %v2758 = vpack.c.b16 %v2726, %v2726
      %v2759 = vpack.c.b16 %v2727, %v2727
      %v2760 = vpack.c.b16 %v2728, %v2728
      %v2761 = vpack.c.b16 %v2729, %v2729
      %v2762 = vpack.c.b16 %v2730, %v2730
      %v2763 = vpack.c.b16 %v2731, %v2731
      %v2764 = vpack.c.b16 %v2732, %v2732
      %v2765 = vpack.c.b16 %v2733, %v2733
      %v2766 = vpack.c.b16 %v2734, %v2734
      %v2767 = vpack.c.b16 %v2735, %v2735
      %v2768 = vpack.c.b16 %v2736, %v2736
      %v2769 = vpack.c.b16 %v2737, %v2737
      %v2770 = vpack.c.b16 %v2738, %v2738
      %v2771 = vpack.c.b16 %v2739, %v2739
      %v2772 = vpack.c.b16 %v2740, %v2740
      %v2773 = vpack.c.b16 %v2741, %v2741
      %v2774 = vpack.c.b16 %v2742, %v2742
      %v2775 = vpack.c.b16 %v2743, %v2743
      %v2776 = vpack.c.b16 %v2744, %v2744
      %v2777 = vpack.c.b16 %v2745, %v2745
      %v2778 = vpack.c.b16 %v2746, %v2746
      %v2779 = vpack.c.b16 %v2747, %v2747
      %v2780 = vpack.c.b16 %v2748, %v2748
      %v2781 = vpack.c.b16 %v2749, %v2749
      %v2782 = vpack.c.b16 %v2750, %v2750
      %v2783 = vpack.c.b16 %v2751, %v2751
      %v2784 = vpack.c.b16 %v2752, %v2752
      %v2785 = vpack.c.b16 %v2753, %v2753
      %2818 = vst [vmem:[%s229] sm:$0xf] %v2754
      %2819 = vst [vmem:[%s229 + $0x4] sm:$0xf] %v2755
      %2820 = vst [vmem:[%s229 + $0x8] sm:$0xf] %v2756
      %2821 = vst [vmem:[%s229 + $0xc] sm:$0xf] %v2757
      %2822 = vst [vmem:[%s229 + $0x10] sm:$0xf] %v2758
      %2823 = vst [vmem:[%s229 + $0x14] sm:$0xf] %v2759
      %2824 = vst [vmem:[%s229 + $0x18] sm:$0xf] %v2760
      %2825 = vst [vmem:[%s229 + $0x1c] sm:$0xf] %v2761
      %2826 = vst [vmem:[%s229 + $0x20] sm:$0xf] %v2762
      %2827 = vst [vmem:[%s229 + $0x24] sm:$0xf] %v2763
      %2828 = vst [vmem:[%s229 + $0x28] sm:$0xf] %v2764
      %2829 = vst [vmem:[%s229 + $0x2c] sm:$0xf] %v2765
      %2830 = vst [vmem:[%s229 + $0x30] sm:$0xf] %v2766
      %2831 = vst [vmem:[%s229 + $0x34] sm:$0xf] %v2767
      %2832 = vst [vmem:[%s229 + $0x38] sm:$0xf] %v2768
      %2833 = vst [vmem:[%s229 + $0x3c] sm:$0xf] %v2769
      %2834 = vst [vmem:[%s229 + $0x40] sm:$0xf] %v2770
      %2835 = vst [vmem:[%s229 + $0x44] sm:$0xf] %v2771
      %2836 = vst [vmem:[%s229 + $0x48] sm:$0xf] %v2772
      %2837 = vst [vmem:[%s229 + $0x4c] sm:$0xf] %v2773
      %2838 = vst [vmem:[%s229 + $0x50] sm:$0xf] %v2774
      %2839 = vst [vmem:[%s229 + $0x54] sm:$0xf] %v2775
      %2840 = vst [vmem:[%s229 + $0x58] sm:$0xf] %v2776
      %2841 = vst [vmem:[%s229 + $0x5c] sm:$0xf] %v2777
      %2842 = vst [vmem:[%s229 + $0x60] sm:$0xf] %v2778
      %2843 = vst [vmem:[%s229 + $0x64] sm:$0xf] %v2779
      %2844 = vst [vmem:[%s229 + $0x68] sm:$0xf] %v2780
      %2845 = vst [vmem:[%s229 + $0x6c] sm:$0xf] %v2781
      %2846 = vst [vmem:[%s229 + $0x70] sm:$0xf] %v2782
      %2847 = vst [vmem:[%s229 + $0x74] sm:$0xf] %v2783
      %2848 = vst [vmem:[%s229 + $0x78] sm:$0xf] %v2784
      %2849 = vst [vmem:[%s229 + $0x7c] sm:$0xf] %v2785
      %s2850 = smul.u32 32, %s16
      %p2851 = scmp.lt.s32.totalorder %s2850, 63
      %s2852 = scalar_select %p2851, %s2850, 63
      %s2853 = smul.addr %s2852, 4
      %s2854 = scalar_lea.vmem %s5, %s2853
      // Predicated region
      $region41: #{bottleneck_ir_forward.2} parent=39 // pred_check
        %p2855 = pneg %p144
      $region42: #{bottleneck_ir_forward.2} parent=39 // pred_check_branch
        %2857 = sbr.rel (%p2855) target = $region44
      $region43: #{bottleneck_ir_forward.2} parent=39 // pred_region
        %s2858 = smul.u32 32, %s16
      $region44: #{bottleneck_ir_forward.2} parent=39 // pred_fallthru
        _
    $region40: #{bottleneck_ir_forward.2} parent=5 // pred_fallthru
      _
    %p2859 = scmp.le.s32.totalorder 2, %s11
    // Predicated region
    $region45: #{bottleneck_ir_forward.2} parent=5 // pred_check
      %p2860 = pneg %p2859
    $region46: #{bottleneck_ir_forward.2} parent=5 // pred_check_branch
      %2862 = sbr.rel (%p2860) target = $region48
    $region47: #{bottleneck_ir_forward.2} parent=5 // pred_region
      %s2863 = ssub.s32 %s11, 2
      // Predicated region
      $region49: #{bottleneck_ir_forward.2} parent=47 // pred_check
        %p2864 = pneg %p150
      $region50: #{bottleneck_ir_forward.2} parent=47 // pred_check_branch
        %2866 = sbr.rel (%p2864) target = $region52
      $region51: #{bottleneck_ir_forward.2} parent=47 // pred_region
        %s2867 = smul.u32 32, %s17
        %p2868 = scmp.lt.s32.totalorder %s2867, 63
        %s2869 = scalar_select %p2868, %s2867, 63
        %s2870 = smul.addr %s2869, 4
        %s2871 = scalar_lea.vmem %s5, %s2870
      $region52: #{bottleneck_ir_forward.2} parent=47 // pred_fallthru
        _
    $region48: #{bottleneck_ir_forward.2} parent=5 // pred_fallthru
      _
  $region6: #{bottleneck_ir_forward.2} parent=0 // loop_footer
    %s15 = sadd.s32 1, %s11
  $region7: #{bottleneck_ir_forward.2} parent=0 // loop_footer_branch
    %10 = sbr.rel target = $region3
  $region8: #{bottleneck_ir_forward.2} parent=0 // loop_exit
    _

</llo_original>
